<compile_context>
chip_gen: v7x
topology: tpu7x:2x2x1
jax: 0.10.0
libtpu: 0.0.40
codegen_flags: <defaults>
</compile_context>

<pallas_src>
import jax
import jax.numpy as jnp
from jax import lax
from jax.experimental import pallas as pl
from jax.experimental.pallas import tpu as pltpu

# ---------------- model hyper-parameters (small, TPU-friendly) ---------------
BATCH = 2
SEQ = 8
BS = BATCH * SEQ                      # tokens in the fused (batch*seq, hidden) slab
HIDDEN = 128
NUM_HEADS = 4
HEAD_DIM = HIDDEN // NUM_HEADS
INTERMEDIATE = 256
NUM_LAYERS = 2
VOCAB = 64
MAX_POS = 16
TYPE_VOCAB = 2
NUM_DISEASES = 49
D_PAD = 128                           # classifier lanes padded to a full vreg width
LN_EPS = 1e-12
NEG_BIG = -1e9                        # additive mask: cross-batch / padded lanes


# ------------------------------ in-kernel helpers ------------------------------
def _layernorm(x, g, b, eps=LN_EPS):
    mu = jnp.mean(x, axis=-1, keepdims=True)
    var = jnp.mean((x - mu) ** 2, axis=-1, keepdims=True)
    return (x - mu) * lax.rsqrt(var + eps) * g + b


def _gelu(x):
    # TODO(synk): BERT's default activation is erf-GELU; tanh-approx keeps a
    # guaranteed EUP lowering inside the kernel.
    c = 0.7978845608028654  # sqrt(2/pi)
    return 0.5 * x * (1.0 + jnp.tanh(c * (x + 0.044715 * x * x * x)))


# ------------------------- fully fused forward kernel -------------------------
# One grid step.  Body:
#   embedding LayerNorm -> NUM_LAYERS unrolled transformer layers (fused QKV,
#   head-fused softmax with a block-diagonal (B*S, B*S) score bias, single Wo
#   projection, FFN) -> CLS-row classifier -> exact sort-free sparsemax.
def fused_bert_kernel(emb_ref, bias_ref, eg_ref, eb_ref,
                      wqkv_ref, bqkv_ref, wo_ref, bo_ref, ln1g_ref, ln1b_ref,
                      w1_ref, b1_ref, w2_ref, b2_ref, ln2g_ref, ln2b_ref,
                      clsw_ref, clsb_ref,
                      probs_ref):
    # ---- embedding LayerNorm prologue --------------------------------------
    x = _layernorm(emb_ref[...].astype(jnp.float32), eg_ref[...], eb_ref[...])

    # (BS, BS) additive mask, replicated once for all heads along sublanes
    bias = bias_ref[...]
    bias_all = jnp.concatenate([bias] * NUM_HEADS, axis=0)       # (NH*BS, BS)

    # ---- transformer layers: fully unrolled, weights VMEM-resident ---------
    for layer in range(NUM_LAYERS):
        xb = x.astype(jnp.bfloat16)

        # fused QKV projection (1/sqrt(HEAD_DIM) pre-folded into the Q weights)
        qkv = jnp.dot(xb, wqkv_ref[layer],
                      preferred_element_type=jnp.float32) + bqkv_ref[layer]
        qkv_b = qkv.astype(jnp.bfloat16)          # single f32->bf16 pack of (BS, 3H)

        # per-head scores, stacked along sublanes -> ONE softmax chain for all heads
        s_heads = []
        for h in range(NUM_HEADS):
            q_h = qkv_b[:, 0 * HIDDEN + h * HEAD_DIM:0 * HIDDEN + (h + 1) * HEAD_DIM]
            k_h = qkv_b[:, 1 * HIDDEN + h * HEAD_DIM:1 * HIDDEN + (h + 1) * HEAD_DIM]
            s_heads.append(lax.dot_general(q_h, k_h, (((1,), (1,)), ((), ())),
                                           preferred_element_type=jnp.float32))
        s = jnp.concatenate(s_heads, axis=0) + bias_all           # (NH*BS, BS) f32
        s = s - jnp.max(s, axis=-1, keepdims=True)
        p = jnp.exp(s)
        p = p * pl.reciprocal(jnp.sum(p, axis=-1, keepdims=True), approx=True)
        p_b = p.astype(jnp.bfloat16)

        # per-head context, assembled lane-dense into (BS, HIDDEN)
        ctx_heads = []
        for h in range(NUM_HEADS):
            v_h = qkv_b[:, 2 * HIDDEN + h * HEAD_DIM:2 * HIDDEN + (h + 1) * HEAD_DIM]
            ctx_heads.append(jnp.dot(p_b[h * BS:(h + 1) * BS, :], v_h,
                                     preferred_element_type=jnp.float32))
        ctx = jnp.concatenate(ctx_heads, axis=-1)                 # (BS, H) f32

        attn_out = jnp.dot(ctx.astype(jnp.bfloat16), wo_ref[layer],
                           preferred_element_type=jnp.float32) + bo_ref[layer]
        h1 = _layernorm(x + attn_out, ln1g_ref[layer], ln1b_ref[layer])

        ff = jnp.dot(h1.astype(jnp.bfloat16), w1_ref[layer],
                     preferred_element_type=jnp.float32) + b1_ref[layer]
        ff = _gelu(ff)
        ff = jnp.dot(ff.astype(jnp.bfloat16), w2_ref[layer],
                     preferred_element_type=jnp.float32) + b2_ref[layer]
        x = _layernorm(h1 + ff, ln2g_ref[layer], ln2b_ref[layer])

    # ---- epilogue: CLS-row classifier + exact sort-free sparsemax -----------
    # gather only the BATCH CLS rows (row b*SEQ of each batch)
    cls_x = jnp.concatenate([x[b * SEQ:b * SEQ + 1, :] for b in range(BATCH)], axis=0)
    # pad lanes: cls_w pad columns are zero and cls_b pad lanes are NEG_BIG, so
    # z already carries the pad-lane mask (no in-kernel iota/where needed).
    z = jnp.dot(cls_x.astype(jnp.bfloat16), clsw_ref[...],
                preferred_element_type=jnp.float32) + clsb_ref[...]   # (B, D_PAD)
    zt = z.T                                                          # (D_PAD, B)

    # Sort-free exact sparsemax: for each candidate threshold z_i,
    #   c_i = #{j : z_j >= z_i},  s_i = sum{z_j : z_j >= z_i}
    #   support(i) <=> 1 + c_i*z_i > s_i ;  k = max c over support ;
    #   tau = (s_k - 1)/k ;  p = max(z - tau, 0)
    rows = []
    for b in range(BATCH):
        zr = z[b:b + 1, :]                               # (1, D_PAD) along lanes
        zc = zt[:, b:b + 1]                              # (D_PAD, 1) along sublanes
        ge = (zr >= zc).astype(jnp.float32)              # ge[i,j] = [z_j >= z_i]
        c = jnp.sum(ge, axis=-1, keepdims=True)          # (D_PAD, 1)
        ssum = jnp.sum(ge * zr, axis=-1, keepdims=True)  # (D_PAD, 1)
        supp = (1.0 + c * zc) > ssum
        kk = jnp.max(jnp.where(supp, c, 0.0), axis=0, keepdims=True)        # (1,1)
        s_k = jnp.max(jnp.where(jnp.logical_and(supp, c == kk), ssum,
                                jnp.float32(-1e30)), axis=0, keepdims=True)
        tau = (s_k - 1.0) / kk                           # exact div keeps sum==1
        rows.append(jnp.maximum(zr - tau, 0.0))
    probs_ref[...] = jnp.concatenate(rows, axis=0).astype(probs_ref.dtype)


# ------------------------------- pallas_call wrapper ----------------------------
def _fused_forward(emb2, bias, params):
    layer_keys = ["wqkv", "bqkv", "wo", "bo", "ln1_g", "ln1_b",
                  "w1", "b1", "w2", "b2", "ln2_g", "ln2_b"]
    args = ([emb2, bias, params["emb_ln_g"], params["emb_ln_b"]]
            + [params[k] for k in layer_keys]
            + [params["cls_w"], params["cls_b"]])

    # every operand is a fully resident VMEM block (total footprint < 1 MiB)
    in_specs = [pl.BlockSpec(tuple(a.shape), lambda i, nd=a.ndim: (0,) * nd)
                for a in args]

    return pl.pallas_call(
        fused_bert_kernel,
        out_shape=jax.ShapeDtypeStruct((BATCH, D_PAD), jnp.float32),
        grid_spec=pltpu.PrefetchScalarGridSpec(
            num_scalar_prefetch=0,
            grid=(1,),
            in_specs=in_specs,
            out_specs=pl.BlockSpec((BATCH, D_PAD), lambda i: (0, 0))),
        # Single TensorCore on purpose at this size (v7x: add a 'parallel' batch
        # grid axis only once per-core work exceeds a few microseconds).
        compiler_params=pltpu.CompilerParams(
            dimension_semantics=("arbitrary",)),
    )(*args)


# --------------------------- parameter initialization ---------------------------
def init_params(key):
    def normal(k, shape, std=0.02):
        return std * jax.random.normal(k, shape, jnp.float32)

    ks = jax.random.split(key, 8)

    # fused QKV weight with the attention scale folded into the Q third
    scale = 1.0 / (HEAD_DIM ** 0.5)
    wqkv = normal(ks[3], (NUM_LAYERS, HIDDEN, 3 * HIDDEN))
    wqkv = wqkv.at[:, :, :HIDDEN].multiply(scale)

    params = {
        "word_emb": normal(ks[0], (VOCAB, HIDDEN)),
        "pos_emb": normal(ks[1], (MAX_POS, HIDDEN)),
        "type_emb": normal(ks[2], (TYPE_VOCAB, HIDDEN)),
        "emb_ln_g": jnp.ones((1, HIDDEN), jnp.float32),
        "emb_ln_b": jnp.zeros((1, HIDDEN), jnp.float32),
        # matmul weights in bf16 (MXU-native on v6e/v7x); biases / LN in f32
        "wqkv": wqkv.astype(jnp.bfloat16),
        "bqkv": jnp.zeros((NUM_LAYERS, 1, 3 * HIDDEN), jnp.float32),
        "wo": normal(ks[4], (NUM_LAYERS, HIDDEN, HIDDEN)).astype(jnp.bfloat16),
        "bo": jnp.zeros((NUM_LAYERS, 1, HIDDEN), jnp.float32),
        "ln1_g": jnp.ones((NUM_LAYERS, 1, HIDDEN), jnp.float32),
        "ln1_b": jnp.zeros((NUM_LAYERS, 1, HIDDEN), jnp.float32),
        "w1": normal(ks[5], (NUM_LAYERS, HIDDEN, INTERMEDIATE)).astype(jnp.bfloat16),
        "b1": jnp.zeros((NUM_LAYERS, 1, INTERMEDIATE), jnp.float32),
        "w2": normal(ks[6], (NUM_LAYERS, INTERMEDIATE, HIDDEN)).astype(jnp.bfloat16),
        "b2": jnp.zeros((NUM_LAYERS, 1, HIDDEN), jnp.float32),
        "ln2_g": jnp.ones((NUM_LAYERS, 1, HIDDEN), jnp.float32),
        "ln2_b": jnp.zeros((NUM_LAYERS, 1, HIDDEN), jnp.float32),
    }
    # classifier: xavier_uniform weight, zero bias (matches init_weights()),
    # padded to D_PAD lane-dense columns.  Pad columns of W are zero and pad
    # lanes of the bias carry NEG_BIG so the kernel sees pre-masked logits.
    limit = (6.0 / (HIDDEN + NUM_DISEASES)) ** 0.5
    w = jax.random.uniform(ks[7], (HIDDEN, NUM_DISEASES), jnp.float32, -limit, limit)
    cls_w = jnp.zeros((HIDDEN, D_PAD), jnp.float32).at[:, :NUM_DISEASES].set(w)
    params["cls_w"] = cls_w.astype(jnp.bfloat16)
    cls_b = jnp.full((1, D_PAD), NEG_BIG, jnp.float32).at[:, :NUM_DISEASES].set(0.0)
    params["cls_b"] = cls_b
    return params


# --------------------------------- forward pass ---------------------------------
def bert_for_disease_prediction(params, input_ids, attention_mask=None,
                                token_type_ids=None, labels=None):
    B, S = input_ids.shape
    if attention_mask is None:
        attention_mask = jnp.ones((B, S), jnp.float32)
    if token_type_ids is None:
        token_type_ids = jnp.zeros((B, S), jnp.int32)

    # embedding gathers stay in plain JAX glue; everything after runs in one
    # fused Pallas kernel
    emb = (params["word_emb"][input_ids]
           + params["pos_emb"][jnp.arange(S)][None, :, :]
           + params["type_emb"][token_type_ids])                 # (B, S, H)
    emb2 = emb.reshape(B * S, HIDDEN)

    # additive score bias with batch folded into one (B*S, B*S) block-diagonal
    # mask: 0 for attended same-batch keys, -10000 for masked keys, -1e9 across
    # batches (exp underflows to exactly 0 -> identical to per-batch softmax)
    batch_idx = jnp.repeat(jnp.arange(B), S)
    same_batch = batch_idx[:, None] == batch_idx[None, :]
    key_mask = attention_mask.reshape(B * S).astype(jnp.float32)
    bias = (jnp.where(same_batch, 0.0, NEG_BIG)
            + (1.0 - key_mask)[None, :] * -10000.0).astype(jnp.float32)

    probs = _fused_forward(emb2, bias, params)[:, :NUM_DISEASES]

    loss = None
    if labels is not None:
        loss = jnp.mean((probs - labels) ** 2)                   # nn.MSELoss()
    return {"loss": loss, "probs": probs}


# ------------------------------------ main ---------------------------------------
if __name__ == "__main__":
    key = jax.random.PRNGKey(0)
    pkey, ikey, lkey = jax.random.split(key, 3)

    params = init_params(pkey)
    input_ids = jax.random.randint(ikey, (BATCH, SEQ), 0, VOCAB, dtype=jnp.int32)
    attention_mask = jnp.ones((BATCH, SEQ), jnp.float32)
    token_type_ids = jnp.zeros((BATCH, SEQ), jnp.int32)
    labels = jax.random.uniform(lkey, (BATCH, NUM_DISEASES), jnp.float32)

    forward = jax.jit(bert_for_disease_prediction)
    out = forward(params, input_ids, attention_mask, token_type_ids, labels)
    probs = jax.block_until_ready(out["probs"])
    loss = jax.block_until_ready(out["loss"])

    # sanity: sparsemax outputs are non-negative and sum to 1 per row
    row_sums = jnp.sum(probs, axis=1)
    assert probs.shape == (BATCH, NUM_DISEASES)
    assert bool(jnp.all(probs >= 0.0))
    assert bool(jnp.all(jnp.abs(row_sums - 1.0) < 1e-4))
    assert bool(jnp.isfinite(loss))

    print("KERNEL_OK")
</pallas_src>

<mosaic_0001>
module attributes {stable_mosaic.version = 11 : i64} {
  func.func @fused_bert_kernel(%arg0: i32, %arg1: memref<16x128xf32, #tpu.memory_space<vmem>>, %arg2: memref<16x16xf32, #tpu.memory_space<vmem>>, %arg3: memref<1x128xf32, #tpu.memory_space<vmem>>, %arg4: memref<1x128xf32, #tpu.memory_space<vmem>>, %arg5: memref<2x128x384xbf16, #tpu.memory_space<vmem>>, %arg6: memref<2x1x384xf32, #tpu.memory_space<vmem>>, %arg7: memref<2x128x128xbf16, #tpu.memory_space<vmem>>, %arg8: memref<2x1x128xf32, #tpu.memory_space<vmem>>, %arg9: memref<2x1x128xf32, #tpu.memory_space<vmem>>, %arg10: memref<2x1x128xf32, #tpu.memory_space<vmem>>, %arg11: memref<2x128x256xbf16, #tpu.memory_space<vmem>>, %arg12: memref<2x1x256xf32, #tpu.memory_space<vmem>>, %arg13: memref<2x256x128xbf16, #tpu.memory_space<vmem>>, %arg14: memref<2x1x128xf32, #tpu.memory_space<vmem>>, %arg15: memref<2x1x128xf32, #tpu.memory_space<vmem>>, %arg16: memref<2x1x128xf32, #tpu.memory_space<vmem>>, %arg17: memref<128x128xbf16, #tpu.memory_space<vmem>>, %arg18: memref<1x128xf32, #tpu.memory_space<vmem>>, %arg19: memref<2x128xf32, #tpu.memory_space<vmem>>) attributes {dimension_semantics = [#tpu.dimension_semantics<arbitrary>], iteration_bounds = array<i64: 1>, scalar_prefetch = 0 : i64, scratch_operands = 0 : i64, tpu.core_type = #tpu.core_type<tc>, window_params = [{pipeline_mode = #tpu.pipeline_mode<synchronous>, transform_indices = @transform_0, window_bounds = array<i64: 16, 128>}, {pipeline_mode = #tpu.pipeline_mode<synchronous>, transform_indices = @transform_1, window_bounds = array<i64: 16, 16>}, {pipeline_mode = #tpu.pipeline_mode<synchronous>, transform_indices = @transform_2, window_bounds = array<i64: 1, 128>}, {pipeline_mode = #tpu.pipeline_mode<synchronous>, transform_indices = @transform_3, window_bounds = array<i64: 1, 128>}, {pipeline_mode = #tpu.pipeline_mode<synchronous>, transform_indices = @transform_4, window_bounds = array<i64: 2, 128, 384>}, {pipeline_mode = #tpu.pipeline_mode<synchronous>, transform_indices = @transform_5, window_bounds = array<i64: 2, 1, 384>}, {pipeline_mode = #tpu.pipeline_mode<synchronous>, transform_indices = @transform_6, window_bounds = array<i64: 2, 128, 128>}, {pipeline_mode = #tpu.pipeline_mode<synchronous>, transform_indices = @transform_7, window_bounds = array<i64: 2, 1, 128>}, {pipeline_mode = #tpu.pipeline_mode<synchronous>, transform_indices = @transform_8, window_bounds = array<i64: 2, 1, 128>}, {pipeline_mode = #tpu.pipeline_mode<synchronous>, transform_indices = @transform_9, window_bounds = array<i64: 2, 1, 128>}, {pipeline_mode = #tpu.pipeline_mode<synchronous>, transform_indices = @transform_10, window_bounds = array<i64: 2, 128, 256>}, {pipeline_mode = #tpu.pipeline_mode<synchronous>, transform_indices = @transform_11, window_bounds = array<i64: 2, 1, 256>}, {pipeline_mode = #tpu.pipeline_mode<synchronous>, transform_indices = @transform_12, window_bounds = array<i64: 2, 256, 128>}, {pipeline_mode = #tpu.pipeline_mode<synchronous>, transform_indices = @transform_13, window_bounds = array<i64: 2, 1, 128>}, {pipeline_mode = #tpu.pipeline_mode<synchronous>, transform_indices = @transform_14, window_bounds = array<i64: 2, 1, 128>}, {pipeline_mode = #tpu.pipeline_mode<synchronous>, transform_indices = @transform_15, window_bounds = array<i64: 2, 1, 128>}, {pipeline_mode = #tpu.pipeline_mode<synchronous>, transform_indices = @transform_16, window_bounds = array<i64: 128, 128>}, {pipeline_mode = #tpu.pipeline_mode<synchronous>, transform_indices = @transform_17, window_bounds = array<i64: 1, 128>}, {pipeline_mode = #tpu.pipeline_mode<synchronous>, transform_indices = @transform_18, window_bounds = array<i64: 2, 128>}]} {
    %c0 = arith.constant 0 : index
    %c0_0 = arith.constant 0 : index
    %0 = vector.load %arg1[%c0, %c0_0] : memref<16x128xf32, #tpu.memory_space<vmem>>, vector<16x128xf32>
    %c0_1 = arith.constant 0 : index
    %c0_2 = arith.constant 0 : index
    %1 = vector.load %arg3[%c0_1, %c0_2] : memref<1x128xf32, #tpu.memory_space<vmem>>, vector<1x128xf32>
    %c0_3 = arith.constant 0 : index
    %c0_4 = arith.constant 0 : index
    %2 = vector.load %arg4[%c0_3, %c0_4] : memref<1x128xf32, #tpu.memory_space<vmem>>, vector<1x128xf32>
    %cst = arith.constant dense<0.000000e+00> : vector<16xf32>
    %3 = vector.multi_reduction <add>, %0, %cst [1] : vector<16x128xf32> to vector<16xf32>
    %4 = vector.shape_cast %3 : vector<16xf32> to vector<16x1xf32>
    %cst_5 = arith.constant 1.280000e+02 : f32
    %5 = vector.broadcast %cst_5 : f32 to vector<16x1xf32>
    %6 = arith.divf %4, %5 : vector<16x1xf32>
    %7 = vector.broadcast %6 : vector<16x1xf32> to vector<16x128xf32>
    %8 = arith.subf %0, %7 : vector<16x128xf32>
    %9 = arith.mulf %8, %8 : vector<16x128xf32>
    %cst_6 = arith.constant dense<0.000000e+00> : vector<16xf32>
    %10 = vector.multi_reduction <add>, %9, %cst_6 [1] : vector<16x128xf32> to vector<16xf32>
    %11 = vector.shape_cast %10 : vector<16xf32> to vector<16x1xf32>
    %cst_7 = arith.constant 1.280000e+02 : f32
    %12 = vector.broadcast %cst_7 : f32 to vector<16x1xf32>
    %13 = arith.divf %11, %12 : vector<16x1xf32>
    %14 = vector.broadcast %6 : vector<16x1xf32> to vector<16x128xf32>
    %15 = arith.subf %0, %14 : vector<16x128xf32>
    %cst_8 = arith.constant 9.99999996E-13 : f32
    %16 = vector.broadcast %cst_8 : f32 to vector<16x1xf32>
    %17 = arith.addf %13, %16 : vector<16x1xf32>
    %18 = math.rsqrt %17 : vector<16x1xf32>
    %19 = vector.broadcast %18 : vector<16x1xf32> to vector<16x128xf32>
    %20 = arith.mulf %15, %19 : vector<16x128xf32>
    %21 = vector.broadcast %1 : vector<1x128xf32> to vector<16x128xf32>
    %22 = arith.mulf %20, %21 : vector<16x128xf32>
    %23 = vector.broadcast %2 : vector<1x128xf32> to vector<16x128xf32>
    %24 = arith.addf %22, %23 : vector<16x128xf32>
    %c0_9 = arith.constant 0 : index
    %c0_10 = arith.constant 0 : index
    %25 = vector.load %arg2[%c0_9, %c0_10] : memref<16x16xf32, #tpu.memory_space<vmem>>, vector<16x16xf32>
    %26 = tpu.concatenate %25, %25, %25, %25 in 0 : vector<16x16xf32>, vector<16x16xf32>, vector<16x16xf32>, vector<16x16xf32> -> vector<64x16xf32>
    %27 = arith.truncf %24 : vector<16x128xf32> to vector<16x128xbf16>
    %c0_11 = arith.constant 0 : index
    %c0_12 = arith.constant 0 : index
    %c0_13 = arith.constant 0 : index
    %28 = vector.load %arg5[%c0_11, %c0_12, %c0_13] : memref<2x128x384xbf16, #tpu.memory_space<vmem>>, vector<1x128x384xbf16>
    %29 = vector.shape_cast %28 : vector<1x128x384xbf16> to vector<128x384xbf16>
    %cst_14 = arith.constant dense<0.000000e+00> : vector<16x384xf32>
    %30 = tpu.matmul %27, %29, %cst_14 {dimension_numbers = #tpu.dot_dimension_numbers<[1], [0], [0], [1], [0, 0, 1, 1], [], []>} : vector<16x128xbf16>, vector<128x384xbf16>, vector<16x384xf32> -> vector<16x384xf32>
    %c0_15 = arith.constant 0 : index
    %c0_16 = arith.constant 0 : index
    %c0_17 = arith.constant 0 : index
    %31 = vector.load %arg6[%c0_15, %c0_16, %c0_17] : memref<2x1x384xf32, #tpu.memory_space<vmem>>, vector<1x1x384xf32>
    %32 = vector.shape_cast %31 : vector<1x1x384xf32> to vector<1x384xf32>
    %33 = vector.broadcast %32 : vector<1x384xf32> to vector<16x384xf32>
    %34 = arith.addf %30, %33 : vector<16x384xf32>
    %35 = arith.truncf %34 : vector<16x384xf32> to vector<16x384xbf16>
    %36 = vector.extract_strided_slice %35 {offsets = [0, 0], sizes = [16, 32], strides = [1, 1]} : vector<16x384xbf16> to vector<16x32xbf16>
    %37 = vector.extract_strided_slice %35 {offsets = [0, 128], sizes = [16, 32], strides = [1, 1]} : vector<16x384xbf16> to vector<16x32xbf16>
    %cst_18 = arith.constant dense<0.000000e+00> : vector<16x16xf32>
    %38 = tpu.matmul %36, %37, %cst_18 {dimension_numbers = #tpu.dot_dimension_numbers<[1], [1], [0], [0], [0, 0, 1, 0], [], []>} : vector<16x32xbf16>, vector<16x32xbf16>, vector<16x16xf32> -> vector<16x16xf32>
    %39 = vector.extract_strided_slice %35 {offsets = [0, 32], sizes = [16, 32], strides = [1, 1]} : vector<16x384xbf16> to vector<16x32xbf16>
    %40 = vector.extract_strided_slice %35 {offsets = [0, 160], sizes = [16, 32], strides = [1, 1]} : vector<16x384xbf16> to vector<16x32xbf16>
    %cst_19 = arith.constant dense<0.000000e+00> : vector<16x16xf32>
    %41 = tpu.matmul %39, %40, %cst_19 {dimension_numbers = #tpu.dot_dimension_numbers<[1], [1], [0], [0], [0, 0, 1, 0], [], []>} : vector<16x32xbf16>, vector<16x32xbf16>, vector<16x16xf32> -> vector<16x16xf32>
    %42 = vector.extract_strided_slice %35 {offsets = [0, 64], sizes = [16, 32], strides = [1, 1]} : vector<16x384xbf16> to vector<16x32xbf16>
    %43 = vector.extract_strided_slice %35 {offsets = [0, 192], sizes = [16, 32], strides = [1, 1]} : vector<16x384xbf16> to vector<16x32xbf16>
    %cst_20 = arith.constant dense<0.000000e+00> : vector<16x16xf32>
    %44 = tpu.matmul %42, %43, %cst_20 {dimension_numbers = #tpu.dot_dimension_numbers<[1], [1], [0], [0], [0, 0, 1, 0], [], []>} : vector<16x32xbf16>, vector<16x32xbf16>, vector<16x16xf32> -> vector<16x16xf32>
    %45 = vector.extract_strided_slice %35 {offsets = [0, 96], sizes = [16, 32], strides = [1, 1]} : vector<16x384xbf16> to vector<16x32xbf16>
    %46 = vector.extract_strided_slice %35 {offsets = [0, 224], sizes = [16, 32], strides = [1, 1]} : vector<16x384xbf16> to vector<16x32xbf16>
    %cst_21 = arith.constant dense<0.000000e+00> : vector<16x16xf32>
    %47 = tpu.matmul %45, %46, %cst_21 {dimension_numbers = #tpu.dot_dimension_numbers<[1], [1], [0], [0], [0, 0, 1, 0], [], []>} : vector<16x32xbf16>, vector<16x32xbf16>, vector<16x16xf32> -> vector<16x16xf32>
    %48 = tpu.concatenate %38, %41, %44, %47 in 0 : vector<16x16xf32>, vector<16x16xf32>, vector<16x16xf32>, vector<16x16xf32> -> vector<64x16xf32>
    %49 = arith.addf %48, %26 : vector<64x16xf32>
    %cst_22 = arith.constant dense<0xFF800000> : vector<64xf32>
    %50 = vector.multi_reduction <maximumf>, %49, %cst_22 [1] : vector<64x16xf32> to vector<64xf32>
    %51 = vector.shape_cast %50 : vector<64xf32> to vector<64x1xf32>
    %52 = vector.broadcast %51 : vector<64x1xf32> to vector<64x16xf32>
    %53 = arith.subf %49, %52 : vector<64x16xf32>
    %54 = math.exp %53 : vector<64x16xf32>
    %cst_23 = arith.constant dense<0.000000e+00> : vector<64xf32>
    %55 = vector.multi_reduction <add>, %54, %cst_23 [1] : vector<64x16xf32> to vector<64xf32>
    %56 = vector.shape_cast %55 : vector<64xf32> to vector<64x1xf32>
    %57 = tpu.reciprocal %56 {approx = true} : vector<64x1xf32> -> vector<64x1xf32>
    %58 = vector.broadcast %57 : vector<64x1xf32> to vector<64x16xf32>
    %59 = arith.mulf %54, %58 : vector<64x16xf32>
    %60 = arith.truncf %59 : vector<64x16xf32> to vector<64x16xbf16>
    %61 = vector.extract_strided_slice %35 {offsets = [0, 256], sizes = [16, 32], strides = [1, 1]} : vector<16x384xbf16> to vector<16x32xbf16>
    %62 = vector.extract_strided_slice %60 {offsets = [0, 0], sizes = [16, 16], strides = [1, 1]} : vector<64x16xbf16> to vector<16x16xbf16>
    %cst_24 = arith.constant dense<0.000000e+00> : vector<16x32xf32>
    %63 = tpu.matmul %62, %61, %cst_24 {dimension_numbers = #tpu.dot_dimension_numbers<[1], [0], [0], [1], [0, 0, 1, 1], [], []>} : vector<16x16xbf16>, vector<16x32xbf16>, vector<16x32xf32> -> vector<16x32xf32>
    %64 = vector.extract_strided_slice %35 {offsets = [0, 288], sizes = [16, 32], strides = [1, 1]} : vector<16x384xbf16> to vector<16x32xbf16>
    %65 = vector.extract_strided_slice %60 {offsets = [16, 0], sizes = [16, 16], strides = [1, 1]} : vector<64x16xbf16> to vector<16x16xbf16>
    %cst_25 = arith.constant dense<0.000000e+00> : vector<16x32xf32>
    %66 = tpu.matmul %65, %64, %cst_25 {dimension_numbers = #tpu.dot_dimension_numbers<[1], [0], [0], [1], [0, 0, 1, 1], [], []>} : vector<16x16xbf16>, vector<16x32xbf16>, vector<16x32xf32> -> vector<16x32xf32>
    %67 = vector.extract_strided_slice %35 {offsets = [0, 320], sizes = [16, 32], strides = [1, 1]} : vector<16x384xbf16> to vector<16x32xbf16>
    %68 = vector.extract_strided_slice %60 {offsets = [32, 0], sizes = [16, 16], strides = [1, 1]} : vector<64x16xbf16> to vector<16x16xbf16>
    %cst_26 = arith.constant dense<0.000000e+00> : vector<16x32xf32>
    %69 = tpu.matmul %68, %67, %cst_26 {dimension_numbers = #tpu.dot_dimension_numbers<[1], [0], [0], [1], [0, 0, 1, 1], [], []>} : vector<16x16xbf16>, vector<16x32xbf16>, vector<16x32xf32> -> vector<16x32xf32>
    %70 = vector.extract_strided_slice %35 {offsets = [0, 352], sizes = [16, 32], strides = [1, 1]} : vector<16x384xbf16> to vector<16x32xbf16>
    %71 = vector.extract_strided_slice %60 {offsets = [48, 0], sizes = [16, 16], strides = [1, 1]} : vector<64x16xbf16> to vector<16x16xbf16>
    %cst_27 = arith.constant dense<0.000000e+00> : vector<16x32xf32>
    %72 = tpu.matmul %71, %70, %cst_27 {dimension_numbers = #tpu.dot_dimension_numbers<[1], [0], [0], [1], [0, 0, 1, 1], [], []>} : vector<16x16xbf16>, vector<16x32xbf16>, vector<16x32xf32> -> vector<16x32xf32>
    %73 = tpu.concatenate %63, %66, %69, %72 in 1 : vector<16x32xf32>, vector<16x32xf32>, vector<16x32xf32>, vector<16x32xf32> -> vector<16x128xf32>
    %74 = arith.truncf %73 : vector<16x128xf32> to vector<16x128xbf16>
    %c0_28 = arith.constant 0 : index
    %c0_29 = arith.constant 0 : index
    %c0_30 = arith.constant 0 : index
    %75 = vector.load %arg7[%c0_28, %c0_29, %c0_30] : memref<2x128x128xbf16, #tpu.memory_space<vmem>>, vector<1x128x128xbf16>
    %76 = vector.shape_cast %75 : vector<1x128x128xbf16> to vector<128x128xbf16>
    %cst_31 = arith.constant dense<0.000000e+00> : vector<16x128xf32>
    %77 = tpu.matmul %74, %76, %cst_31 {dimension_numbers = #tpu.dot_dimension_numbers<[1], [0], [0], [1], [0, 0, 1, 1], [], []>} : vector<16x128xbf16>, vector<128x128xbf16>, vector<16x128xf32> -> vector<16x128xf32>
    %c0_32 = arith.constant 0 : index
    %c0_33 = arith.constant 0 : index
    %c0_34 = arith.constant 0 : index
    %78 = vector.load %arg8[%c0_32, %c0_33, %c0_34] : memref<2x1x128xf32, #tpu.memory_space<vmem>>, vector<1x1x128xf32>
    %79 = vector.shape_cast %78 : vector<1x1x128xf32> to vector<1x128xf32>
    %80 = vector.broadcast %79 : vector<1x128xf32> to vector<16x128xf32>
    %81 = arith.addf %77, %80 : vector<16x128xf32>
    %82 = arith.addf %24, %81 : vector<16x128xf32>
    %c0_35 = arith.constant 0 : index
    %c0_36 = arith.constant 0 : index
    %c0_37 = arith.constant 0 : index
    %83 = vector.load %arg9[%c0_35, %c0_36, %c0_37] : memref<2x1x128xf32, #tpu.memory_space<vmem>>, vector<1x1x128xf32>
    %84 = vector.shape_cast %83 : vector<1x1x128xf32> to vector<1x128xf32>
    %c0_38 = arith.constant 0 : index
    %c0_39 = arith.constant 0 : index
    %c0_40 = arith.constant 0 : index
    %85 = vector.load %arg10[%c0_38, %c0_39, %c0_40] : memref<2x1x128xf32, #tpu.memory_space<vmem>>, vector<1x1x128xf32>
    %86 = vector.shape_cast %85 : vector<1x1x128xf32> to vector<1x128xf32>
    %cst_41 = arith.constant dense<0.000000e+00> : vector<16xf32>
    %87 = vector.multi_reduction <add>, %82, %cst_41 [1] : vector<16x128xf32> to vector<16xf32>
    %88 = vector.shape_cast %87 : vector<16xf32> to vector<16x1xf32>
    %cst_42 = arith.constant 1.280000e+02 : f32
    %89 = vector.broadcast %cst_42 : f32 to vector<16x1xf32>
    %90 = arith.divf %88, %89 : vector<16x1xf32>
    %91 = vector.broadcast %90 : vector<16x1xf32> to vector<16x128xf32>
    %92 = arith.subf %82, %91 : vector<16x128xf32>
    %93 = arith.mulf %92, %92 : vector<16x128xf32>
    %cst_43 = arith.constant dense<0.000000e+00> : vector<16xf32>
    %94 = vector.multi_reduction <add>, %93, %cst_43 [1] : vector<16x128xf32> to vector<16xf32>
    %95 = vector.shape_cast %94 : vector<16xf32> to vector<16x1xf32>
    %cst_44 = arith.constant 1.280000e+02 : f32
    %96 = vector.broadcast %cst_44 : f32 to vector<16x1xf32>
    %97 = arith.divf %95, %96 : vector<16x1xf32>
    %98 = vector.broadcast %90 : vector<16x1xf32> to vector<16x128xf32>
    %99 = arith.subf %82, %98 : vector<16x128xf32>
    %cst_45 = arith.constant 9.99999996E-13 : f32
    %100 = vector.broadcast %cst_45 : f32 to vector<16x1xf32>
    %101 = arith.addf %97, %100 : vector<16x1xf32>
    %102 = math.rsqrt %101 : vector<16x1xf32>
    %103 = vector.broadcast %102 : vector<16x1xf32> to vector<16x128xf32>
    %104 = arith.mulf %99, %103 : vector<16x128xf32>
    %105 = vector.broadcast %84 : vector<1x128xf32> to vector<16x128xf32>
    %106 = arith.mulf %104, %105 : vector<16x128xf32>
    %107 = vector.broadcast %86 : vector<1x128xf32> to vector<16x128xf32>
    %108 = arith.addf %106, %107 : vector<16x128xf32>
    %109 = arith.truncf %108 : vector<16x128xf32> to vector<16x128xbf16>
    %c0_46 = arith.constant 0 : index
    %c0_47 = arith.constant 0 : index
    %c0_48 = arith.constant 0 : index
    %110 = vector.load %arg11[%c0_46, %c0_47, %c0_48] : memref<2x128x256xbf16, #tpu.memory_space<vmem>>, vector<1x128x256xbf16>
    %111 = vector.shape_cast %110 : vector<1x128x256xbf16> to vector<128x256xbf16>
    %cst_49 = arith.constant dense<0.000000e+00> : vector<16x256xf32>
    %112 = tpu.matmul %109, %111, %cst_49 {dimension_numbers = #tpu.dot_dimension_numbers<[1], [0], [0], [1], [0, 0, 1, 1], [], []>} : vector<16x128xbf16>, vector<128x256xbf16>, vector<16x256xf32> -> vector<16x256xf32>
    %c0_50 = arith.constant 0 : index
    %c0_51 = arith.constant 0 : index
    %c0_52 = arith.constant 0 : index
    %113 = vector.load %arg12[%c0_50, %c0_51, %c0_52] : memref<2x1x256xf32, #tpu.memory_space<vmem>>, vector<1x1x256xf32>
    %114 = vector.shape_cast %113 : vector<1x1x256xf32> to vector<1x256xf32>
    %115 = vector.broadcast %114 : vector<1x256xf32> to vector<16x256xf32>
    %116 = arith.addf %112, %115 : vector<16x256xf32>
    %cst_53 = arith.constant 5.000000e-01 : f32
    %117 = vector.broadcast %cst_53 : f32 to vector<16x256xf32>
    %118 = arith.mulf %117, %116 : vector<16x256xf32>
    %cst_54 = arith.constant 4.471500e-02 : f32
    %119 = vector.broadcast %cst_54 : f32 to vector<16x256xf32>
    %120 = arith.mulf %119, %116 : vector<16x256xf32>
    %121 = arith.mulf %120, %116 : vector<16x256xf32>
    %122 = arith.mulf %121, %116 : vector<16x256xf32>
    %123 = arith.addf %116, %122 : vector<16x256xf32>
    %cst_55 = arith.constant 0.797884583 : f32
    %124 = vector.broadcast %cst_55 : f32 to vector<16x256xf32>
    %125 = arith.mulf %124, %123 : vector<16x256xf32>
    %126 = math.tanh %125 : vector<16x256xf32>
    %cst_56 = arith.constant 1.000000e+00 : f32
    %127 = vector.broadcast %cst_56 : f32 to vector<16x256xf32>
    %128 = arith.addf %127, %126 : vector<16x256xf32>
    %129 = arith.mulf %118, %128 : vector<16x256xf32>
    %130 = arith.truncf %129 : vector<16x256xf32> to vector<16x256xbf16>
    %c0_57 = arith.constant 0 : index
    %c0_58 = arith.constant 0 : index
    %c0_59 = arith.constant 0 : index
    %131 = vector.load %arg13[%c0_57, %c0_58, %c0_59] : memref<2x256x128xbf16, #tpu.memory_space<vmem>>, vector<1x256x128xbf16>
    %132 = vector.shape_cast %131 : vector<1x256x128xbf16> to vector<256x128xbf16>
    %cst_60 = arith.constant dense<0.000000e+00> : vector<16x128xf32>
    %133 = tpu.matmul %130, %132, %cst_60 {dimension_numbers = #tpu.dot_dimension_numbers<[1], [0], [0], [1], [0, 0, 1, 1], [], []>} : vector<16x256xbf16>, vector<256x128xbf16>, vector<16x128xf32> -> vector<16x128xf32>
    %c0_61 = arith.constant 0 : index
    %c0_62 = arith.constant 0 : index
    %c0_63 = arith.constant 0 : index
    %134 = vector.load %arg14[%c0_61, %c0_62, %c0_63] : memref<2x1x128xf32, #tpu.memory_space<vmem>>, vector<1x1x128xf32>
    %135 = vector.shape_cast %134 : vector<1x1x128xf32> to vector<1x128xf32>
    %136 = vector.broadcast %135 : vector<1x128xf32> to vector<16x128xf32>
    %137 = arith.addf %133, %136 : vector<16x128xf32>
    %138 = arith.addf %108, %137 : vector<16x128xf32>
    %c0_64 = arith.constant 0 : index
    %c0_65 = arith.constant 0 : index
    %c0_66 = arith.constant 0 : index
    %139 = vector.load %arg15[%c0_64, %c0_65, %c0_66] : memref<2x1x128xf32, #tpu.memory_space<vmem>>, vector<1x1x128xf32>
    %140 = vector.shape_cast %139 : vector<1x1x128xf32> to vector<1x128xf32>
    %c0_67 = arith.constant 0 : index
    %c0_68 = arith.constant 0 : index
    %c0_69 = arith.constant 0 : index
    %141 = vector.load %arg16[%c0_67, %c0_68, %c0_69] : memref<2x1x128xf32, #tpu.memory_space<vmem>>, vector<1x1x128xf32>
    %142 = vector.shape_cast %141 : vector<1x1x128xf32> to vector<1x128xf32>
    %cst_70 = arith.constant dense<0.000000e+00> : vector<16xf32>
    %143 = vector.multi_reduction <add>, %138, %cst_70 [1] : vector<16x128xf32> to vector<16xf32>
    %144 = vector.shape_cast %143 : vector<16xf32> to vector<16x1xf32>
    %cst_71 = arith.constant 1.280000e+02 : f32
    %145 = vector.broadcast %cst_71 : f32 to vector<16x1xf32>
    %146 = arith.divf %144, %145 : vector<16x1xf32>
    %147 = vector.broadcast %146 : vector<16x1xf32> to vector<16x128xf32>
    %148 = arith.subf %138, %147 : vector<16x128xf32>
    %149 = arith.mulf %148, %148 : vector<16x128xf32>
    %cst_72 = arith.constant dense<0.000000e+00> : vector<16xf32>
    %150 = vector.multi_reduction <add>, %149, %cst_72 [1] : vector<16x128xf32> to vector<16xf32>
    %151 = vector.shape_cast %150 : vector<16xf32> to vector<16x1xf32>
    %cst_73 = arith.constant 1.280000e+02 : f32
    %152 = vector.broadcast %cst_73 : f32 to vector<16x1xf32>
    %153 = arith.divf %151, %152 : vector<16x1xf32>
    %154 = vector.broadcast %146 : vector<16x1xf32> to vector<16x128xf32>
    %155 = arith.subf %138, %154 : vector<16x128xf32>
    %cst_74 = arith.constant 9.99999996E-13 : f32
    %156 = vector.broadcast %cst_74 : f32 to vector<16x1xf32>
    %157 = arith.addf %153, %156 : vector<16x1xf32>
    %158 = math.rsqrt %157 : vector<16x1xf32>
    %159 = vector.broadcast %158 : vector<16x1xf32> to vector<16x128xf32>
    %160 = arith.mulf %155, %159 : vector<16x128xf32>
    %161 = vector.broadcast %140 : vector<1x128xf32> to vector<16x128xf32>
    %162 = arith.mulf %160, %161 : vector<16x128xf32>
    %163 = vector.broadcast %142 : vector<1x128xf32> to vector<16x128xf32>
    %164 = arith.addf %162, %163 : vector<16x128xf32>
    %165 = arith.truncf %164 : vector<16x128xf32> to vector<16x128xbf16>
    %c1 = arith.constant 1 : index
    %c0_75 = arith.constant 0 : index
    %c0_76 = arith.constant 0 : index
    %166 = vector.load %arg5[%c1, %c0_75, %c0_76] : memref<2x128x384xbf16, #tpu.memory_space<vmem>>, vector<1x128x384xbf16>
    %167 = vector.shape_cast %166 : vector<1x128x384xbf16> to vector<128x384xbf16>
    %cst_77 = arith.constant dense<0.000000e+00> : vector<16x384xf32>
    %168 = tpu.matmul %165, %167, %cst_77 {dimension_numbers = #tpu.dot_dimension_numbers<[1], [0], [0], [1], [0, 0, 1, 1], [], []>} : vector<16x128xbf16>, vector<128x384xbf16>, vector<16x384xf32> -> vector<16x384xf32>
    %c1_78 = arith.constant 1 : index
    %c0_79 = arith.constant 0 : index
    %c0_80 = arith.constant 0 : index
    %169 = vector.load %arg6[%c1_78, %c0_79, %c0_80] : memref<2x1x384xf32, #tpu.memory_space<vmem>>, vector<1x1x384xf32>
    %170 = vector.shape_cast %169 : vector<1x1x384xf32> to vector<1x384xf32>
    %171 = vector.broadcast %170 : vector<1x384xf32> to vector<16x384xf32>
    %172 = arith.addf %168, %171 : vector<16x384xf32>
    %173 = arith.truncf %172 : vector<16x384xf32> to vector<16x384xbf16>
    %174 = vector.extract_strided_slice %173 {offsets = [0, 0], sizes = [16, 32], strides = [1, 1]} : vector<16x384xbf16> to vector<16x32xbf16>
    %175 = vector.extract_strided_slice %173 {offsets = [0, 128], sizes = [16, 32], strides = [1, 1]} : vector<16x384xbf16> to vector<16x32xbf16>
    %cst_81 = arith.constant dense<0.000000e+00> : vector<16x16xf32>
    %176 = tpu.matmul %174, %175, %cst_81 {dimension_numbers = #tpu.dot_dimension_numbers<[1], [1], [0], [0], [0, 0, 1, 0], [], []>} : vector<16x32xbf16>, vector<16x32xbf16>, vector<16x16xf32> -> vector<16x16xf32>
    %177 = vector.extract_strided_slice %173 {offsets = [0, 32], sizes = [16, 32], strides = [1, 1]} : vector<16x384xbf16> to vector<16x32xbf16>
    %178 = vector.extract_strided_slice %173 {offsets = [0, 160], sizes = [16, 32], strides = [1, 1]} : vector<16x384xbf16> to vector<16x32xbf16>
    %cst_82 = arith.constant dense<0.000000e+00> : vector<16x16xf32>
    %179 = tpu.matmul %177, %178, %cst_82 {dimension_numbers = #tpu.dot_dimension_numbers<[1], [1], [0], [0], [0, 0, 1, 0], [], []>} : vector<16x32xbf16>, vector<16x32xbf16>, vector<16x16xf32> -> vector<16x16xf32>
    %180 = vector.extract_strided_slice %173 {offsets = [0, 64], sizes = [16, 32], strides = [1, 1]} : vector<16x384xbf16> to vector<16x32xbf16>
    %181 = vector.extract_strided_slice %173 {offsets = [0, 192], sizes = [16, 32], strides = [1, 1]} : vector<16x384xbf16> to vector<16x32xbf16>
    %cst_83 = arith.constant dense<0.000000e+00> : vector<16x16xf32>
    %182 = tpu.matmul %180, %181, %cst_83 {dimension_numbers = #tpu.dot_dimension_numbers<[1], [1], [0], [0], [0, 0, 1, 0], [], []>} : vector<16x32xbf16>, vector<16x32xbf16>, vector<16x16xf32> -> vector<16x16xf32>
    %183 = vector.extract_strided_slice %173 {offsets = [0, 96], sizes = [16, 32], strides = [1, 1]} : vector<16x384xbf16> to vector<16x32xbf16>
    %184 = vector.extract_strided_slice %173 {offsets = [0, 224], sizes = [16, 32], strides = [1, 1]} : vector<16x384xbf16> to vector<16x32xbf16>
    %cst_84 = arith.constant dense<0.000000e+00> : vector<16x16xf32>
    %185 = tpu.matmul %183, %184, %cst_84 {dimension_numbers = #tpu.dot_dimension_numbers<[1], [1], [0], [0], [0, 0, 1, 0], [], []>} : vector<16x32xbf16>, vector<16x32xbf16>, vector<16x16xf32> -> vector<16x16xf32>
    %186 = tpu.concatenate %176, %179, %182, %185 in 0 : vector<16x16xf32>, vector<16x16xf32>, vector<16x16xf32>, vector<16x16xf32> -> vector<64x16xf32>
    %187 = arith.addf %186, %26 : vector<64x16xf32>
    %cst_85 = arith.constant dense<0xFF800000> : vector<64xf32>
    %188 = vector.multi_reduction <maximumf>, %187, %cst_85 [1] : vector<64x16xf32> to vector<64xf32>
    %189 = vector.shape_cast %188 : vector<64xf32> to vector<64x1xf32>
    %190 = vector.broadcast %189 : vector<64x1xf32> to vector<64x16xf32>
    %191 = arith.subf %187, %190 : vector<64x16xf32>
    %192 = math.exp %191 : vector<64x16xf32>
    %cst_86 = arith.constant dense<0.000000e+00> : vector<64xf32>
    %193 = vector.multi_reduction <add>, %192, %cst_86 [1] : vector<64x16xf32> to vector<64xf32>
    %194 = vector.shape_cast %193 : vector<64xf32> to vector<64x1xf32>
    %195 = tpu.reciprocal %194 {approx = true} : vector<64x1xf32> -> vector<64x1xf32>
    %196 = vector.broadcast %195 : vector<64x1xf32> to vector<64x16xf32>
    %197 = arith.mulf %192, %196 : vector<64x16xf32>
    %198 = arith.truncf %197 : vector<64x16xf32> to vector<64x16xbf16>
    %199 = vector.extract_strided_slice %173 {offsets = [0, 256], sizes = [16, 32], strides = [1, 1]} : vector<16x384xbf16> to vector<16x32xbf16>
    %200 = vector.extract_strided_slice %198 {offsets = [0, 0], sizes = [16, 16], strides = [1, 1]} : vector<64x16xbf16> to vector<16x16xbf16>
    %cst_87 = arith.constant dense<0.000000e+00> : vector<16x32xf32>
    %201 = tpu.matmul %200, %199, %cst_87 {dimension_numbers = #tpu.dot_dimension_numbers<[1], [0], [0], [1], [0, 0, 1, 1], [], []>} : vector<16x16xbf16>, vector<16x32xbf16>, vector<16x32xf32> -> vector<16x32xf32>
    %202 = vector.extract_strided_slice %173 {offsets = [0, 288], sizes = [16, 32], strides = [1, 1]} : vector<16x384xbf16> to vector<16x32xbf16>
    %203 = vector.extract_strided_slice %198 {offsets = [16, 0], sizes = [16, 16], strides = [1, 1]} : vector<64x16xbf16> to vector<16x16xbf16>
    %cst_88 = arith.constant dense<0.000000e+00> : vector<16x32xf32>
    %204 = tpu.matmul %203, %202, %cst_88 {dimension_numbers = #tpu.dot_dimension_numbers<[1], [0], [0], [1], [0, 0, 1, 1], [], []>} : vector<16x16xbf16>, vector<16x32xbf16>, vector<16x32xf32> -> vector<16x32xf32>
    %205 = vector.extract_strided_slice %173 {offsets = [0, 320], sizes = [16, 32], strides = [1, 1]} : vector<16x384xbf16> to vector<16x32xbf16>
    %206 = vector.extract_strided_slice %198 {offsets = [32, 0], sizes = [16, 16], strides = [1, 1]} : vector<64x16xbf16> to vector<16x16xbf16>
    %cst_89 = arith.constant dense<0.000000e+00> : vector<16x32xf32>
    %207 = tpu.matmul %206, %205, %cst_89 {dimension_numbers = #tpu.dot_dimension_numbers<[1], [0], [0], [1], [0, 0, 1, 1], [], []>} : vector<16x16xbf16>, vector<16x32xbf16>, vector<16x32xf32> -> vector<16x32xf32>
    %208 = vector.extract_strided_slice %173 {offsets = [0, 352], sizes = [16, 32], strides = [1, 1]} : vector<16x384xbf16> to vector<16x32xbf16>
    %209 = vector.extract_strided_slice %198 {offsets = [48, 0], sizes = [16, 16], strides = [1, 1]} : vector<64x16xbf16> to vector<16x16xbf16>
    %cst_90 = arith.constant dense<0.000000e+00> : vector<16x32xf32>
    %210 = tpu.matmul %209, %208, %cst_90 {dimension_numbers = #tpu.dot_dimension_numbers<[1], [0], [0], [1], [0, 0, 1, 1], [], []>} : vector<16x16xbf16>, vector<16x32xbf16>, vector<16x32xf32> -> vector<16x32xf32>
    %211 = tpu.concatenate %201, %204, %207, %210 in 1 : vector<16x32xf32>, vector<16x32xf32>, vector<16x32xf32>, vector<16x32xf32> -> vector<16x128xf32>
    %212 = arith.truncf %211 : vector<16x128xf32> to vector<16x128xbf16>
    %c1_91 = arith.constant 1 : index
    %c0_92 = arith.constant 0 : index
    %c0_93 = arith.constant 0 : index
    %213 = vector.load %arg7[%c1_91, %c0_92, %c0_93] : memref<2x128x128xbf16, #tpu.memory_space<vmem>>, vector<1x128x128xbf16>
    %214 = vector.shape_cast %213 : vector<1x128x128xbf16> to vector<128x128xbf16>
    %cst_94 = arith.constant dense<0.000000e+00> : vector<16x128xf32>
    %215 = tpu.matmul %212, %214, %cst_94 {dimension_numbers = #tpu.dot_dimension_numbers<[1], [0], [0], [1], [0, 0, 1, 1], [], []>} : vector<16x128xbf16>, vector<128x128xbf16>, vector<16x128xf32> -> vector<16x128xf32>
    %c1_95 = arith.constant 1 : index
    %c0_96 = arith.constant 0 : index
    %c0_97 = arith.constant 0 : index
    %216 = vector.load %arg8[%c1_95, %c0_96, %c0_97] : memref<2x1x128xf32, #tpu.memory_space<vmem>>, vector<1x1x128xf32>
    %217 = vector.shape_cast %216 : vector<1x1x128xf32> to vector<1x128xf32>
    %218 = vector.broadcast %217 : vector<1x128xf32> to vector<16x128xf32>
    %219 = arith.addf %215, %218 : vector<16x128xf32>
    %220 = arith.addf %164, %219 : vector<16x128xf32>
    %c1_98 = arith.constant 1 : index
    %c0_99 = arith.constant 0 : index
    %c0_100 = arith.constant 0 : index
    %221 = vector.load %arg9[%c1_98, %c0_99, %c0_100] : memref<2x1x128xf32, #tpu.memory_space<vmem>>, vector<1x1x128xf32>
    %222 = vector.shape_cast %221 : vector<1x1x128xf32> to vector<1x128xf32>
    %c1_101 = arith.constant 1 : index
    %c0_102 = arith.constant 0 : index
    %c0_103 = arith.constant 0 : index
    %223 = vector.load %arg10[%c1_101, %c0_102, %c0_103] : memref<2x1x128xf32, #tpu.memory_space<vmem>>, vector<1x1x128xf32>
    %224 = vector.shape_cast %223 : vector<1x1x128xf32> to vector<1x128xf32>
    %cst_104 = arith.constant dense<0.000000e+00> : vector<16xf32>
    %225 = vector.multi_reduction <add>, %220, %cst_104 [1] : vector<16x128xf32> to vector<16xf32>
    %226 = vector.shape_cast %225 : vector<16xf32> to vector<16x1xf32>
    %cst_105 = arith.constant 1.280000e+02 : f32
    %227 = vector.broadcast %cst_105 : f32 to vector<16x1xf32>
    %228 = arith.divf %226, %227 : vector<16x1xf32>
    %229 = vector.broadcast %228 : vector<16x1xf32> to vector<16x128xf32>
    %230 = arith.subf %220, %229 : vector<16x128xf32>
    %231 = arith.mulf %230, %230 : vector<16x128xf32>
    %cst_106 = arith.constant dense<0.000000e+00> : vector<16xf32>
    %232 = vector.multi_reduction <add>, %231, %cst_106 [1] : vector<16x128xf32> to vector<16xf32>
    %233 = vector.shape_cast %232 : vector<16xf32> to vector<16x1xf32>
    %cst_107 = arith.constant 1.280000e+02 : f32
    %234 = vector.broadcast %cst_107 : f32 to vector<16x1xf32>
    %235 = arith.divf %233, %234 : vector<16x1xf32>
    %236 = vector.broadcast %228 : vector<16x1xf32> to vector<16x128xf32>
    %237 = arith.subf %220, %236 : vector<16x128xf32>
    %cst_108 = arith.constant 9.99999996E-13 : f32
    %238 = vector.broadcast %cst_108 : f32 to vector<16x1xf32>
    %239 = arith.addf %235, %238 : vector<16x1xf32>
    %240 = math.rsqrt %239 : vector<16x1xf32>
    %241 = vector.broadcast %240 : vector<16x1xf32> to vector<16x128xf32>
    %242 = arith.mulf %237, %241 : vector<16x128xf32>
    %243 = vector.broadcast %222 : vector<1x128xf32> to vector<16x128xf32>
    %244 = arith.mulf %242, %243 : vector<16x128xf32>
    %245 = vector.broadcast %224 : vector<1x128xf32> to vector<16x128xf32>
    %246 = arith.addf %244, %245 : vector<16x128xf32>
    %247 = arith.truncf %246 : vector<16x128xf32> to vector<16x128xbf16>
    %c1_109 = arith.constant 1 : index
    %c0_110 = arith.constant 0 : index
    %c0_111 = arith.constant 0 : index
    %248 = vector.load %arg11[%c1_109, %c0_110, %c0_111] : memref<2x128x256xbf16, #tpu.memory_space<vmem>>, vector<1x128x256xbf16>
    %249 = vector.shape_cast %248 : vector<1x128x256xbf16> to vector<128x256xbf16>
    %cst_112 = arith.constant dense<0.000000e+00> : vector<16x256xf32>
    %250 = tpu.matmul %247, %249, %cst_112 {dimension_numbers = #tpu.dot_dimension_numbers<[1], [0], [0], [1], [0, 0, 1, 1], [], []>} : vector<16x128xbf16>, vector<128x256xbf16>, vector<16x256xf32> -> vector<16x256xf32>
    %c1_113 = arith.constant 1 : index
    %c0_114 = arith.constant 0 : index
    %c0_115 = arith.constant 0 : index
    %251 = vector.load %arg12[%c1_113, %c0_114, %c0_115] : memref<2x1x256xf32, #tpu.memory_space<vmem>>, vector<1x1x256xf32>
    %252 = vector.shape_cast %251 : vector<1x1x256xf32> to vector<1x256xf32>
    %253 = vector.broadcast %252 : vector<1x256xf32> to vector<16x256xf32>
    %254 = arith.addf %250, %253 : vector<16x256xf32>
    %cst_116 = arith.constant 5.000000e-01 : f32
    %255 = vector.broadcast %cst_116 : f32 to vector<16x256xf32>
    %256 = arith.mulf %255, %254 : vector<16x256xf32>
    %cst_117 = arith.constant 4.471500e-02 : f32
    %257 = vector.broadcast %cst_117 : f32 to vector<16x256xf32>
    %258 = arith.mulf %257, %254 : vector<16x256xf32>
    %259 = arith.mulf %258, %254 : vector<16x256xf32>
    %260 = arith.mulf %259, %254 : vector<16x256xf32>
    %261 = arith.addf %254, %260 : vector<16x256xf32>
    %cst_118 = arith.constant 0.797884583 : f32
    %262 = vector.broadcast %cst_118 : f32 to vector<16x256xf32>
    %263 = arith.mulf %262, %261 : vector<16x256xf32>
    %264 = math.tanh %263 : vector<16x256xf32>
    %cst_119 = arith.constant 1.000000e+00 : f32
    %265 = vector.broadcast %cst_119 : f32 to vector<16x256xf32>
    %266 = arith.addf %265, %264 : vector<16x256xf32>
    %267 = arith.mulf %256, %266 : vector<16x256xf32>
    %268 = arith.truncf %267 : vector<16x256xf32> to vector<16x256xbf16>
    %c1_120 = arith.constant 1 : index
    %c0_121 = arith.constant 0 : index
    %c0_122 = arith.constant 0 : index
    %269 = vector.load %arg13[%c1_120, %c0_121, %c0_122] : memref<2x256x128xbf16, #tpu.memory_space<vmem>>, vector<1x256x128xbf16>
    %270 = vector.shape_cast %269 : vector<1x256x128xbf16> to vector<256x128xbf16>
    %cst_123 = arith.constant dense<0.000000e+00> : vector<16x128xf32>
    %271 = tpu.matmul %268, %270, %cst_123 {dimension_numbers = #tpu.dot_dimension_numbers<[1], [0], [0], [1], [0, 0, 1, 1], [], []>} : vector<16x256xbf16>, vector<256x128xbf16>, vector<16x128xf32> -> vector<16x128xf32>
    %c1_124 = arith.constant 1 : index
    %c0_125 = arith.constant 0 : index
    %c0_126 = arith.constant 0 : index
    %272 = vector.load %arg14[%c1_124, %c0_125, %c0_126] : memref<2x1x128xf32, #tpu.memory_space<vmem>>, vector<1x1x128xf32>
    %273 = vector.shape_cast %272 : vector<1x1x128xf32> to vector<1x128xf32>
    %274 = vector.broadcast %273 : vector<1x128xf32> to vector<16x128xf32>
    %275 = arith.addf %271, %274 : vector<16x128xf32>
    %276 = arith.addf %246, %275 : vector<16x128xf32>
    %c1_127 = arith.constant 1 : index
    %c0_128 = arith.constant 0 : index
    %c0_129 = arith.constant 0 : index
    %277 = vector.load %arg15[%c1_127, %c0_128, %c0_129] : memref<2x1x128xf32, #tpu.memory_space<vmem>>, vector<1x1x128xf32>
    %278 = vector.shape_cast %277 : vector<1x1x128xf32> to vector<1x128xf32>
    %c1_130 = arith.constant 1 : index
    %c0_131 = arith.constant 0 : index
    %c0_132 = arith.constant 0 : index
    %279 = vector.load %arg16[%c1_130, %c0_131, %c0_132] : memref<2x1x128xf32, #tpu.memory_space<vmem>>, vector<1x1x128xf32>
    %280 = vector.shape_cast %279 : vector<1x1x128xf32> to vector<1x128xf32>
    %cst_133 = arith.constant dense<0.000000e+00> : vector<16xf32>
    %281 = vector.multi_reduction <add>, %276, %cst_133 [1] : vector<16x128xf32> to vector<16xf32>
    %282 = vector.shape_cast %281 : vector<16xf32> to vector<16x1xf32>
    %cst_134 = arith.constant 1.280000e+02 : f32
    %283 = vector.broadcast %cst_134 : f32 to vector<16x1xf32>
    %284 = arith.divf %282, %283 : vector<16x1xf32>
    %285 = vector.broadcast %284 : vector<16x1xf32> to vector<16x128xf32>
    %286 = arith.subf %276, %285 : vector<16x128xf32>
    %287 = arith.mulf %286, %286 : vector<16x128xf32>
    %cst_135 = arith.constant dense<0.000000e+00> : vector<16xf32>
    %288 = vector.multi_reduction <add>, %287, %cst_135 [1] : vector<16x128xf32> to vector<16xf32>
    %289 = vector.shape_cast %288 : vector<16xf32> to vector<16x1xf32>
    %cst_136 = arith.constant 1.280000e+02 : f32
    %290 = vector.broadcast %cst_136 : f32 to vector<16x1xf32>
    %291 = arith.divf %289, %290 : vector<16x1xf32>
    %292 = vector.broadcast %284 : vector<16x1xf32> to vector<16x128xf32>
    %293 = arith.subf %276, %292 : vector<16x128xf32>
    %cst_137 = arith.constant 9.99999996E-13 : f32
    %294 = vector.broadcast %cst_137 : f32 to vector<16x1xf32>
    %295 = arith.addf %291, %294 : vector<16x1xf32>
    %296 = math.rsqrt %295 : vector<16x1xf32>
    %297 = vector.broadcast %296 : vector<16x1xf32> to vector<16x128xf32>
    %298 = arith.mulf %293, %297 : vector<16x128xf32>
    %299 = vector.broadcast %278 : vector<1x128xf32> to vector<16x128xf32>
    %300 = arith.mulf %298, %299 : vector<16x128xf32>
    %301 = vector.broadcast %280 : vector<1x128xf32> to vector<16x128xf32>
    %302 = arith.addf %300, %301 : vector<16x128xf32>
    %303 = vector.extract_strided_slice %302 {offsets = [0, 0], sizes = [1, 128], strides = [1, 1]} : vector<16x128xf32> to vector<1x128xf32>
    %304 = vector.extract_strided_slice %302 {offsets = [8, 0], sizes = [1, 128], strides = [1, 1]} : vector<16x128xf32> to vector<1x128xf32>
    %305 = tpu.concatenate %303, %304 in 0 : vector<1x128xf32>, vector<1x128xf32> -> vector<2x128xf32>
    %306 = arith.truncf %305 : vector<2x128xf32> to vector<2x128xbf16>
    %c0_138 = arith.constant 0 : index
    %c0_139 = arith.constant 0 : index
    %307 = vector.load %arg17[%c0_138, %c0_139] : memref<128x128xbf16, #tpu.memory_space<vmem>>, vector<128x128xbf16>
    %cst_140 = arith.constant dense<0.000000e+00> : vector<2x128xf32>
    %308 = tpu.matmul %306, %307, %cst_140 {dimension_numbers = #tpu.dot_dimension_numbers<[1], [0], [0], [1], [0, 0, 1, 1], [], []>} : vector<2x128xbf16>, vector<128x128xbf16>, vector<2x128xf32> -> vector<2x128xf32>
    %c0_141 = arith.constant 0 : index
    %c0_142 = arith.constant 0 : index
    %309 = vector.load %arg18[%c0_141, %c0_142] : memref<1x128xf32, #tpu.memory_space<vmem>>, vector<1x128xf32>
    %310 = vector.broadcast %309 : vector<1x128xf32> to vector<2x128xf32>
    %311 = arith.addf %308, %310 : vector<2x128xf32>
    %312 = tpu.transpose %311, [1, 0] : vector<2x128xf32> -> vector<128x2xf32>
    %313 = vector.extract_strided_slice %311 {offsets = [0, 0], sizes = [1, 128], strides = [1, 1]} : vector<2x128xf32> to vector<1x128xf32>
    %314 = vector.extract_strided_slice %312 {offsets = [0, 0], sizes = [128, 1], strides = [1, 1]} : vector<128x2xf32> to vector<128x1xf32>
    %315 = vector.broadcast %313 : vector<1x128xf32> to vector<128x128xf32>
    %316 = vector.broadcast %314 : vector<128x1xf32> to vector<128x128xf32>
    %317 = arith.cmpf oge, %315, %316 : vector<128x128xf32>
    %318 = arith.extui %317 : vector<128x128xi1> to vector<128x128xi32>
    %319 = arith.sitofp %318 : vector<128x128xi32> to vector<128x128xf32>
    %cst_143 = arith.constant dense<0.000000e+00> : vector<128xf32>
    %320 = vector.multi_reduction <add>, %319, %cst_143 [1] : vector<128x128xf32> to vector<128xf32>
    %321 = vector.shape_cast %320 : vector<128xf32> to vector<128x1xf32>
    %322 = vector.broadcast %313 : vector<1x128xf32> to vector<128x128xf32>
    %323 = arith.mulf %319, %322 : vector<128x128xf32>
    %cst_144 = arith.constant dense<0.000000e+00> : vector<128xf32>
    %324 = vector.multi_reduction <add>, %323, %cst_144 [1] : vector<128x128xf32> to vector<128xf32>
    %325 = vector.shape_cast %324 : vector<128xf32> to vector<128x1xf32>
    %326 = arith.mulf %321, %314 : vector<128x1xf32>
    %cst_145 = arith.constant 1.000000e+00 : f32
    %327 = vector.broadcast %cst_145 : f32 to vector<128x1xf32>
    %328 = arith.addf %327, %326 : vector<128x1xf32>
    %329 = arith.cmpf ogt, %328, %325 : vector<128x1xf32>
    %cst_146 = arith.constant 0.000000e+00 : f32
    %330 = vector.broadcast %cst_146 : f32 to vector<128x1xf32>
    %331 = arith.select %329, %321, %330 : vector<128x1xi1>, vector<128x1xf32>
    %cst_147 = arith.constant dense<0xFF800000> : vector<1xf32>
    %332 = vector.multi_reduction <maximumf>, %331, %cst_147 [0] : vector<128x1xf32> to vector<1xf32>
    %333 = vector.shape_cast %332 : vector<1xf32> to vector<1x1xf32>
    %334 = vector.broadcast %333 : vector<1x1xf32> to vector<128x1xf32>
    %335 = arith.cmpf oeq, %321, %334 : vector<128x1xf32>
    %336 = arith.andi %329, %335 : vector<128x1xi1>
    %cst_148 = arith.constant -1.000000e+30 : f32
    %337 = vector.broadcast %cst_148 : f32 to vector<128x1xf32>
    %338 = arith.select %336, %325, %337 : vector<128x1xi1>, vector<128x1xf32>
    %cst_149 = arith.constant dense<0xFF800000> : vector<1xf32>
    %339 = vector.multi_reduction <maximumf>, %338, %cst_149 [0] : vector<128x1xf32> to vector<1xf32>
    %340 = vector.shape_cast %339 : vector<1xf32> to vector<1x1xf32>
    %cst_150 = arith.constant 1.000000e+00 : f32
    %341 = vector.broadcast %cst_150 : f32 to vector<1x1xf32>
    %342 = arith.subf %340, %341 : vector<1x1xf32>
    %343 = arith.divf %342, %333 : vector<1x1xf32>
    %344 = vector.broadcast %343 : vector<1x1xf32> to vector<1x128xf32>
    %345 = arith.subf %313, %344 : vector<1x128xf32>
    %cst_151 = arith.constant 0.000000e+00 : f32
    %346 = vector.broadcast %cst_151 : f32 to vector<1x128xf32>
    %347 = arith.maximumf %345, %346 : vector<1x128xf32>
    %348 = vector.extract_strided_slice %311 {offsets = [1, 0], sizes = [1, 128], strides = [1, 1]} : vector<2x128xf32> to vector<1x128xf32>
    %349 = vector.extract_strided_slice %312 {offsets = [0, 1], sizes = [128, 1], strides = [1, 1]} : vector<128x2xf32> to vector<128x1xf32>
    %350 = vector.broadcast %348 : vector<1x128xf32> to vector<128x128xf32>
    %351 = vector.broadcast %349 : vector<128x1xf32> to vector<128x128xf32>
    %352 = arith.cmpf oge, %350, %351 : vector<128x128xf32>
    %353 = arith.extui %352 : vector<128x128xi1> to vector<128x128xi32>
    %354 = arith.sitofp %353 : vector<128x128xi32> to vector<128x128xf32>
    %cst_152 = arith.constant dense<0.000000e+00> : vector<128xf32>
    %355 = vector.multi_reduction <add>, %354, %cst_152 [1] : vector<128x128xf32> to vector<128xf32>
    %356 = vector.shape_cast %355 : vector<128xf32> to vector<128x1xf32>
    %357 = vector.broadcast %348 : vector<1x128xf32> to vector<128x128xf32>
    %358 = arith.mulf %354, %357 : vector<128x128xf32>
    %cst_153 = arith.constant dense<0.000000e+00> : vector<128xf32>
    %359 = vector.multi_reduction <add>, %358, %cst_153 [1] : vector<128x128xf32> to vector<128xf32>
    %360 = vector.shape_cast %359 : vector<128xf32> to vector<128x1xf32>
    %361 = arith.mulf %356, %349 : vector<128x1xf32>
    %cst_154 = arith.constant 1.000000e+00 : f32
    %362 = vector.broadcast %cst_154 : f32 to vector<128x1xf32>
    %363 = arith.addf %362, %361 : vector<128x1xf32>
    %364 = arith.cmpf ogt, %363, %360 : vector<128x1xf32>
    %cst_155 = arith.constant 0.000000e+00 : f32
    %365 = vector.broadcast %cst_155 : f32 to vector<128x1xf32>
    %366 = arith.select %364, %356, %365 : vector<128x1xi1>, vector<128x1xf32>
    %cst_156 = arith.constant dense<0xFF800000> : vector<1xf32>
    %367 = vector.multi_reduction <maximumf>, %366, %cst_156 [0] : vector<128x1xf32> to vector<1xf32>
    %368 = vector.shape_cast %367 : vector<1xf32> to vector<1x1xf32>
    %369 = vector.broadcast %368 : vector<1x1xf32> to vector<128x1xf32>
    %370 = arith.cmpf oeq, %356, %369 : vector<128x1xf32>
    %371 = arith.andi %364, %370 : vector<128x1xi1>
    %cst_157 = arith.constant -1.000000e+30 : f32
    %372 = vector.broadcast %cst_157 : f32 to vector<128x1xf32>
    %373 = arith.select %371, %360, %372 : vector<128x1xi1>, vector<128x1xf32>
    %cst_158 = arith.constant dense<0xFF800000> : vector<1xf32>
    %374 = vector.multi_reduction <maximumf>, %373, %cst_158 [0] : vector<128x1xf32> to vector<1xf32>
    %375 = vector.shape_cast %374 : vector<1xf32> to vector<1x1xf32>
    %cst_159 = arith.constant 1.000000e+00 : f32
    %376 = vector.broadcast %cst_159 : f32 to vector<1x1xf32>
    %377 = arith.subf %375, %376 : vector<1x1xf32>
    %378 = arith.divf %377, %368 : vector<1x1xf32>
    %379 = vector.broadcast %378 : vector<1x1xf32> to vector<1x128xf32>
    %380 = arith.subf %348, %379 : vector<1x128xf32>
    %cst_160 = arith.constant 0.000000e+00 : f32
    %381 = vector.broadcast %cst_160 : f32 to vector<1x128xf32>
    %382 = arith.maximumf %380, %381 : vector<1x128xf32>
    %383 = tpu.concatenate %347, %382 in 0 : vector<1x128xf32>, vector<1x128xf32> -> vector<2x128xf32>
    %c0_161 = arith.constant 0 : index
    %c0_162 = arith.constant 0 : index
    %384 = vector.load %arg19[%c0_161, %c0_162] : memref<2x128xf32, #tpu.memory_space<vmem>>, vector<2x128xf32>
    tpu.vector_store %arg19[%c0_161, %c0_162], %383 {strides = array<i32>} : memref<2x128xf32, #tpu.memory_space<vmem>>, vector<2x128xf32>,
    return
  }
  func.func @transform_0(%arg0: i32) -> (i32, i32) {
    %c0_i32 = arith.constant 0 : i32
    %c0_i32_0 = arith.constant 0 : i32
    %c0_i32_1 = arith.constant 0 : i32
    return %c0_i32, %c0_i32_0 : i32, i32
  }
  func.func @transform_1(%arg0: i32) -> (i32, i32) {
    %c0_i32 = arith.constant 0 : i32
    %c0_i32_0 = arith.constant 0 : i32
    %c0_i32_1 = arith.constant 0 : i32
    return %c0_i32, %c0_i32_0 : i32, i32
  }
  func.func @transform_2(%arg0: i32) -> (i32, i32) {
    %c0_i32 = arith.constant 0 : i32
    %c0_i32_0 = arith.constant 0 : i32
    %c0_i32_1 = arith.constant 0 : i32
    return %c0_i32, %c0_i32_0 : i32, i32
  }
  func.func @transform_3(%arg0: i32) -> (i32, i32) {
    %c0_i32 = arith.constant 0 : i32
    %c0_i32_0 = arith.constant 0 : i32
    %c0_i32_1 = arith.constant 0 : i32
    return %c0_i32, %c0_i32_0 : i32, i32
  }
  func.func @transform_4(%arg0: i32) -> (i32, i32, i32) {
    %c0_i32 = arith.constant 0 : i32
    %c0_i32_0 = arith.constant 0 : i32
    %c0_i32_1 = arith.constant 0 : i32
    %c0_i32_2 = arith.constant 0 : i32
    return %c0_i32, %c0_i32_0, %c0_i32_1 : i32, i32, i32
  }
  func.func @transform_5(%arg0: i32) -> (i32, i32, i32) {
    %c0_i32 = arith.constant 0 : i32
    %c0_i32_0 = arith.constant 0 : i32
    %c0_i32_1 = arith.constant 0 : i32
    %c0_i32_2 = arith.constant 0 : i32
    return %c0_i32, %c0_i32_0, %c0_i32_1 : i32, i32, i32
  }
  func.func @transform_6(%arg0: i32) -> (i32, i32, i32) {
    %c0_i32 = arith.constant 0 : i32
    %c0_i32_0 = arith.constant 0 : i32
    %c0_i32_1 = arith.constant 0 : i32
    %c0_i32_2 = arith.constant 0 : i32
    return %c0_i32, %c0_i32_0, %c0_i32_1 : i32, i32, i32
  }
  func.func @transform_7(%arg0: i32) -> (i32, i32, i32) {
    %c0_i32 = arith.constant 0 : i32
    %c0_i32_0 = arith.constant 0 : i32
    %c0_i32_1 = arith.constant 0 : i32
    %c0_i32_2 = arith.constant 0 : i32
    return %c0_i32, %c0_i32_0, %c0_i32_1 : i32, i32, i32
  }
  func.func @transform_8(%arg0: i32) -> (i32, i32, i32) {
    %c0_i32 = arith.constant 0 : i32
    %c0_i32_0 = arith.constant 0 : i32
    %c0_i32_1 = arith.constant 0 : i32
    %c0_i32_2 = arith.constant 0 : i32
    return %c0_i32, %c0_i32_0, %c0_i32_1 : i32, i32, i32
  }
  func.func @transform_9(%arg0: i32) -> (i32, i32, i32) {
    %c0_i32 = arith.constant 0 : i32
    %c0_i32_0 = arith.constant 0 : i32
    %c0_i32_1 = arith.constant 0 : i32
    %c0_i32_2 = arith.constant 0 : i32
    return %c0_i32, %c0_i32_0, %c0_i32_1 : i32, i32, i32
  }
  func.func @transform_10(%arg0: i32) -> (i32, i32, i32) {
    %c0_i32 = arith.constant 0 : i32
    %c0_i32_0 = arith.constant 0 : i32
    %c0_i32_1 = arith.constant 0 : i32
    %c0_i32_2 = arith.constant 0 : i32
    return %c0_i32, %c0_i32_0, %c0_i32_1 : i32, i32, i32
  }
  func.func @transform_11(%arg0: i32) -> (i32, i32, i32) {
    %c0_i32 = arith.constant 0 : i32
    %c0_i32_0 = arith.constant 0 : i32
    %c0_i32_1 = arith.constant 0 : i32
    %c0_i32_2 = arith.constant 0 : i32
    return %c0_i32, %c0_i32_0, %c0_i32_1 : i32, i32, i32
  }
  func.func @transform_12(%arg0: i32) -> (i32, i32, i32) {
    %c0_i32 = arith.constant 0 : i32
    %c0_i32_0 = arith.constant 0 : i32
    %c0_i32_1 = arith.constant 0 : i32
    %c0_i32_2 = arith.constant 0 : i32
    return %c0_i32, %c0_i32_0, %c0_i32_1 : i32, i32, i32
  }
  func.func @transform_13(%arg0: i32) -> (i32, i32, i32) {
    %c0_i32 = arith.constant 0 : i32
    %c0_i32_0 = arith.constant 0 : i32
    %c0_i32_1 = arith.constant 0 : i32
    %c0_i32_2 = arith.constant 0 : i32
    return %c0_i32, %c0_i32_0, %c0_i32_1 : i32, i32, i32
  }
  func.func @transform_14(%arg0: i32) -> (i32, i32, i32) {
    %c0_i32 = arith.constant 0 : i32
    %c0_i32_0 = arith.constant 0 : i32
    %c0_i32_1 = arith.constant 0 : i32
    %c0_i32_2 = arith.constant 0 : i32
    return %c0_i32, %c0_i32_0, %c0_i32_1 : i32, i32, i32
  }
  func.func @transform_15(%arg0: i32) -> (i32, i32, i32) {
    %c0_i32 = arith.constant 0 : i32
    %c0_i32_0 = arith.constant 0 : i32
    %c0_i32_1 = arith.constant 0 : i32
    %c0_i32_2 = arith.constant 0 : i32
    return %c0_i32, %c0_i32_0, %c0_i32_1 : i32, i32, i32
  }
  func.func @transform_16(%arg0: i32) -> (i32, i32) {
    %c0_i32 = arith.constant 0 : i32
    %c0_i32_0 = arith.constant 0 : i32
    %c0_i32_1 = arith.constant 0 : i32
    return %c0_i32, %c0_i32_0 : i32, i32
  }
  func.func @transform_17(%arg0: i32) -> (i32, i32) {
    %c0_i32 = arith.constant 0 : i32
    %c0_i32_0 = arith.constant 0 : i32
    %c0_i32_1 = arith.constant 0 : i32
    return %c0_i32, %c0_i32_0 : i32, i32
  }
  func.func @transform_18(%arg0: i32) -> (i32, i32) {
    %c0_i32 = arith.constant 0 : i32
    %c0_i32_0 = arith.constant 0 : i32
    %c0_i32_1 = arith.constant 0 : i32
    return %c0_i32, %c0_i32_0 : i32, i32
  }
}

</mosaic_0001>

<llo_original>
// kernel: bert_for_disease_prediction.1
$region0: #{bert_for_disease_prediction.1}
  #allocation0 [shape = 'u32[]', space=smem, size = 0x4, offset = 0x4, fixed_abs, tag = 'smem constant byte address 0x4 - core index']
  #allocation1 [shape = 'u32[144,128]{1,0:T(1,128)}', space=vmem, size = 0x12000, scoped, tag = 'internal scratch']
  %s0 = inlined_call_operand.vmem [shape: f32[16,128], index: 0, kind: input, shape index: {}]
  %s1 = inlined_call_operand.vmem [shape: f32[16,16], index: 1, kind: input, shape index: {}]
  %s2 = inlined_call_operand.vmem [shape: f32[1,128], index: 2, kind: input, shape index: {}]
  %s3 = inlined_call_operand.vmem [shape: f32[1,128], index: 3, kind: input, shape index: {}]
  %s4 = inlined_call_operand.hbm [shape: bf16[2,128,384], index: 4, kind: input, shape index: {}]
  %s5 = inlined_call_operand.vmem [shape: f32[2,1,384], index: 5, kind: input, shape index: {}]
  %s6 = inlined_call_operand.vmem [shape: bf16[2,128,128], index: 6, kind: input, shape index: {}]
  %s7 = inlined_call_operand.vmem [shape: f32[2,1,128], index: 7, kind: input, shape index: {}]
  %s8 = inlined_call_operand.vmem [shape: f32[2,1,128], index: 8, kind: input, shape index: {}]
  %s9 = inlined_call_operand.vmem [shape: f32[2,1,128], index: 9, kind: input, shape index: {}]
  %s10 = inlined_call_operand.vmem [shape: bf16[2,128,256], index: 10, kind: input, shape index: {}]
  %s11 = inlined_call_operand.vmem [shape: f32[2,1,256], index: 11, kind: input, shape index: {}]
  %s12 = inlined_call_operand.hbm [shape: bf16[2,256,128], index: 12, kind: input, shape index: {}]
  %s13 = inlined_call_operand.vmem [shape: f32[2,1,128], index: 13, kind: input, shape index: {}]
  %s14 = inlined_call_operand.vmem [shape: f32[2,1,128], index: 14, kind: input, shape index: {}]
  %s15 = inlined_call_operand.vmem [shape: f32[2,1,128], index: 15, kind: input, shape index: {}]
  %s16 = inlined_call_operand.vmem [shape: bf16[128,128], index: 16, kind: input, shape index: {}]
  %s17 = inlined_call_operand.vmem [shape: f32[1,128], index: 17, kind: input, shape index: {}]
  %s18 = inlined_call_operand.vmem [shape: f32[2,128], index: 18, kind: output, shape index: {}]
  %s19 = sld [smem:[#allocation0]]
  $region90: #{bert_for_disease_prediction.1} parent=0
    _
  %s21 = ssub.s32 1, %s19
  %s22 = scalar_select 0, %s21, %s19
  $region1: #{bert_for_disease_prediction.1} parent=0
    #allocation2 [shape = 'u8[196608]{0}', space=vmem, size = 0x30000, scoped, tag = 'input window, operand 4, single buffered']
    #allocation3 [shape = 's32[1]{0}', space=sflag, size = 0x4, scoped, tag = 'scoped memory for bert_for_disease_prediction.1']
    #allocation4 [shape = 'u8[131072]{0}', space=vmem, size = 0x20000, scoped, tag = 'input window, operand 12, single buffered']
    #allocation5 [shape = 's32[1]{0}', space=sflag, size = 0x4, scoped, tag = 'scoped memory for bert_for_disease_prediction.1']
    %23 = vsyncpa [#allocation3], 0
    %24 = vsyncpa [#allocation5], 0
    // Predicated region
    $region2: #{bert_for_disease_prediction.1} parent=1 // pred_check
      _
    $region3: #{bert_for_disease_prediction.1} parent=1 // pred_check_branch
      %26 = sbr.rel (0) target = $region5
    $region4: #{bert_for_disease_prediction.1} parent=1 // pred_region
      _
    $region5: #{bert_for_disease_prediction.1} parent=1 // pred_fallthru
      _
    // Predicated region
    $region6: #{bert_for_disease_prediction.1} parent=1 // pred_check
      _
    $region7: #{bert_for_disease_prediction.1} parent=1 // pred_check_branch
      %28 = sbr.rel (0) target = $region9
    $region8: #{bert_for_disease_prediction.1} parent=1 // pred_region
      _
    $region9: #{bert_for_disease_prediction.1} parent=1 // pred_fallthru
      _
    // Predicated region
    $region10: #{bert_for_disease_prediction.1} parent=1 // pred_check
      _
    $region11: #{bert_for_disease_prediction.1} parent=1 // pred_check_branch
      %30 = sbr.rel (0) target = $region13
    $region12: #{bert_for_disease_prediction.1} parent=1 // pred_region
      _
    $region13: #{bert_for_disease_prediction.1} parent=1 // pred_fallthru
      _
    // Predicated region
    $region14: #{bert_for_disease_prediction.1} parent=1 // pred_check
      _
    $region15: #{bert_for_disease_prediction.1} parent=1 // pred_check_branch
      %32 = sbr.rel (0) target = $region17
    $region16: #{bert_for_disease_prediction.1} parent=1 // pred_region
      _
    $region17: #{bert_for_disease_prediction.1} parent=1 // pred_fallthru
      _
    // Predicated region
    $region18: #{bert_for_disease_prediction.1} parent=1 // pred_check
      _
    $region19: #{bert_for_disease_prediction.1} parent=1 // pred_check_branch
      %34 = sbr.rel (0) target = $region21
    $region20: #{bert_for_disease_prediction.1} parent=1 // pred_region
      %s36 = ssub.s32 6144, 6144
      %37 = vsyncadd [#allocation3], %s36
      %s38 = sshll.u32 [#allocation2], 4
      %s39 = int_to_ptr.vmem [resolvable:$true] %s38
      %44 = dma.hbm_to_vmem [thread:$0]  %s4, 6144, %s39, [#allocation3], 192, 192, 12
    $region21: #{bert_for_disease_prediction.1} parent=1 // pred_fallthru
      _
    // Predicated region
    $region22: #{bert_for_disease_prediction.1} parent=1 // pred_check
      _
    $region23: #{bert_for_disease_prediction.1} parent=1 // pred_check_branch
      %46 = sbr.rel (0) target = $region25
    $region24: #{bert_for_disease_prediction.1} parent=1 // pred_region
      _
    $region25: #{bert_for_disease_prediction.1} parent=1 // pred_fallthru
      _
    // Predicated region
    $region26: #{bert_for_disease_prediction.1} parent=1 // pred_check
      _
    $region27: #{bert_for_disease_prediction.1} parent=1 // pred_check_branch
      %48 = sbr.rel (0) target = $region29
    $region28: #{bert_for_disease_prediction.1} parent=1 // pred_region
      _
    $region29: #{bert_for_disease_prediction.1} parent=1 // pred_fallthru
      _
    // Predicated region
    $region30: #{bert_for_disease_prediction.1} parent=1 // pred_check
      _
    $region31: #{bert_for_disease_prediction.1} parent=1 // pred_check_branch
      %50 = sbr.rel (0) target = $region33
    $region32: #{bert_for_disease_prediction.1} parent=1 // pred_region
      _
    $region33: #{bert_for_disease_prediction.1} parent=1 // pred_fallthru
      _
    // Predicated region
    $region34: #{bert_for_disease_prediction.1} parent=1 // pred_check
      _
    $region35: #{bert_for_disease_prediction.1} parent=1 // pred_check_branch
      %52 = sbr.rel (0) target = $region37
    $region36: #{bert_for_disease_prediction.1} parent=1 // pred_region
      _
    $region37: #{bert_for_disease_prediction.1} parent=1 // pred_fallthru
      _
    // Predicated region
    $region38: #{bert_for_disease_prediction.1} parent=1 // pred_check
      _
    $region39: #{bert_for_disease_prediction.1} parent=1 // pred_check_branch
      %54 = sbr.rel (0) target = $region41
    $region40: #{bert_for_disease_prediction.1} parent=1 // pred_region
      _
    $region41: #{bert_for_disease_prediction.1} parent=1 // pred_fallthru
      _
    // Predicated region
    $region42: #{bert_for_disease_prediction.1} parent=1 // pred_check
      _
    $region43: #{bert_for_disease_prediction.1} parent=1 // pred_check_branch
      %56 = sbr.rel (0) target = $region45
    $region44: #{bert_for_disease_prediction.1} parent=1 // pred_region
      _
    $region45: #{bert_for_disease_prediction.1} parent=1 // pred_fallthru
      _
    // Predicated region
    $region46: #{bert_for_disease_prediction.1} parent=1 // pred_check
      _
    $region47: #{bert_for_disease_prediction.1} parent=1 // pred_check_branch
      %58 = sbr.rel (0) target = $region49
    $region48: #{bert_for_disease_prediction.1} parent=1 // pred_region
      _
    $region49: #{bert_for_disease_prediction.1} parent=1 // pred_fallthru
      _
    // Predicated region
    $region50: #{bert_for_disease_prediction.1} parent=1 // pred_check
      _
    $region51: #{bert_for_disease_prediction.1} parent=1 // pred_check_branch
      %60 = sbr.rel (0) target = $region53
    $region52: #{bert_for_disease_prediction.1} parent=1 // pred_region
      %s62 = ssub.s32 4096, 4096
      %63 = vsyncadd [#allocation5], %s62
      %s64 = sshll.u32 [#allocation4], 4
      %s65 = int_to_ptr.vmem [resolvable:$true] %s64
      %70 = dma.hbm_to_vmem [thread:$0]  %s12, 4096, %s65, [#allocation5], 64, 64, 4
    $region53: #{bert_for_disease_prediction.1} parent=1 // pred_fallthru
      _
    // Predicated region
    $region54: #{bert_for_disease_prediction.1} parent=1 // pred_check
      _
    $region55: #{bert_for_disease_prediction.1} parent=1 // pred_check_branch
      %72 = sbr.rel (0) target = $region57
    $region56: #{bert_for_disease_prediction.1} parent=1 // pred_region
      _
    $region57: #{bert_for_disease_prediction.1} parent=1 // pred_fallthru
      _
    // Predicated region
    $region58: #{bert_for_disease_prediction.1} parent=1 // pred_check
      _
    $region59: #{bert_for_disease_prediction.1} parent=1 // pred_check_branch
      %74 = sbr.rel (0) target = $region61
    $region60: #{bert_for_disease_prediction.1} parent=1 // pred_region
      _
    $region61: #{bert_for_disease_prediction.1} parent=1 // pred_fallthru
      _
    // Predicated region
    $region62: #{bert_for_disease_prediction.1} parent=1 // pred_check
      _
    $region63: #{bert_for_disease_prediction.1} parent=1 // pred_check_branch
      %76 = sbr.rel (0) target = $region65
    $region64: #{bert_for_disease_prediction.1} parent=1 // pred_region
      _
    $region65: #{bert_for_disease_prediction.1} parent=1 // pred_fallthru
      _
    // Predicated region
    $region66: #{bert_for_disease_prediction.1} parent=1 // pred_check
      _
    $region67: #{bert_for_disease_prediction.1} parent=1 // pred_check_branch
      %78 = sbr.rel (0) target = $region69
    $region68: #{bert_for_disease_prediction.1} parent=1 // pred_region
      _
    $region69: #{bert_for_disease_prediction.1} parent=1 // pred_fallthru
      _
    // Predicated region
    $region70: #{bert_for_disease_prediction.1} parent=1 // pred_check
      _
    $region71: #{bert_for_disease_prediction.1} parent=1 // pred_check_branch
      %80 = sbr.rel (0) target = $region73
    $region72: #{bert_for_disease_prediction.1} parent=1 // pred_region
      _
    $region73: #{bert_for_disease_prediction.1} parent=1 // pred_fallthru
      _
    // Predicated region
    $region74: #{bert_for_disease_prediction.1} parent=1 // pred_check
      _
    $region75: #{bert_for_disease_prediction.1} parent=1 // pred_check_branch
      %82 = sbr.rel (0) target = $region77
    $region76: #{bert_for_disease_prediction.1} parent=1 // pred_region
      %83 = dma.done [#allocation3], 6144
    $region77: #{bert_for_disease_prediction.1} parent=1 // pred_fallthru
      _
    // Predicated region
    $region78: #{bert_for_disease_prediction.1} parent=1 // pred_check
      _
    $region79: #{bert_for_disease_prediction.1} parent=1 // pred_check_branch
      %85 = sbr.rel (0) target = $region81
    $region80: #{bert_for_disease_prediction.1} parent=1 // pred_region
      %86 = dma.done [#allocation5], 4096
    $region81: #{bert_for_disease_prediction.1} parent=1 // pred_fallthru
      _
    %v88 = vld [vmem:[%s0] sm:$0xff]
    %v89 = vld [vmem:[%s0 + $0x8] sm:$0xff]
    %v90 = vld [vmem:[%s2] sm:$0x1]
    %v91 = vld [vmem:[%s3] sm:$0x1]
    %92 = vadd.xlane.f32.xlu0 %v88
    %v93 = vpop.xlane.xlu0 %92
    %94 = vadd.xlane.f32.xlu0 %v89
    %v95 = vpop.xlane.xlu0 %94
    %v96 = vrcp.pop 128.0
    %v97 = vmul.f32 %v93, %v96
    %v98 = vmul.f32 %v95, %v96
    %v99 = vsub.f32 %v88, %v97
    %v100 = vsub.f32 %v89, %v98
    %v101 = vmul.f32 %v99, %v99
    %v102 = vmul.f32 %v100, %v100
    %103 = vadd.xlane.f32.xlu0 %v101
    %v104 = vpop.xlane.xlu0 %103
    %105 = vadd.xlane.f32.xlu0 %v102
    %v106 = vpop.xlane.xlu0 %105
    %v107 = vmul.f32 %v104, %v96
    %v108 = vmul.f32 %v106, %v96
    %v109 = vadd.f32 %v107, 1e-12
    %v110 = vadd.f32 %v108, 1e-12
    %v111 = vrsqrt.pop %v109
    %v112 = vrsqrt.pop %v110
    %v113 = vmul.f32 %v99, %v111
    %v114 = vmul.f32 %v100, %v112
    %v116 = vlaneseq
    %v117 = vshrl.u32 %v116, 7
    %v118 = vsub.s32 0, %v117
    %v119 = vrot.slane %v90, %v118
    %v121 = vmul.f32 %v113, %v119
    %v122 = vmul.f32 %v114, %v119
    %v124 = vlaneseq
    %v125 = vshrl.u32 %v124, 7
    %v126 = vsub.s32 0, %v125
    %v127 = vrot.slane %v91, %v126
    %v129 = vadd.f32 %v121, %v127
    %v130 = vadd.f32 %v122, %v127
    %v131 = vld [vmem:[%s1] sm:$0xff]
    %v132 = vld [vmem:[%s1 + $0x8] sm:$0xff]
    %v133 = vpack.c.bf16 %v130, %v129
    %v134 = vld [vmem:[#allocation2] sm:$0xff]
    %v135 = vld [vmem:[#allocation2 + $0x8] sm:$0xf]
    %v136 = vld [vmem:[#allocation2 + $0xc] sm:$0xff]
    %v137 = vld [vmem:[#allocation2 + $0x14] sm:$0xf]
    %v138 = vld [vmem:[#allocation2 + $0x18] sm:$0xff]
    %v139 = vld [vmem:[#allocation2 + $0x20] sm:$0xf]
    %v140 = vld [vmem:[#allocation2 + $0x24] sm:$0xff]
    %v141 = vld [vmem:[#allocation2 + $0x2c] sm:$0xf]
    %v142 = vld [vmem:[#allocation2 + $0x30] sm:$0xff]
    %v143 = vld [vmem:[#allocation2 + $0x38] sm:$0xf]
    %v144 = vld [vmem:[#allocation2 + $0x3c] sm:$0xff]
    %v145 = vld [vmem:[#allocation2 + $0x44] sm:$0xf]
    %v146 = vld [vmem:[#allocation2 + $0x48] sm:$0xff]
    %v147 = vld [vmem:[#allocation2 + $0x50] sm:$0xf]
    %v148 = vld [vmem:[#allocation2 + $0x54] sm:$0xff]
    %v149 = vld [vmem:[#allocation2 + $0x5c] sm:$0xf]
    %v150 = vld [vmem:[#allocation2 + $0x60] sm:$0xff]
    %v151 = vld [vmem:[#allocation2 + $0x68] sm:$0xf]
    %v152 = vld [vmem:[#allocation2 + $0x6c] sm:$0xff]
    %v153 = vld [vmem:[#allocation2 + $0x74] sm:$0xf]
    %v154 = vld [vmem:[#allocation2 + $0x78] sm:$0xff]
    %v155 = vld [vmem:[#allocation2 + $0x80] sm:$0xf]
    %v156 = vld [vmem:[#allocation2 + $0x84] sm:$0xff]
    %v157 = vld [vmem:[#allocation2 + $0x8c] sm:$0xf]
    %v158 = vld [vmem:[#allocation2 + $0x90] sm:$0xff]
    %v159 = vld [vmem:[#allocation2 + $0x98] sm:$0xf]
    %v160 = vld [vmem:[#allocation2 + $0x9c] sm:$0xff]
    %v161 = vld [vmem:[#allocation2 + $0xa4] sm:$0xf]
    %v162 = vld [vmem:[#allocation2 + $0xa8] sm:$0xff]
    %v163 = vld [vmem:[#allocation2 + $0xb0] sm:$0xf]
    %v164 = vld [vmem:[#allocation2 + $0xb4] sm:$0xff]
    %v165 = vld [vmem:[#allocation2 + $0xbc] sm:$0xf]
    %v166 = vld [vmem:[%s5] sm:$0x7]
    %v168 = vlaneseq
    %v169 = vshrl.u32 %v168, 7
    %v170 = vsub.s32 0, %v169
    %v171 = vrot.slane %v166, %v170
    %v172 = vlaneseq
    %v173 = vshrl.u32 %v172, 7
    %v174 = vsub.s32 1, %v173
    %v175 = vrot.slane %v166, %v174
    %v176 = vlaneseq
    %v177 = vshrl.u32 %v176, 7
    %v178 = vsub.s32 2, %v177
    %v179 = vrot.slane %v166, %v178
    %v215 = vunpack.c.l.b16 %v134
    %v216 = vunpack.c.h.b16 %v134
    %v217 = vunpack.c.l.b16 %v135
    %v218 = vunpack.c.l.b16 %v136
    %v219 = vunpack.c.h.b16 %v136
    %v220 = vunpack.c.l.b16 %v137
    %v221 = vunpack.c.l.b16 %v138
    %v222 = vunpack.c.h.b16 %v138
    %v223 = vunpack.c.l.b16 %v139
    %v224 = vunpack.c.l.b16 %v140
    %v225 = vunpack.c.h.b16 %v140
    %v226 = vunpack.c.l.b16 %v141
    %v227 = vunpack.c.l.b16 %v142
    %v228 = vunpack.c.h.b16 %v142
    %v229 = vunpack.c.l.b16 %v143
    %v230 = vunpack.c.l.b16 %v144
    %v231 = vunpack.c.h.b16 %v144
    %v232 = vunpack.c.l.b16 %v145
    %v233 = vunpack.c.l.b16 %v146
    %v234 = vunpack.c.h.b16 %v146
    %v235 = vunpack.c.l.b16 %v147
    %v236 = vunpack.c.l.b16 %v148
    %v237 = vunpack.c.h.b16 %v148
    %v238 = vunpack.c.l.b16 %v149
    %v239 = vunpack.c.l.b16 %v150
    %v240 = vunpack.c.h.b16 %v150
    %v241 = vunpack.c.l.b16 %v151
    %v242 = vunpack.c.l.b16 %v152
    %v243 = vunpack.c.h.b16 %v152
    %v244 = vunpack.c.l.b16 %v153
    %v245 = vunpack.c.l.b16 %v154
    %v246 = vunpack.c.h.b16 %v154
    %v247 = vunpack.c.l.b16 %v155
    %v248 = vunpack.c.l.b16 %v156
    %v249 = vunpack.c.h.b16 %v156
    %v250 = vunpack.c.l.b16 %v157
    %v251 = vunpack.c.l.b16 %v158
    %v252 = vunpack.c.h.b16 %v158
    %v253 = vunpack.c.l.b16 %v159
    %v254 = vunpack.c.l.b16 %v160
    %v255 = vunpack.c.h.b16 %v160
    %v256 = vunpack.c.l.b16 %v161
    %v257 = vunpack.c.l.b16 %v162
    %v258 = vunpack.c.h.b16 %v162
    %v259 = vunpack.c.l.b16 %v163
    %v260 = vunpack.c.l.b16 %v164
    %v261 = vunpack.c.h.b16 %v164
    %v262 = vunpack.c.l.b16 %v165
    %v263 = vpack.c.b16 %v218, %v215
    %v264 = vpack.c.b16 %v219, %v216
    %v265 = vpack.c.b16 %v220, %v217
    %v266 = vpack.c.b16 %v224, %v221
    %v267 = vpack.c.b16 %v225, %v222
    %v268 = vpack.c.b16 %v226, %v223
    %v269 = vpack.c.b16 %v230, %v227
    %v270 = vpack.c.b16 %v231, %v228
    %v271 = vpack.c.b16 %v232, %v229
    %v272 = vpack.c.b16 %v236, %v233
    %v273 = vpack.c.b16 %v237, %v234
    %v274 = vpack.c.b16 %v238, %v235
    %v275 = vpack.c.b16 %v242, %v239
    %v276 = vpack.c.b16 %v243, %v240
    %v277 = vpack.c.b16 %v244, %v241
    %v278 = vpack.c.b16 %v248, %v245
    %v279 = vpack.c.b16 %v249, %v246
    %v280 = vpack.c.b16 %v250, %v247
    %v281 = vpack.c.b16 %v254, %v251
    %v282 = vpack.c.b16 %v255, %v252
    %v283 = vpack.c.b16 %v256, %v253
    %v284 = vpack.c.b16 %v260, %v257
    %v285 = vpack.c.b16 %v261, %v258
    %v286 = vpack.c.b16 %v262, %v259
    %311 = vmatprep.subr.bf16.mxu0 %v264
    %312 = vmatpush1.bf16.msra.mxu0 %v263
    %313 = vmatprep.subr.bf16.mxu0 %v267
    %314 = vmatpush1.bf16.msra.mxu0 %v266
    %315 = vmatprep.subr.bf16.mxu0 %v270
    %316 = vmatpush1.bf16.msra.mxu0 %v269
    %317 = vmatprep.subr.bf16.mxu0 %v273
    %318 = vmatpush1.bf16.msra.mxu0 %v272
    %319 = vmatprep.subr.bf16.mxu0 %v276
    %320 = vmatpush1.bf16.msra.mxu0 %v275
    %321 = vmatprep.subr.bf16.mxu0 %v279
    %322 = vmatpush1.bf16.msra.mxu0 %v278
    %323 = vmatprep.subr.bf16.mxu0 %v282
    %324 = vmatpush1.bf16.msra.mxu0 %v281
    %325 = vmatprep.subr.bf16.mxu0 %v285
    %326 = vmatpush1.bf16.msra.mxu0 %v284
    %327 = vmatprep.subr.bf16.mxu0 0
    %328 = vmatpush1.bf16.msra.mxu0 0
    %329 = vmatprep.subr.bf16.mxu0 0
    %330 = vmatpush1.bf16.msra.mxu0 0
    %331 = vmatprep.subr.bf16.mxu0 0
    %332 = vmatpush1.bf16.msra.mxu0 0
    %333 = vmatprep.subr.bf16.mxu0 0
    %334 = vmatpush1.bf16.msra.mxu0 0
    %335 = vmatprep.subr.bf16.mxu0 0
    %336 = vmatpush1.bf16.msra.mxu0 0
    %337 = vmatprep.subr.bf16.mxu0 0
    %338 = vmatpush1.bf16.msra.mxu0 0
    %339 = vmatprep.subr.bf16.mxu0 0
    %340 = vmatpush1.bf16.msra.mxu0 0
    %341 = vmatprep.subr.bf16.mxu0 0
    %342 = vmatpush1.bf16.msra.mxu0 0
    %343 = vmatprep.mubr.bf16.mxu0 0
    %344 = vmatmul.mubr.bf16.gmra.mrb[0].mxu0 %v133
    %v345 = vpop.f32.mrb[0].mxu0
    %v346 = vadd.f32 %v171, %v345
    %v347 = vpop.f32.mrb[0].mxu0
    %v348 = vadd.f32 %v175, %v347
    %v349 = vpop.f32.mrb[0].mxu0
    %v350 = vadd.f32 %v171, %v349
    %v351 = vpop.f32.mrb[0].mxu0
    %v352 = vadd.f32 %v175, %v351
    %353 = vdwg.mxu0
    %354 = vmatprep.subr.bf16.mxu0 0
    %355 = vmatpush1.bf16.msra.mxu0 %v265
    %356 = vmatprep.subr.bf16.mxu0 0
    %357 = vmatpush1.bf16.msra.mxu0 %v268
    %358 = vmatprep.subr.bf16.mxu0 0
    %359 = vmatpush1.bf16.msra.mxu0 %v271
    %360 = vmatprep.subr.bf16.mxu0 0
    %361 = vmatpush1.bf16.msra.mxu0 %v274
    %362 = vmatprep.subr.bf16.mxu0 0
    %363 = vmatpush1.bf16.msra.mxu0 %v277
    %364 = vmatprep.subr.bf16.mxu0 0
    %365 = vmatpush1.bf16.msra.mxu0 %v280
    %366 = vmatprep.subr.bf16.mxu0 0
    %367 = vmatpush1.bf16.msra.mxu0 %v283
    %368 = vmatprep.subr.bf16.mxu0 0
    %369 = vmatpush1.bf16.msra.mxu0 %v286
    %370 = vmatprep.subr.bf16.mxu0 0
    %371 = vmatpush1.bf16.msra.mxu0 0
    %372 = vmatprep.subr.bf16.mxu0 0
    %373 = vmatpush1.bf16.msra.mxu0 0
    %374 = vmatprep.subr.bf16.mxu0 0
    %375 = vmatpush1.bf16.msra.mxu0 0
    %376 = vmatprep.subr.bf16.mxu0 0
    %377 = vmatpush1.bf16.msra.mxu0 0
    %378 = vmatprep.subr.bf16.mxu0 0
    %379 = vmatpush1.bf16.msra.mxu0 0
    %380 = vmatprep.subr.bf16.mxu0 0
    %381 = vmatpush1.bf16.msra.mxu0 0
    %382 = vmatprep.subr.bf16.mxu0 0
    %383 = vmatpush1.bf16.msra.mxu0 0
    %384 = vmatprep.subr.bf16.mxu0 0
    %385 = vmatpush1.bf16.msra.mxu0 0
    %386 = vmatprep.mubr.bf16.mxu0 0
    %387 = vmatmul.mubr.bf16.gmra.mrb[0].mxu0 %v133
    %v388 = vpop.f32.mrb[0].mxu0
    %v389 = vadd.f32 %v179, %v388
    %v390 = vpop.f32.mrb[0].mxu0
    %v391 = vpop.f32.mrb[0].mxu0
    %v392 = vadd.f32 %v179, %v391
    %v393 = vpop.f32.mrb[0].mxu0
    %394 = vdwg.mxu0
    %v395 = vpack.c.bf16 %v350, %v346
    %v396 = vpack.c.bf16 %v352, %v348
    %v397 = vpack.c.bf16 %v392, %v389
    %vm398 = vcmask 261120
    %v400 = vsel %vm398, %v395, 0
    %v403 = vsel %vm398, %v396, 0
    %405 = vmatprep.subr.bf16.mxu0 0
    %406 = vmatpush1.bf16.xpose.msra.mxu0 %v403
    %407 = vmatprep.subr.bf16.mxu0 0
    %408 = vmatpush1.bf16.xpose.msra.mxu0 0
    %409 = vmatprep.subr.bf16.mxu0 0
    %410 = vmatpush1.bf16.xpose.msra.mxu0 0
    %411 = vmatprep.subr.bf16.mxu0 0
    %412 = vmatpush1.bf16.xpose.msra.mxu0 0
    %413 = vmatprep.subr.bf16.mxu0 0
    %414 = vmatpush1.bf16.xpose.msra.mxu0 0
    %415 = vmatprep.subr.bf16.mxu0 0
    %416 = vmatpush1.bf16.xpose.msra.mxu0 0
    %417 = vmatprep.subr.bf16.mxu0 0
    %418 = vmatpush1.bf16.xpose.msra.mxu0 0
    %419 = vmatprep.subr.bf16.mxu0 0
    %420 = vmatpush1.bf16.xpose.msra.mxu0 0
    %421 = vmatprep.subr.bf16.mxu0 0
    %422 = vmatpush1.bf16.xpose.msra.mxu0 0
    %423 = vmatprep.subr.bf16.mxu0 0
    %424 = vmatpush1.bf16.xpose.msra.mxu0 0
    %425 = vmatprep.subr.bf16.mxu0 0
    %426 = vmatpush1.bf16.xpose.msra.mxu0 0
    %427 = vmatprep.subr.bf16.mxu0 0
    %428 = vmatpush1.bf16.xpose.msra.mxu0 0
    %429 = vmatprep.subr.bf16.mxu0 0
    %430 = vmatpush1.bf16.xpose.msra.mxu0 0
    %431 = vmatprep.subr.bf16.mxu0 0
    %432 = vmatpush1.bf16.xpose.msra.mxu0 0
    %433 = vmatprep.subr.bf16.mxu0 0
    %434 = vmatpush1.bf16.xpose.msra.mxu0 0
    %435 = vmatprep.subr.bf16.mxu0 0
    %436 = vmatpush1.bf16.xpose.msra.mxu0 0
    %437 = vmatprep.mubr.bf16.mxu0 0
    %438 = vmatmul.mubr.bf16.gmra.mrb[0].mxu0 %v400
    %v439 = vpop.f32.mrb[0].mxu0
    %v440 = vadd.f32 0.0, %v439
    %v441 = vpop.f32.mrb[0].mxu0
    %v442 = vpop.f32.mrb[0].mxu0
    %v443 = vadd.f32 0.0, %v442
    %v444 = vpop.f32.mrb[0].mxu0
    %445 = vdwg.mxu0
    %447 = vrot.lane.b32.xlu0 %v395, 96
    %v448 = vpop.permute.xlu0 %447
    %450 = vrot.lane.b32.xlu0 %v396, 96
    %v451 = vpop.permute.xlu0 %450
    %v453 = vsel %vm398, %v448, 0
    %v456 = vsel %vm398, %v451, 0
    %458 = vmatprep.subr.bf16.mxu0 0
    %459 = vmatpush1.bf16.xpose.msra.mxu0 %v456
    %460 = vmatprep.subr.bf16.mxu0 0
    %461 = vmatpush1.bf16.xpose.msra.mxu0 0
    %462 = vmatprep.subr.bf16.mxu0 0
    %463 = vmatpush1.bf16.xpose.msra.mxu0 0
    %464 = vmatprep.subr.bf16.mxu0 0
    %465 = vmatpush1.bf16.xpose.msra.mxu0 0
    %466 = vmatprep.subr.bf16.mxu0 0
    %467 = vmatpush1.bf16.xpose.msra.mxu0 0
    %468 = vmatprep.subr.bf16.mxu0 0
    %469 = vmatpush1.bf16.xpose.msra.mxu0 0
    %470 = vmatprep.subr.bf16.mxu0 0
    %471 = vmatpush1.bf16.xpose.msra.mxu0 0
    %472 = vmatprep.subr.bf16.mxu0 0
    %473 = vmatpush1.bf16.xpose.msra.mxu0 0
    %474 = vmatprep.subr.bf16.mxu0 0
    %475 = vmatpush1.bf16.xpose.msra.mxu0 0
    %476 = vmatprep.subr.bf16.mxu0 0
    %477 = vmatpush1.bf16.xpose.msra.mxu0 0
    %478 = vmatprep.subr.bf16.mxu0 0
    %479 = vmatpush1.bf16.xpose.msra.mxu0 0
    %480 = vmatprep.subr.bf16.mxu0 0
    %481 = vmatpush1.bf16.xpose.msra.mxu0 0
    %482 = vmatprep.subr.bf16.mxu0 0
    %483 = vmatpush1.bf16.xpose.msra.mxu0 0
    %484 = vmatprep.subr.bf16.mxu0 0
    %485 = vmatpush1.bf16.xpose.msra.mxu0 0
    %486 = vmatprep.subr.bf16.mxu0 0
    %487 = vmatpush1.bf16.xpose.msra.mxu0 0
    %488 = vmatprep.subr.bf16.mxu0 0
    %489 = vmatpush1.bf16.xpose.msra.mxu0 0
    %490 = vmatprep.mubr.bf16.mxu0 0
    %491 = vmatmul.mubr.bf16.gmra.mrb[0].mxu0 %v453
    %v492 = vpop.f32.mrb[0].mxu0
    %v493 = vadd.f32 0.0, %v492
    %v494 = vpop.f32.mrb[0].mxu0
    %v495 = vpop.f32.mrb[0].mxu0
    %v496 = vadd.f32 0.0, %v495
    %v497 = vpop.f32.mrb[0].mxu0
    %498 = vdwg.mxu0
    %499 = vrot.lane.b32.xlu0 %v395, 64
    %v500 = vpop.permute.xlu0 %499
    %501 = vrot.lane.b32.xlu0 %v396, 64
    %v502 = vpop.permute.xlu0 %501
    %v504 = vsel %vm398, %v500, 0
    %v507 = vsel %vm398, %v502, 0
    %509 = vmatprep.subr.bf16.mxu0 0
    %510 = vmatpush1.bf16.xpose.msra.mxu0 %v507
    %511 = vmatprep.subr.bf16.mxu0 0
    %512 = vmatpush1.bf16.xpose.msra.mxu0 0
    %513 = vmatprep.subr.bf16.mxu0 0
    %514 = vmatpush1.bf16.xpose.msra.mxu0 0
    %515 = vmatprep.subr.bf16.mxu0 0
    %516 = vmatpush1.bf16.xpose.msra.mxu0 0
    %517 = vmatprep.subr.bf16.mxu0 0
    %518 = vmatpush1.bf16.xpose.msra.mxu0 0
    %519 = vmatprep.subr.bf16.mxu0 0
    %520 = vmatpush1.bf16.xpose.msra.mxu0 0
    %521 = vmatprep.subr.bf16.mxu0 0
    %522 = vmatpush1.bf16.xpose.msra.mxu0 0
    %523 = vmatprep.subr.bf16.mxu0 0
    %524 = vmatpush1.bf16.xpose.msra.mxu0 0
    %525 = vmatprep.subr.bf16.mxu0 0
    %526 = vmatpush1.bf16.xpose.msra.mxu0 0
    %527 = vmatprep.subr.bf16.mxu0 0
    %528 = vmatpush1.bf16.xpose.msra.mxu0 0
    %529 = vmatprep.subr.bf16.mxu0 0
    %530 = vmatpush1.bf16.xpose.msra.mxu0 0
    %531 = vmatprep.subr.bf16.mxu0 0
    %532 = vmatpush1.bf16.xpose.msra.mxu0 0
    %533 = vmatprep.subr.bf16.mxu0 0
    %534 = vmatpush1.bf16.xpose.msra.mxu0 0
    %535 = vmatprep.subr.bf16.mxu0 0
    %536 = vmatpush1.bf16.xpose.msra.mxu0 0
    %537 = vmatprep.subr.bf16.mxu0 0
    %538 = vmatpush1.bf16.xpose.msra.mxu0 0
    %539 = vmatprep.subr.bf16.mxu0 0
    %540 = vmatpush1.bf16.xpose.msra.mxu0 0
    %541 = vmatprep.mubr.bf16.mxu0 0
    %542 = vmatmul.mubr.bf16.gmra.mrb[0].mxu0 %v504
    %v543 = vpop.f32.mrb[0].mxu0
    %v544 = vadd.f32 0.0, %v543
    %v545 = vpop.f32.mrb[0].mxu0
    %v546 = vpop.f32.mrb[0].mxu0
    %v547 = vadd.f32 0.0, %v546
    %v548 = vpop.f32.mrb[0].mxu0
    %549 = vdwg.mxu0
    %550 = vrot.lane.b32.xlu0 %v395, 32
    %v551 = vpop.permute.xlu0 %550
    %552 = vrot.lane.b32.xlu0 %v396, 32
    %v553 = vpop.permute.xlu0 %552
    %v555 = vsel %vm398, %v551, 0
    %v558 = vsel %vm398, %v553, 0
    %560 = vmatprep.subr.bf16.mxu0 0
    %561 = vmatpush1.bf16.xpose.msra.mxu0 %v558
    %562 = vmatprep.subr.bf16.mxu0 0
    %563 = vmatpush1.bf16.xpose.msra.mxu0 0
    %564 = vmatprep.subr.bf16.mxu0 0
    %565 = vmatpush1.bf16.xpose.msra.mxu0 0
    %566 = vmatprep.subr.bf16.mxu0 0
    %567 = vmatpush1.bf16.xpose.msra.mxu0 0
    %568 = vmatprep.subr.bf16.mxu0 0
    %569 = vmatpush1.bf16.xpose.msra.mxu0 0
    %570 = vmatprep.subr.bf16.mxu0 0
    %571 = vmatpush1.bf16.xpose.msra.mxu0 0
    %572 = vmatprep.subr.bf16.mxu0 0
    %573 = vmatpush1.bf16.xpose.msra.mxu0 0
    %574 = vmatprep.subr.bf16.mxu0 0
    %575 = vmatpush1.bf16.xpose.msra.mxu0 0
    %576 = vmatprep.subr.bf16.mxu0 0
    %577 = vmatpush1.bf16.xpose.msra.mxu0 0
    %578 = vmatprep.subr.bf16.mxu0 0
    %579 = vmatpush1.bf16.xpose.msra.mxu0 0
    %580 = vmatprep.subr.bf16.mxu0 0
    %581 = vmatpush1.bf16.xpose.msra.mxu0 0
    %582 = vmatprep.subr.bf16.mxu0 0
    %583 = vmatpush1.bf16.xpose.msra.mxu0 0
    %584 = vmatprep.subr.bf16.mxu0 0
    %585 = vmatpush1.bf16.xpose.msra.mxu0 0
    %586 = vmatprep.subr.bf16.mxu0 0
    %587 = vmatpush1.bf16.xpose.msra.mxu0 0
    %588 = vmatprep.subr.bf16.mxu0 0
    %589 = vmatpush1.bf16.xpose.msra.mxu0 0
    %590 = vmatprep.subr.bf16.mxu0 0
    %591 = vmatpush1.bf16.xpose.msra.mxu0 0
    %592 = vmatprep.mubr.bf16.mxu0 0
    %593 = vmatmul.mubr.bf16.gmra.mrb[0].mxu0 %v555
    %v594 = vpop.f32.mrb[0].mxu0
    %v595 = vadd.f32 0.0, %v594
    %v596 = vpop.f32.mrb[0].mxu0
    %v597 = vpop.f32.mrb[0].mxu0
    %v598 = vadd.f32 0.0, %v597
    %v599 = vpop.f32.mrb[0].mxu0
    %600 = vdwg.mxu0
    %v601 = vadd.f32 %v440, %v131
    %v602 = vadd.f32 %v443, %v132
    %v603 = vadd.f32 %v493, %v131
    %v604 = vadd.f32 %v496, %v132
    %v605 = vadd.f32 %v544, %v131
    %v606 = vadd.f32 %v547, %v132
    %v607 = vadd.f32 %v595, %v131
    %v608 = vadd.f32 %v598, %v132
    %vm609 = vcmask 130048
    %v610 = vsel %vm609, %v601, -inf
    %611 = vmax.xlane.f32.xlu0 %v610
    %v612 = vpop.xlane.xlu0 %611
    %v613 = vsel %vm609, %v602, -inf
    %614 = vmax.xlane.f32.xlu0 %v613
    %v615 = vpop.xlane.xlu0 %614
    %v616 = vsel %vm609, %v603, -inf
    %617 = vmax.xlane.f32.xlu0 %v616
    %v618 = vpop.xlane.xlu0 %617
    %v619 = vsel %vm609, %v604, -inf
    %620 = vmax.xlane.f32.xlu0 %v619
    %v621 = vpop.xlane.xlu0 %620
    %v622 = vsel %vm609, %v605, -inf
    %623 = vmax.xlane.f32.xlu0 %v622
    %v624 = vpop.xlane.xlu0 %623
    %v625 = vsel %vm609, %v606, -inf
    %626 = vmax.xlane.f32.xlu0 %v625
    %v627 = vpop.xlane.xlu0 %626
    %v628 = vsel %vm609, %v607, -inf
    %629 = vmax.xlane.f32.xlu0 %v628
    %v630 = vpop.xlane.xlu0 %629
    %v631 = vsel %vm609, %v608, -inf
    %632 = vmax.xlane.f32.xlu0 %v631
    %v633 = vpop.xlane.xlu0 %632
    %v634 = vsub.f32 %v601, %v612
    %v635 = vsub.f32 %v602, %v615
    %v636 = vsub.f32 %v603, %v618
    %v637 = vsub.f32 %v604, %v621
    %v638 = vsub.f32 %v605, %v624
    %v639 = vsub.f32 %v606, %v627
    %v640 = vsub.f32 %v607, %v630
    %v641 = vsub.f32 %v608, %v633
    %v642 = vmul.f32 %v634, 1.442695
    %v643 = vpow.pop %v642
    %v644 = vmul.f32 %v635, 1.442695
    %v645 = vpow.pop %v644
    %v646 = vmul.f32 %v636, 1.442695
    %v647 = vpow.pop %v646
    %v648 = vmul.f32 %v637, 1.442695
    %v649 = vpow.pop %v648
    %v650 = vmul.f32 %v638, 1.442695
    %v651 = vpow.pop %v650
    %v652 = vmul.f32 %v639, 1.442695
    %v653 = vpow.pop %v652
    %v654 = vmul.f32 %v640, 1.442695
    %v655 = vpow.pop %v654
    %v656 = vmul.f32 %v641, 1.442695
    %v657 = vpow.pop %v656
    %v658 = vsel %vm609, %v643, 0.0
    %659 = vadd.xlane.f32.xlu0 %v658
    %v660 = vpop.xlane.xlu0 %659
    %v661 = vsel %vm609, %v645, 0.0
    %662 = vadd.xlane.f32.xlu0 %v661
    %v663 = vpop.xlane.xlu0 %662
    %v664 = vsel %vm609, %v647, 0.0
    %665 = vadd.xlane.f32.xlu0 %v664
    %v666 = vpop.xlane.xlu0 %665
    %v667 = vsel %vm609, %v649, 0.0
    %668 = vadd.xlane.f32.xlu0 %v667
    %v669 = vpop.xlane.xlu0 %668
    %v670 = vsel %vm609, %v651, 0.0
    %671 = vadd.xlane.f32.xlu0 %v670
    %v672 = vpop.xlane.xlu0 %671
    %v673 = vsel %vm609, %v653, 0.0
    %674 = vadd.xlane.f32.xlu0 %v673
    %v675 = vpop.xlane.xlu0 %674
    %v676 = vsel %vm609, %v655, 0.0
    %677 = vadd.xlane.f32.xlu0 %v676
    %v678 = vpop.xlane.xlu0 %677
    %v679 = vsel %vm609, %v657, 0.0
    %680 = vadd.xlane.f32.xlu0 %v679
    %v681 = vpop.xlane.xlu0 %680
    %v682 = vrcp.pop %v660
    %v683 = vrcp.pop %v663
    %v684 = vrcp.pop %v666
    %v685 = vrcp.pop %v669
    %v686 = vrcp.pop %v672
    %v687 = vrcp.pop %v675
    %v688 = vrcp.pop %v678
    %v689 = vrcp.pop %v681
    %v690 = vmul.f32 %v643, %v682
    %v691 = vmul.f32 %v645, %v683
    %v692 = vmul.f32 %v647, %v684
    %v693 = vmul.f32 %v649, %v685
    %v694 = vmul.f32 %v651, %v686
    %v695 = vmul.f32 %v653, %v687
    %v696 = vmul.f32 %v655, %v688
    %v697 = vmul.f32 %v657, %v689
    %v698 = vpack.c.bf16 %v691, %v690
    %v699 = vpack.c.bf16 %v693, %v692
    %v700 = vpack.c.bf16 %v695, %v694
    %v701 = vpack.c.bf16 %v697, %v696
    %v703 = vsel %vm609, %v698, 0
    %705 = vmatprep.subr.bf16.mxu0 0
    %706 = vmatpush1.bf16.msra.mxu0 %v397
    %707 = vmatprep.subr.bf16.mxu0 0
    %708 = vmatpush1.bf16.msra.mxu0 0
    %709 = vmatprep.subr.bf16.mxu0 0
    %710 = vmatpush1.bf16.msra.mxu0 0
    %711 = vmatprep.subr.bf16.mxu0 0
    %712 = vmatpush1.bf16.msra.mxu0 0
    %713 = vmatprep.subr.bf16.mxu0 0
    %714 = vmatpush1.bf16.msra.mxu0 0
    %715 = vmatprep.subr.bf16.mxu0 0
    %716 = vmatpush1.bf16.msra.mxu0 0
    %717 = vmatprep.subr.bf16.mxu0 0
    %718 = vmatpush1.bf16.msra.mxu0 0
    %719 = vmatprep.subr.bf16.mxu0 0
    %720 = vmatpush1.bf16.msra.mxu0 0
    %721 = vmatprep.subr.bf16.mxu0 0
    %722 = vmatpush1.bf16.msra.mxu0 0
    %723 = vmatprep.subr.bf16.mxu0 0
    %724 = vmatpush1.bf16.msra.mxu0 0
    %725 = vmatprep.subr.bf16.mxu0 0
    %726 = vmatpush1.bf16.msra.mxu0 0
    %727 = vmatprep.subr.bf16.mxu0 0
    %728 = vmatpush1.bf16.msra.mxu0 0
    %729 = vmatprep.subr.bf16.mxu0 0
    %730 = vmatpush1.bf16.msra.mxu0 0
    %731 = vmatprep.subr.bf16.mxu0 0
    %732 = vmatpush1.bf16.msra.mxu0 0
    %733 = vmatprep.subr.bf16.mxu0 0
    %734 = vmatpush1.bf16.msra.mxu0 0
    %735 = vmatprep.subr.bf16.mxu0 0
    %736 = vmatpush1.bf16.msra.mxu0 0
    %737 = vmatprep.mubr.bf16.mxu0 0
    %738 = vmatmul.mubr.bf16.gmra.mrb[0].mxu0 %v703
    %v739 = vpop.f32.mrb[0].mxu0
    %v740 = vadd.f32 0.0, %v739
    %v741 = vpop.f32.mrb[0].mxu0
    %v742 = vpop.f32.mrb[0].mxu0
    %v743 = vadd.f32 0.0, %v742
    %v744 = vpop.f32.mrb[0].mxu0
    %745 = vdwg.mxu0
    %747 = vrot.lane.b32.xlu0 %v397, 96
    %v748 = vpop.permute.xlu0 %747
    %v751 = vsel %vm609, %v699, 0
    %753 = vmatprep.subr.bf16.mxu0 0
    %754 = vmatpush1.bf16.msra.mxu0 %v748
    %755 = vmatprep.subr.bf16.mxu0 0
    %756 = vmatpush1.bf16.msra.mxu0 0
    %757 = vmatprep.subr.bf16.mxu0 0
    %758 = vmatpush1.bf16.msra.mxu0 0
    %759 = vmatprep.subr.bf16.mxu0 0
    %760 = vmatpush1.bf16.msra.mxu0 0
    %761 = vmatprep.subr.bf16.mxu0 0
    %762 = vmatpush1.bf16.msra.mxu0 0
    %763 = vmatprep.subr.bf16.mxu0 0
    %764 = vmatpush1.bf16.msra.mxu0 0
    %765 = vmatprep.subr.bf16.mxu0 0
    %766 = vmatpush1.bf16.msra.mxu0 0
    %767 = vmatprep.subr.bf16.mxu0 0
    %768 = vmatpush1.bf16.msra.mxu0 0
    %769 = vmatprep.subr.bf16.mxu0 0
    %770 = vmatpush1.bf16.msra.mxu0 0
    %771 = vmatprep.subr.bf16.mxu0 0
    %772 = vmatpush1.bf16.msra.mxu0 0
    %773 = vmatprep.subr.bf16.mxu0 0
    %774 = vmatpush1.bf16.msra.mxu0 0
    %775 = vmatprep.subr.bf16.mxu0 0
    %776 = vmatpush1.bf16.msra.mxu0 0
    %777 = vmatprep.subr.bf16.mxu0 0
    %778 = vmatpush1.bf16.msra.mxu0 0
    %779 = vmatprep.subr.bf16.mxu0 0
    %780 = vmatpush1.bf16.msra.mxu0 0
    %781 = vmatprep.subr.bf16.mxu0 0
    %782 = vmatpush1.bf16.msra.mxu0 0
    %783 = vmatprep.subr.bf16.mxu0 0
    %784 = vmatpush1.bf16.msra.mxu0 0
    %785 = vmatprep.mubr.bf16.mxu0 0
    %786 = vmatmul.mubr.bf16.gmra.mrb[0].mxu0 %v751
    %v787 = vpop.f32.mrb[0].mxu0
    %v788 = vadd.f32 0.0, %v787
    %v789 = vpop.f32.mrb[0].mxu0
    %v790 = vpop.f32.mrb[0].mxu0
    %v791 = vadd.f32 0.0, %v790
    %v792 = vpop.f32.mrb[0].mxu0
    %793 = vdwg.mxu0
    %794 = vrot.lane.b32.xlu0 %v397, 64
    %v795 = vpop.permute.xlu0 %794
    %v798 = vsel %vm609, %v700, 0
    %800 = vmatprep.subr.bf16.mxu0 0
    %801 = vmatpush1.bf16.msra.mxu0 %v795
    %802 = vmatprep.subr.bf16.mxu0 0
    %803 = vmatpush1.bf16.msra.mxu0 0
    %804 = vmatprep.subr.bf16.mxu0 0
    %805 = vmatpush1.bf16.msra.mxu0 0
    %806 = vmatprep.subr.bf16.mxu0 0
    %807 = vmatpush1.bf16.msra.mxu0 0
    %808 = vmatprep.subr.bf16.mxu0 0
    %809 = vmatpush1.bf16.msra.mxu0 0
    %810 = vmatprep.subr.bf16.mxu0 0
    %811 = vmatpush1.bf16.msra.mxu0 0
    %812 = vmatprep.subr.bf16.mxu0 0
    %813 = vmatpush1.bf16.msra.mxu0 0
    %814 = vmatprep.subr.bf16.mxu0 0
    %815 = vmatpush1.bf16.msra.mxu0 0
    %816 = vmatprep.subr.bf16.mxu0 0
    %817 = vmatpush1.bf16.msra.mxu0 0
    %818 = vmatprep.subr.bf16.mxu0 0
    %819 = vmatpush1.bf16.msra.mxu0 0
    %820 = vmatprep.subr.bf16.mxu0 0
    %821 = vmatpush1.bf16.msra.mxu0 0
    %822 = vmatprep.subr.bf16.mxu0 0
    %823 = vmatpush1.bf16.msra.mxu0 0
    %824 = vmatprep.subr.bf16.mxu0 0
    %825 = vmatpush1.bf16.msra.mxu0 0
    %826 = vmatprep.subr.bf16.mxu0 0
    %827 = vmatpush1.bf16.msra.mxu0 0
    %828 = vmatprep.subr.bf16.mxu0 0
    %829 = vmatpush1.bf16.msra.mxu0 0
    %830 = vmatprep.subr.bf16.mxu0 0
    %831 = vmatpush1.bf16.msra.mxu0 0
    %832 = vmatprep.mubr.bf16.mxu0 0
    %833 = vmatmul.mubr.bf16.gmra.mrb[0].mxu0 %v798
    %v834 = vpop.f32.mrb[0].mxu0
    %v835 = vadd.f32 0.0, %v834
    %v836 = vpop.f32.mrb[0].mxu0
    %v837 = vpop.f32.mrb[0].mxu0
    %v838 = vadd.f32 0.0, %v837
    %v839 = vpop.f32.mrb[0].mxu0
    %840 = vdwg.mxu0
    %841 = vrot.lane.b32.xlu0 %v397, 32
    %v842 = vpop.permute.xlu0 %841
    %v845 = vsel %vm609, %v701, 0
    %847 = vmatprep.subr.bf16.mxu0 0
    %848 = vmatpush1.bf16.msra.mxu0 %v842
    %849 = vmatprep.subr.bf16.mxu0 0
    %850 = vmatpush1.bf16.msra.mxu0 0
    %851 = vmatprep.subr.bf16.mxu0 0
    %852 = vmatpush1.bf16.msra.mxu0 0
    %853 = vmatprep.subr.bf16.mxu0 0
    %854 = vmatpush1.bf16.msra.mxu0 0
    %855 = vmatprep.subr.bf16.mxu0 0
    %856 = vmatpush1.bf16.msra.mxu0 0
    %857 = vmatprep.subr.bf16.mxu0 0
    %858 = vmatpush1.bf16.msra.mxu0 0
    %859 = vmatprep.subr.bf16.mxu0 0
    %860 = vmatpush1.bf16.msra.mxu0 0
    %861 = vmatprep.subr.bf16.mxu0 0
    %862 = vmatpush1.bf16.msra.mxu0 0
    %863 = vmatprep.subr.bf16.mxu0 0
    %864 = vmatpush1.bf16.msra.mxu0 0
    %865 = vmatprep.subr.bf16.mxu0 0
    %866 = vmatpush1.bf16.msra.mxu0 0
    %867 = vmatprep.subr.bf16.mxu0 0
    %868 = vmatpush1.bf16.msra.mxu0 0
    %869 = vmatprep.subr.bf16.mxu0 0
    %870 = vmatpush1.bf16.msra.mxu0 0
    %871 = vmatprep.subr.bf16.mxu0 0
    %872 = vmatpush1.bf16.msra.mxu0 0
    %873 = vmatprep.subr.bf16.mxu0 0
    %874 = vmatpush1.bf16.msra.mxu0 0
    %875 = vmatprep.subr.bf16.mxu0 0
    %876 = vmatpush1.bf16.msra.mxu0 0
    %877 = vmatprep.subr.bf16.mxu0 0
    %878 = vmatpush1.bf16.msra.mxu0 0
    %879 = vmatprep.mubr.bf16.mxu0 0
    %880 = vmatmul.mubr.bf16.gmra.mrb[0].mxu0 %v845
    %v881 = vpop.f32.mrb[0].mxu0
    %v882 = vadd.f32 0.0, %v881
    %v883 = vpop.f32.mrb[0].mxu0
    %v884 = vpop.f32.mrb[0].mxu0
    %v885 = vadd.f32 0.0, %v884
    %v886 = vpop.f32.mrb[0].mxu0
    %887 = vdwg.mxu0
    %890 = vrot.lane.b32.xlu0 %v788, 32
    %v891 = vpop.permute.xlu0 %890
    %892 = vrot.lane.b32.xlu0 %v791, 32
    %v893 = vpop.permute.xlu0 %892
    %898 = vrot.lane.b32.xlu0 %v835, 64
    %v899 = vpop.permute.xlu0 %898
    %900 = vrot.lane.b32.xlu0 %v838, 64
    %v901 = vpop.permute.xlu0 %900
    %906 = vrot.lane.b32.xlu0 %v882, 96
    %v907 = vpop.permute.xlu0 %906
    %908 = vrot.lane.b32.xlu0 %v885, 96
    %v909 = vpop.permute.xlu0 %908
    %v912 = vsel %vm398, %v740, %v891
    %v913 = vsel %vm398, %v743, %v893
    %vm914 = vcmask 523264
    %v915 = vsel %vm914, %v912, %v899
    %v916 = vsel %vm914, %v913, %v901
    %vm917 = vcmask 785408
    %v918 = vsel %vm917, %v915, %v907
    %v919 = vsel %vm917, %v916, %v909
    %v920 = vpack.c.bf16 %v919, %v918
    %v921 = vld [vmem:[%s6] sm:$0xf]
    %v922 = vld [vmem:[%s6 + $0x4] sm:$0xf]
    %v923 = vld [vmem:[%s6 + $0x8] sm:$0xf]
    %v924 = vld [vmem:[%s6 + $0xc] sm:$0xf]
    %v925 = vld [vmem:[%s6 + $0x10] sm:$0xf]
    %v926 = vld [vmem:[%s6 + $0x14] sm:$0xf]
    %v927 = vld [vmem:[%s6 + $0x18] sm:$0xf]
    %v928 = vld [vmem:[%s6 + $0x1c] sm:$0xf]
    %v929 = vld [vmem:[%s6 + $0x20] sm:$0xf]
    %v930 = vld [vmem:[%s6 + $0x24] sm:$0xf]
    %v931 = vld [vmem:[%s6 + $0x28] sm:$0xf]
    %v932 = vld [vmem:[%s6 + $0x2c] sm:$0xf]
    %v933 = vld [vmem:[%s6 + $0x30] sm:$0xf]
    %v934 = vld [vmem:[%s6 + $0x34] sm:$0xf]
    %v935 = vld [vmem:[%s6 + $0x38] sm:$0xf]
    %v936 = vld [vmem:[%s6 + $0x3c] sm:$0xf]
    %v937 = vld [vmem:[%s7] sm:$0x1]
    %v939 = vlaneseq
    %v940 = vshrl.u32 %v939, 7
    %v941 = vsub.s32 0, %v940
    %v942 = vrot.slane %v937, %v941
    %v960 = vunpack.c.l.b16 %v921
    %v961 = vunpack.c.l.b16 %v922
    %v962 = vunpack.c.l.b16 %v923
    %v963 = vunpack.c.l.b16 %v924
    %v964 = vunpack.c.l.b16 %v925
    %v965 = vunpack.c.l.b16 %v926
    %v966 = vunpack.c.l.b16 %v927
    %v967 = vunpack.c.l.b16 %v928
    %v968 = vunpack.c.l.b16 %v929
    %v969 = vunpack.c.l.b16 %v930
    %v970 = vunpack.c.l.b16 %v931
    %v971 = vunpack.c.l.b16 %v932
    %v972 = vunpack.c.l.b16 %v933
    %v973 = vunpack.c.l.b16 %v934
    %v974 = vunpack.c.l.b16 %v935
    %v975 = vunpack.c.l.b16 %v936
    %v976 = vpack.c.b16 %v961, %v960
    %v977 = vpack.c.b16 %v963, %v962
    %v978 = vpack.c.b16 %v965, %v964
    %v979 = vpack.c.b16 %v967, %v966
    %v980 = vpack.c.b16 %v969, %v968
    %v981 = vpack.c.b16 %v971, %v970
    %v982 = vpack.c.b16 %v973, %v972
    %v983 = vpack.c.b16 %v975, %v974
    %992 = vmatprep.subr.bf16.mxu0 0
    %993 = vmatpush1.bf16.msra.mxu0 %v976
    %994 = vmatprep.subr.bf16.mxu0 0
    %995 = vmatpush1.bf16.msra.mxu0 %v977
    %996 = vmatprep.subr.bf16.mxu0 0
    %997 = vmatpush1.bf16.msra.mxu0 %v978
    %998 = vmatprep.subr.bf16.mxu0 0
    %999 = vmatpush1.bf16.msra.mxu0 %v979
    %1000 = vmatprep.subr.bf16.mxu0 0
    %1001 = vmatpush1.bf16.msra.mxu0 %v980
    %1002 = vmatprep.subr.bf16.mxu0 0
    %1003 = vmatpush1.bf16.msra.mxu0 %v981
    %1004 = vmatprep.subr.bf16.mxu0 0
    %1005 = vmatpush1.bf16.msra.mxu0 %v982
    %1006 = vmatprep.subr.bf16.mxu0 0
    %1007 = vmatpush1.bf16.msra.mxu0 %v983
    %1008 = vmatprep.subr.bf16.mxu0 0
    %1009 = vmatpush1.bf16.msra.mxu0 0
    %1010 = vmatprep.subr.bf16.mxu0 0
    %1011 = vmatpush1.bf16.msra.mxu0 0
    %1012 = vmatprep.subr.bf16.mxu0 0
    %1013 = vmatpush1.bf16.msra.mxu0 0
    %1014 = vmatprep.subr.bf16.mxu0 0
    %1015 = vmatpush1.bf16.msra.mxu0 0
    %1016 = vmatprep.subr.bf16.mxu0 0
    %1017 = vmatpush1.bf16.msra.mxu0 0
    %1018 = vmatprep.subr.bf16.mxu0 0
    %1019 = vmatpush1.bf16.msra.mxu0 0
    %1020 = vmatprep.subr.bf16.mxu0 0
    %1021 = vmatpush1.bf16.msra.mxu0 0
    %1022 = vmatprep.subr.bf16.mxu0 0
    %1023 = vmatpush1.bf16.msra.mxu0 0
    %1024 = vmatprep.mubr.bf16.mxu0 0
    %1025 = vmatmul.mubr.bf16.gmra.mrb[0].mxu0 %v920
    %v1026 = vpop.f32.mrb[0].mxu0
    %v1027 = vadd.f32 %v942, %v1026
    %v1028 = vpop.f32.mrb[0].mxu0
    %v1029 = vpop.f32.mrb[0].mxu0
    %v1030 = vadd.f32 %v942, %v1029
    %v1031 = vpop.f32.mrb[0].mxu0
    %1032 = vdwg.mxu0
    %v1033 = vadd.f32 %v129, %v1027
    %v1034 = vadd.f32 %v130, %v1030
    %v1035 = vld [vmem:[%s8] sm:$0x1]
    %v1036 = vld [vmem:[%s9] sm:$0x1]
    %1037 = vadd.xlane.f32.xlu0 %v1033
    %v1038 = vpop.xlane.xlu0 %1037
    %1039 = vadd.xlane.f32.xlu0 %v1034
    %v1040 = vpop.xlane.xlu0 %1039
    %v1041 = vmul.f32 %v1038, %v96
    %v1042 = vmul.f32 %v1040, %v96
    %v1043 = vsub.f32 %v1033, %v1041
    %v1044 = vsub.f32 %v1034, %v1042
    %v1045 = vmul.f32 %v1043, %v1043
    %v1046 = vmul.f32 %v1044, %v1044
    %1047 = vadd.xlane.f32.xlu0 %v1045
    %v1048 = vpop.xlane.xlu0 %1047
    %1049 = vadd.xlane.f32.xlu0 %v1046
    %v1050 = vpop.xlane.xlu0 %1049
    %v1051 = vmul.f32 %v1048, %v96
    %v1052 = vmul.f32 %v1050, %v96
    %v1053 = vadd.f32 %v1051, 1e-12
    %v1054 = vadd.f32 %v1052, 1e-12
    %v1055 = vrsqrt.pop %v1053
    %v1056 = vrsqrt.pop %v1054
    %v1057 = vmul.f32 %v1043, %v1055
    %v1058 = vmul.f32 %v1044, %v1056
    %v1060 = vlaneseq
    %v1061 = vshrl.u32 %v1060, 7
    %v1062 = vsub.s32 0, %v1061
    %v1063 = vrot.slane %v1035, %v1062
    %v1065 = vmul.f32 %v1057, %v1063
    %v1066 = vmul.f32 %v1058, %v1063
    %v1068 = vlaneseq
    %v1069 = vshrl.u32 %v1068, 7
    %v1070 = vsub.s32 0, %v1069
    %v1071 = vrot.slane %v1036, %v1070
    %v1073 = vadd.f32 %v1065, %v1071
    %v1074 = vadd.f32 %v1066, %v1071
    %v1075 = vpack.c.bf16 %v1074, %v1073
    %v1076 = vld [vmem:[%s10] sm:$0xff]
    %v1077 = vld [vmem:[%s10 + $0x8] sm:$0xff]
    %v1078 = vld [vmem:[%s10 + $0x10] sm:$0xff]
    %v1079 = vld [vmem:[%s10 + $0x18] sm:$0xff]
    %v1080 = vld [vmem:[%s10 + $0x20] sm:$0xff]
    %v1081 = vld [vmem:[%s10 + $0x28] sm:$0xff]
    %v1082 = vld [vmem:[%s10 + $0x30] sm:$0xff]
    %v1083 = vld [vmem:[%s10 + $0x38] sm:$0xff]
    %v1084 = vld [vmem:[%s10 + $0x40] sm:$0xff]
    %v1085 = vld [vmem:[%s10 + $0x48] sm:$0xff]
    %v1086 = vld [vmem:[%s10 + $0x50] sm:$0xff]
    %v1087 = vld [vmem:[%s10 + $0x58] sm:$0xff]
    %v1088 = vld [vmem:[%s10 + $0x60] sm:$0xff]
    %v1089 = vld [vmem:[%s10 + $0x68] sm:$0xff]
    %v1090 = vld [vmem:[%s10 + $0x70] sm:$0xff]
    %v1091 = vld [vmem:[%s10 + $0x78] sm:$0xff]
    %v1092 = vld [vmem:[%s11] sm:$0x3]
    %v1094 = vlaneseq
    %v1095 = vshrl.u32 %v1094, 7
    %v1096 = vsub.s32 0, %v1095
    %v1097 = vrot.slane %v1092, %v1096
    %v1098 = vlaneseq
    %v1099 = vshrl.u32 %v1098, 7
    %v1100 = vsub.s32 1, %v1099
    %v1101 = vrot.slane %v1092, %v1100
    %v1120 = vunpack.c.l.b16 %v1076
    %v1121 = vunpack.c.h.b16 %v1076
    %v1122 = vunpack.c.l.b16 %v1077
    %v1123 = vunpack.c.h.b16 %v1077
    %v1124 = vunpack.c.l.b16 %v1078
    %v1125 = vunpack.c.h.b16 %v1078
    %v1126 = vunpack.c.l.b16 %v1079
    %v1127 = vunpack.c.h.b16 %v1079
    %v1128 = vunpack.c.l.b16 %v1080
    %v1129 = vunpack.c.h.b16 %v1080
    %v1130 = vunpack.c.l.b16 %v1081
    %v1131 = vunpack.c.h.b16 %v1081
    %v1132 = vunpack.c.l.b16 %v1082
    %v1133 = vunpack.c.h.b16 %v1082
    %v1134 = vunpack.c.l.b16 %v1083
    %v1135 = vunpack.c.h.b16 %v1083
    %v1136 = vunpack.c.l.b16 %v1084
    %v1137 = vunpack.c.h.b16 %v1084
    %v1138 = vunpack.c.l.b16 %v1085
    %v1139 = vunpack.c.h.b16 %v1085
    %v1140 = vunpack.c.l.b16 %v1086
    %v1141 = vunpack.c.h.b16 %v1086
    %v1142 = vunpack.c.l.b16 %v1087
    %v1143 = vunpack.c.h.b16 %v1087
    %v1144 = vunpack.c.l.b16 %v1088
    %v1145 = vunpack.c.h.b16 %v1088
    %v1146 = vunpack.c.l.b16 %v1089
    %v1147 = vunpack.c.h.b16 %v1089
    %v1148 = vunpack.c.l.b16 %v1090
    %v1149 = vunpack.c.h.b16 %v1090
    %v1150 = vunpack.c.l.b16 %v1091
    %v1151 = vunpack.c.h.b16 %v1091
    %v1152 = vpack.c.b16 %v1122, %v1120
    %v1153 = vpack.c.b16 %v1123, %v1121
    %v1154 = vpack.c.b16 %v1126, %v1124
    %v1155 = vpack.c.b16 %v1127, %v1125
    %v1156 = vpack.c.b16 %v1130, %v1128
    %v1157 = vpack.c.b16 %v1131, %v1129
    %v1158 = vpack.c.b16 %v1134, %v1132
    %v1159 = vpack.c.b16 %v1135, %v1133
    %v1160 = vpack.c.b16 %v1138, %v1136
    %v1161 = vpack.c.b16 %v1139, %v1137
    %v1162 = vpack.c.b16 %v1142, %v1140
    %v1163 = vpack.c.b16 %v1143, %v1141
    %v1164 = vpack.c.b16 %v1146, %v1144
    %v1165 = vpack.c.b16 %v1147, %v1145
    %v1166 = vpack.c.b16 %v1150, %v1148
    %v1167 = vpack.c.b16 %v1151, %v1149
    %1184 = vmatprep.subr.bf16.mxu0 %v1153
    %1185 = vmatpush1.bf16.msra.mxu0 %v1152
    %1186 = vmatprep.subr.bf16.mxu0 %v1155
    %1187 = vmatpush1.bf16.msra.mxu0 %v1154
    %1188 = vmatprep.subr.bf16.mxu0 %v1157
    %1189 = vmatpush1.bf16.msra.mxu0 %v1156
    %1190 = vmatprep.subr.bf16.mxu0 %v1159
    %1191 = vmatpush1.bf16.msra.mxu0 %v1158
    %1192 = vmatprep.subr.bf16.mxu0 %v1161
    %1193 = vmatpush1.bf16.msra.mxu0 %v1160
    %1194 = vmatprep.subr.bf16.mxu0 %v1163
    %1195 = vmatpush1.bf16.msra.mxu0 %v1162
    %1196 = vmatprep.subr.bf16.mxu0 %v1165
    %1197 = vmatpush1.bf16.msra.mxu0 %v1164
    %1198 = vmatprep.subr.bf16.mxu0 %v1167
    %1199 = vmatpush1.bf16.msra.mxu0 %v1166
    %1200 = vmatprep.subr.bf16.mxu0 0
    %1201 = vmatpush1.bf16.msra.mxu0 0
    %1202 = vmatprep.subr.bf16.mxu0 0
    %1203 = vmatpush1.bf16.msra.mxu0 0
    %1204 = vmatprep.subr.bf16.mxu0 0
    %1205 = vmatpush1.bf16.msra.mxu0 0
    %1206 = vmatprep.subr.bf16.mxu0 0
    %1207 = vmatpush1.bf16.msra.mxu0 0
    %1208 = vmatprep.subr.bf16.mxu0 0
    %1209 = vmatpush1.bf16.msra.mxu0 0
    %1210 = vmatprep.subr.bf16.mxu0 0
    %1211 = vmatpush1.bf16.msra.mxu0 0
    %1212 = vmatprep.subr.bf16.mxu0 0
    %1213 = vmatpush1.bf16.msra.mxu0 0
    %1214 = vmatprep.subr.bf16.mxu0 0
    %1215 = vmatpush1.bf16.msra.mxu0 0
    %1216 = vmatprep.mubr.bf16.mxu0 0
    %1217 = vmatmul.mubr.bf16.gmra.mrb[0].mxu0 %v1075
    %v1218 = vpop.f32.mrb[0].mxu0
    %v1219 = vadd.f32 %v1097, %v1218
    %v1220 = vpop.f32.mrb[0].mxu0
    %v1221 = vadd.f32 %v1101, %v1220
    %v1222 = vpop.f32.mrb[0].mxu0
    %v1223 = vadd.f32 %v1097, %v1222
    %v1224 = vpop.f32.mrb[0].mxu0
    %v1225 = vadd.f32 %v1101, %v1224
    %1226 = vdwg.mxu0
    %v1227 = vmul.f32 %v1219, 0.5
    %v1228 = vmul.f32 %v1221, 0.5
    %v1229 = vmul.f32 %v1223, 0.5
    %v1230 = vmul.f32 %v1225, 0.5
    %v1231 = vmul.f32 %v1219, 0.044715
    %v1232 = vmul.f32 %v1221, 0.044715
    %v1233 = vmul.f32 %v1223, 0.044715
    %v1234 = vmul.f32 %v1225, 0.044715
    %v1235 = vmul.f32 %v1231, %v1219
    %v1236 = vmul.f32 %v1232, %v1221
    %v1237 = vmul.f32 %v1233, %v1223
    %v1238 = vmul.f32 %v1234, %v1225
    %v1239 = vmul.f32 %v1235, %v1219
    %v1240 = vmul.f32 %v1236, %v1221
    %v1241 = vmul.f32 %v1237, %v1223
    %v1242 = vmul.f32 %v1238, %v1225
    %v1243 = vadd.f32 %v1219, %v1239
    %v1244 = vadd.f32 %v1221, %v1240
    %v1245 = vadd.f32 %v1223, %v1241
    %v1246 = vadd.f32 %v1225, %v1242
    %v1247 = vmul.f32 %v1243, 0.7978846
    %v1248 = vmul.f32 %v1244, 0.7978846
    %v1249 = vmul.f32 %v1245, 0.7978846
    %v1250 = vmul.f32 %v1246, 0.7978846
    %v1251 = vtanh.pop %v1247
    %v1252 = vtanh.pop %v1248
    %v1253 = vtanh.pop %v1249
    %v1254 = vtanh.pop %v1250
    %v1255 = vadd.f32 %v1251, 1.0
    %v1256 = vadd.f32 %v1252, 1.0
    %v1257 = vadd.f32 %v1253, 1.0
    %v1258 = vadd.f32 %v1254, 1.0
    %v1259 = vmul.f32 %v1227, %v1255
    %v1260 = vmul.f32 %v1228, %v1256
    %v1261 = vmul.f32 %v1229, %v1257
    %v1262 = vmul.f32 %v1230, %v1258
    %v1263 = vpack.c.bf16 %v1261, %v1259
    %v1264 = vpack.c.bf16 %v1262, %v1260
    %v1265 = vld [vmem:[#allocation4] sm:$0xf]
    %v1266 = vld [vmem:[#allocation4 + $0x4] sm:$0xf]
    %v1267 = vld [vmem:[#allocation4 + $0x8] sm:$0xf]
    %v1268 = vld [vmem:[#allocation4 + $0xc] sm:$0xf]
    %v1269 = vld [vmem:[#allocation4 + $0x10] sm:$0xf]
    %v1270 = vld [vmem:[#allocation4 + $0x14] sm:$0xf]
    %v1271 = vld [vmem:[#allocation4 + $0x18] sm:$0xf]
    %v1272 = vld [vmem:[#allocation4 + $0x1c] sm:$0xf]
    %v1273 = vld [vmem:[#allocation4 + $0x20] sm:$0xf]
    %v1274 = vld [vmem:[#allocation4 + $0x24] sm:$0xf]
    %v1275 = vld [vmem:[#allocation4 + $0x28] sm:$0xf]
    %v1276 = vld [vmem:[#allocation4 + $0x2c] sm:$0xf]
    %v1277 = vld [vmem:[#allocation4 + $0x30] sm:$0xf]
    %v1278 = vld [vmem:[#allocation4 + $0x34] sm:$0xf]
    %v1279 = vld [vmem:[#allocation4 + $0x38] sm:$0xf]
    %v1280 = vld [vmem:[#allocation4 + $0x3c] sm:$0xf]
    %v1281 = vld [vmem:[#allocation4 + $0x40] sm:$0xf]
    %v1282 = vld [vmem:[#allocation4 + $0x44] sm:$0xf]
    %v1283 = vld [vmem:[#allocation4 + $0x48] sm:$0xf]
    %v1284 = vld [vmem:[#allocation4 + $0x4c] sm:$0xf]
    %v1285 = vld [vmem:[#allocation4 + $0x50] sm:$0xf]
    %v1286 = vld [vmem:[#allocation4 + $0x54] sm:$0xf]
    %v1287 = vld [vmem:[#allocation4 + $0x58] sm:$0xf]
    %v1288 = vld [vmem:[#allocation4 + $0x5c] sm:$0xf]
    %v1289 = vld [vmem:[#allocation4 + $0x60] sm:$0xf]
    %v1290 = vld [vmem:[#allocation4 + $0x64] sm:$0xf]
    %v1291 = vld [vmem:[#allocation4 + $0x68] sm:$0xf]
    %v1292 = vld [vmem:[#allocation4 + $0x6c] sm:$0xf]
    %v1293 = vld [vmem:[#allocation4 + $0x70] sm:$0xf]
    %v1294 = vld [vmem:[#allocation4 + $0x74] sm:$0xf]
    %v1295 = vld [vmem:[#allocation4 + $0x78] sm:$0xf]
    %v1296 = vld [vmem:[#allocation4 + $0x7c] sm:$0xf]
    %v1297 = vld [vmem:[%s13] sm:$0x1]
    %v1299 = vlaneseq
    %v1300 = vshrl.u32 %v1299, 7
    %v1301 = vsub.s32 0, %v1300
    %v1302 = vrot.slane %v1297, %v1301
    %v1336 = vunpack.c.l.b16 %v1265
    %v1337 = vunpack.c.l.b16 %v1266
    %v1338 = vunpack.c.l.b16 %v1267
    %v1339 = vunpack.c.l.b16 %v1268
    %v1340 = vunpack.c.l.b16 %v1269
    %v1341 = vunpack.c.l.b16 %v1270
    %v1342 = vunpack.c.l.b16 %v1271
    %v1343 = vunpack.c.l.b16 %v1272
    %v1344 = vunpack.c.l.b16 %v1273
    %v1345 = vunpack.c.l.b16 %v1274
    %v1346 = vunpack.c.l.b16 %v1275
    %v1347 = vunpack.c.l.b16 %v1276
    %v1348 = vunpack.c.l.b16 %v1277
    %v1349 = vunpack.c.l.b16 %v1278
    %v1350 = vunpack.c.l.b16 %v1279
    %v1351 = vunpack.c.l.b16 %v1280
    %v1352 = vunpack.c.l.b16 %v1281
    %v1353 = vunpack.c.l.b16 %v1282
    %v1354 = vunpack.c.l.b16 %v1283
    %v1355 = vunpack.c.l.b16 %v1284
    %v1356 = vunpack.c.l.b16 %v1285
    %v1357 = vunpack.c.l.b16 %v1286
    %v1358 = vunpack.c.l.b16 %v1287
    %v1359 = vunpack.c.l.b16 %v1288
    %v1360 = vunpack.c.l.b16 %v1289
    %v1361 = vunpack.c.l.b16 %v1290
    %v1362 = vunpack.c.l.b16 %v1291
    %v1363 = vunpack.c.l.b16 %v1292
    %v1364 = vunpack.c.l.b16 %v1293
    %v1365 = vunpack.c.l.b16 %v1294
    %v1366 = vunpack.c.l.b16 %v1295
    %v1367 = vunpack.c.l.b16 %v1296
    %v1368 = vpack.c.b16 %v1337, %v1336
    %v1369 = vpack.c.b16 %v1339, %v1338
    %v1370 = vpack.c.b16 %v1341, %v1340
    %v1371 = vpack.c.b16 %v1343, %v1342
    %v1372 = vpack.c.b16 %v1345, %v1344
    %v1373 = vpack.c.b16 %v1347, %v1346
    %v1374 = vpack.c.b16 %v1349, %v1348
    %v1375 = vpack.c.b16 %v1351, %v1350
    %v1376 = vpack.c.b16 %v1353, %v1352
    %v1377 = vpack.c.b16 %v1355, %v1354
    %v1378 = vpack.c.b16 %v1357, %v1356
    %v1379 = vpack.c.b16 %v1359, %v1358
    %v1380 = vpack.c.b16 %v1361, %v1360
    %v1381 = vpack.c.b16 %v1363, %v1362
    %v1382 = vpack.c.b16 %v1365, %v1364
    %v1383 = vpack.c.b16 %v1367, %v1366
    %1400 = vmatprep.subr.bf16.mxu0 0
    %1401 = vmatpush1.bf16.msra.mxu0 %v1368
    %1402 = vmatprep.subr.bf16.mxu0 0
    %1403 = vmatpush1.bf16.msra.mxu0 %v1369
    %1404 = vmatprep.subr.bf16.mxu0 0
    %1405 = vmatpush1.bf16.msra.mxu0 %v1370
    %1406 = vmatprep.subr.bf16.mxu0 0
    %1407 = vmatpush1.bf16.msra.mxu0 %v1371
    %1408 = vmatprep.subr.bf16.mxu0 0
    %1409 = vmatpush1.bf16.msra.mxu0 %v1372
    %1410 = vmatprep.subr.bf16.mxu0 0
    %1411 = vmatpush1.bf16.msra.mxu0 %v1373
    %1412 = vmatprep.subr.bf16.mxu0 0
    %1413 = vmatpush1.bf16.msra.mxu0 %v1374
    %1414 = vmatprep.subr.bf16.mxu0 0
    %1415 = vmatpush1.bf16.msra.mxu0 %v1375
    %1416 = vmatprep.subr.bf16.mxu0 0
    %1417 = vmatpush1.bf16.msra.mxu0 %v1376
    %1418 = vmatprep.subr.bf16.mxu0 0
    %1419 = vmatpush1.bf16.msra.mxu0 %v1377
    %1420 = vmatprep.subr.bf16.mxu0 0
    %1421 = vmatpush1.bf16.msra.mxu0 %v1378
    %1422 = vmatprep.subr.bf16.mxu0 0
    %1423 = vmatpush1.bf16.msra.mxu0 %v1379
    %1424 = vmatprep.subr.bf16.mxu0 0
    %1425 = vmatpush1.bf16.msra.mxu0 %v1380
    %1426 = vmatprep.subr.bf16.mxu0 0
    %1427 = vmatpush1.bf16.msra.mxu0 %v1381
    %1428 = vmatprep.subr.bf16.mxu0 0
    %1429 = vmatpush1.bf16.msra.mxu0 %v1382
    %1430 = vmatprep.subr.bf16.mxu0 0
    %1431 = vmatpush1.bf16.msra.mxu0 %v1383
    %1432 = vmatprep.mubr.bf16.mxu0 %v1264
    %1433 = vmatmul.mubr.bf16.gmra.mrb[0].mxu0 %v1263
    %v1434 = vpop.f32.mrb[0].mxu0
    %v1435 = vadd.f32 %v1302, %v1434
    %v1436 = vpop.f32.mrb[0].mxu0
    %v1437 = vpop.f32.mrb[0].mxu0
    %v1438 = vadd.f32 %v1302, %v1437
    %v1439 = vpop.f32.mrb[0].mxu0
    %1440 = vdwg.mxu0
    %v1441 = vadd.f32 %v1073, %v1435
    %v1442 = vadd.f32 %v1074, %v1438
    %v1443 = vld [vmem:[%s14] sm:$0x1]
    %v1444 = vld [vmem:[%s15] sm:$0x1]
    %1445 = vadd.xlane.f32.xlu0 %v1441
    %v1446 = vpop.xlane.xlu0 %1445
    %1447 = vadd.xlane.f32.xlu0 %v1442
    %v1448 = vpop.xlane.xlu0 %1447
    %v1449 = vmul.f32 %v1446, %v96
    %v1450 = vmul.f32 %v1448, %v96
    %v1451 = vsub.f32 %v1441, %v1449
    %v1452 = vsub.f32 %v1442, %v1450
    %v1453 = vmul.f32 %v1451, %v1451
    %v1454 = vmul.f32 %v1452, %v1452
    %1455 = vadd.xlane.f32.xlu0 %v1453
    %v1456 = vpop.xlane.xlu0 %1455
    %1457 = vadd.xlane.f32.xlu0 %v1454
    %v1458 = vpop.xlane.xlu0 %1457
    %v1459 = vmul.f32 %v1456, %v96
    %v1460 = vmul.f32 %v1458, %v96
    %v1461 = vadd.f32 %v1459, 1e-12
    %v1462 = vadd.f32 %v1460, 1e-12
    %v1463 = vrsqrt.pop %v1461
    %v1464 = vrsqrt.pop %v1462
    %v1465 = vmul.f32 %v1451, %v1463
    %v1466 = vmul.f32 %v1452, %v1464
    %v1468 = vlaneseq
    %v1469 = vshrl.u32 %v1468, 7
    %v1470 = vsub.s32 0, %v1469
    %v1471 = vrot.slane %v1443, %v1470
    %v1473 = vmul.f32 %v1465, %v1471
    %v1474 = vmul.f32 %v1466, %v1471
    %v1476 = vlaneseq
    %v1477 = vshrl.u32 %v1476, 7
    %v1478 = vsub.s32 0, %v1477
    %v1479 = vrot.slane %v1444, %v1478
    %v1481 = vadd.f32 %v1473, %v1479
    %v1482 = vadd.f32 %v1474, %v1479
    %v1483 = vpack.c.bf16 %v1482, %v1481
    %s1484 = scalar_lea.vmem [#allocation2], 192
    %v1485 = vld [vmem:[%s1484] sm:$0xff]
    %v1486 = vld [vmem:[%s1484 + $0x8] sm:$0xf]
    %v1487 = vld [vmem:[%s1484 + $0xc] sm:$0xff]
    %v1488 = vld [vmem:[%s1484 + $0x14] sm:$0xf]
    %v1489 = vld [vmem:[%s1484 + $0x18] sm:$0xff]
    %v1490 = vld [vmem:[%s1484 + $0x20] sm:$0xf]
    %v1491 = vld [vmem:[%s1484 + $0x24] sm:$0xff]
    %v1492 = vld [vmem:[%s1484 + $0x2c] sm:$0xf]
    %v1493 = vld [vmem:[%s1484 + $0x30] sm:$0xff]
    %v1494 = vld [vmem:[%s1484 + $0x38] sm:$0xf]
    %v1495 = vld [vmem:[%s1484 + $0x3c] sm:$0xff]
    %v1496 = vld [vmem:[%s1484 + $0x44] sm:$0xf]
    %v1497 = vld [vmem:[%s1484 + $0x48] sm:$0xff]
    %v1498 = vld [vmem:[%s1484 + $0x50] sm:$0xf]
    %v1499 = vld [vmem:[%s1484 + $0x54] sm:$0xff]
    %v1500 = vld [vmem:[%s1484 + $0x5c] sm:$0xf]
    %v1501 = vld [vmem:[%s1484 + $0x60] sm:$0xff]
    %v1502 = vld [vmem:[%s1484 + $0x68] sm:$0xf]
    %v1503 = vld [vmem:[%s1484 + $0x6c] sm:$0xff]
    %v1504 = vld [vmem:[%s1484 + $0x74] sm:$0xf]
    %v1505 = vld [vmem:[%s1484 + $0x78] sm:$0xff]
    %v1506 = vld [vmem:[%s1484 + $0x80] sm:$0xf]
    %v1507 = vld [vmem:[%s1484 + $0x84] sm:$0xff]
    %v1508 = vld [vmem:[%s1484 + $0x8c] sm:$0xf]
    %v1509 = vld [vmem:[%s1484 + $0x90] sm:$0xff]
    %v1510 = vld [vmem:[%s1484 + $0x98] sm:$0xf]
    %v1511 = vld [vmem:[%s1484 + $0x9c] sm:$0xff]
    %v1512 = vld [vmem:[%s1484 + $0xa4] sm:$0xf]
    %v1513 = vld [vmem:[%s1484 + $0xa8] sm:$0xff]
    %v1514 = vld [vmem:[%s1484 + $0xb0] sm:$0xf]
    %v1515 = vld [vmem:[%s1484 + $0xb4] sm:$0xff]
    %v1516 = vld [vmem:[%s1484 + $0xbc] sm:$0xf]
    %s1517 = scalar_lea.vmem %s5, 3
    %v1518 = vld [vmem:[%s1517] sm:$0x7]
    %v1520 = vlaneseq
    %v1521 = vshrl.u32 %v1520, 7
    %v1522 = vsub.s32 0, %v1521
    %v1523 = vrot.slane %v1518, %v1522
    %v1524 = vlaneseq
    %v1525 = vshrl.u32 %v1524, 7
    %v1526 = vsub.s32 1, %v1525
    %v1527 = vrot.slane %v1518, %v1526
    %v1528 = vlaneseq
    %v1529 = vshrl.u32 %v1528, 7
    %v1530 = vsub.s32 2, %v1529
    %v1531 = vrot.slane %v1518, %v1530
    %v1567 = vunpack.c.l.b16 %v1485
    %v1568 = vunpack.c.h.b16 %v1485
    %v1569 = vunpack.c.l.b16 %v1486
    %v1570 = vunpack.c.l.b16 %v1487
    %v1571 = vunpack.c.h.b16 %v1487
    %v1572 = vunpack.c.l.b16 %v1488
    %v1573 = vunpack.c.l.b16 %v1489
    %v1574 = vunpack.c.h.b16 %v1489
    %v1575 = vunpack.c.l.b16 %v1490
    %v1576 = vunpack.c.l.b16 %v1491
    %v1577 = vunpack.c.h.b16 %v1491
    %v1578 = vunpack.c.l.b16 %v1492
    %v1579 = vunpack.c.l.b16 %v1493
    %v1580 = vunpack.c.h.b16 %v1493
    %v1581 = vunpack.c.l.b16 %v1494
    %v1582 = vunpack.c.l.b16 %v1495
    %v1583 = vunpack.c.h.b16 %v1495
    %v1584 = vunpack.c.l.b16 %v1496
    %v1585 = vunpack.c.l.b16 %v1497
    %v1586 = vunpack.c.h.b16 %v1497
    %v1587 = vunpack.c.l.b16 %v1498
    %v1588 = vunpack.c.l.b16 %v1499
    %v1589 = vunpack.c.h.b16 %v1499
    %v1590 = vunpack.c.l.b16 %v1500
    %v1591 = vunpack.c.l.b16 %v1501
    %v1592 = vunpack.c.h.b16 %v1501
    %v1593 = vunpack.c.l.b16 %v1502
    %v1594 = vunpack.c.l.b16 %v1503
    %v1595 = vunpack.c.h.b16 %v1503
    %v1596 = vunpack.c.l.b16 %v1504
    %v1597 = vunpack.c.l.b16 %v1505
    %v1598 = vunpack.c.h.b16 %v1505
    %v1599 = vunpack.c.l.b16 %v1506
    %v1600 = vunpack.c.l.b16 %v1507
    %v1601 = vunpack.c.h.b16 %v1507
    %v1602 = vunpack.c.l.b16 %v1508
    %v1603 = vunpack.c.l.b16 %v1509
    %v1604 = vunpack.c.h.b16 %v1509
    %v1605 = vunpack.c.l.b16 %v1510
    %v1606 = vunpack.c.l.b16 %v1511
    %v1607 = vunpack.c.h.b16 %v1511
    %v1608 = vunpack.c.l.b16 %v1512
    %v1609 = vunpack.c.l.b16 %v1513
    %v1610 = vunpack.c.h.b16 %v1513
    %v1611 = vunpack.c.l.b16 %v1514
    %v1612 = vunpack.c.l.b16 %v1515
    %v1613 = vunpack.c.h.b16 %v1515
    %v1614 = vunpack.c.l.b16 %v1516
    %v1615 = vpack.c.b16 %v1570, %v1567
    %v1616 = vpack.c.b16 %v1571, %v1568
    %v1617 = vpack.c.b16 %v1572, %v1569
    %v1618 = vpack.c.b16 %v1576, %v1573
    %v1619 = vpack.c.b16 %v1577, %v1574
    %v1620 = vpack.c.b16 %v1578, %v1575
    %v1621 = vpack.c.b16 %v1582, %v1579
    %v1622 = vpack.c.b16 %v1583, %v1580
    %v1623 = vpack.c.b16 %v1584, %v1581
    %v1624 = vpack.c.b16 %v1588, %v1585
    %v1625 = vpack.c.b16 %v1589, %v1586
    %v1626 = vpack.c.b16 %v1590, %v1587
    %v1627 = vpack.c.b16 %v1594, %v1591
    %v1628 = vpack.c.b16 %v1595, %v1592
    %v1629 = vpack.c.b16 %v1596, %v1593
    %v1630 = vpack.c.b16 %v1600, %v1597
    %v1631 = vpack.c.b16 %v1601, %v1598
    %v1632 = vpack.c.b16 %v1602, %v1599
    %v1633 = vpack.c.b16 %v1606, %v1603
    %v1634 = vpack.c.b16 %v1607, %v1604
    %v1635 = vpack.c.b16 %v1608, %v1605
    %v1636 = vpack.c.b16 %v1612, %v1609
    %v1637 = vpack.c.b16 %v1613, %v1610
    %v1638 = vpack.c.b16 %v1614, %v1611
    %1663 = vmatprep.subr.bf16.mxu0 %v1616
    %1664 = vmatpush1.bf16.msra.mxu0 %v1615
    %1665 = vmatprep.subr.bf16.mxu0 %v1619
    %1666 = vmatpush1.bf16.msra.mxu0 %v1618
    %1667 = vmatprep.subr.bf16.mxu0 %v1622
    %1668 = vmatpush1.bf16.msra.mxu0 %v1621
    %1669 = vmatprep.subr.bf16.mxu0 %v1625
    %1670 = vmatpush1.bf16.msra.mxu0 %v1624
    %1671 = vmatprep.subr.bf16.mxu0 %v1628
    %1672 = vmatpush1.bf16.msra.mxu0 %v1627
    %1673 = vmatprep.subr.bf16.mxu0 %v1631
    %1674 = vmatpush1.bf16.msra.mxu0 %v1630
    %1675 = vmatprep.subr.bf16.mxu0 %v1634
    %1676 = vmatpush1.bf16.msra.mxu0 %v1633
    %1677 = vmatprep.subr.bf16.mxu0 %v1637
    %1678 = vmatpush1.bf16.msra.mxu0 %v1636
    %1679 = vmatprep.subr.bf16.mxu0 0
    %1680 = vmatpush1.bf16.msra.mxu0 0
    %1681 = vmatprep.subr.bf16.mxu0 0
    %1682 = vmatpush1.bf16.msra.mxu0 0
    %1683 = vmatprep.subr.bf16.mxu0 0
    %1684 = vmatpush1.bf16.msra.mxu0 0
    %1685 = vmatprep.subr.bf16.mxu0 0
    %1686 = vmatpush1.bf16.msra.mxu0 0
    %1687 = vmatprep.subr.bf16.mxu0 0
    %1688 = vmatpush1.bf16.msra.mxu0 0
    %1689 = vmatprep.subr.bf16.mxu0 0
    %1690 = vmatpush1.bf16.msra.mxu0 0
    %1691 = vmatprep.subr.bf16.mxu0 0
    %1692 = vmatpush1.bf16.msra.mxu0 0
    %1693 = vmatprep.subr.bf16.mxu0 0
    %1694 = vmatpush1.bf16.msra.mxu0 0
    %1695 = vmatprep.mubr.bf16.mxu0 0
    %1696 = vmatmul.mubr.bf16.gmra.mrb[0].mxu0 %v1483
    %v1697 = vpop.f32.mrb[0].mxu0
    %v1698 = vadd.f32 %v1523, %v1697
    %v1699 = vpop.f32.mrb[0].mxu0
    %v1700 = vadd.f32 %v1527, %v1699
    %v1701 = vpop.f32.mrb[0].mxu0
    %v1702 = vadd.f32 %v1523, %v1701
    %v1703 = vpop.f32.mrb[0].mxu0
    %v1704 = vadd.f32 %v1527, %v1703
    %1705 = vdwg.mxu0
    %1706 = vmatprep.subr.bf16.mxu0 0
    %1707 = vmatpush1.bf16.msra.mxu0 %v1617
    %1708 = vmatprep.subr.bf16.mxu0 0
    %1709 = vmatpush1.bf16.msra.mxu0 %v1620
    %1710 = vmatprep.subr.bf16.mxu0 0
    %1711 = vmatpush1.bf16.msra.mxu0 %v1623
    %1712 = vmatprep.subr.bf16.mxu0 0
    %1713 = vmatpush1.bf16.msra.mxu0 %v1626
    %1714 = vmatprep.subr.bf16.mxu0 0
    %1715 = vmatpush1.bf16.msra.mxu0 %v1629
    %1716 = vmatprep.subr.bf16.mxu0 0
    %1717 = vmatpush1.bf16.msra.mxu0 %v1632
    %1718 = vmatprep.subr.bf16.mxu0 0
    %1719 = vmatpush1.bf16.msra.mxu0 %v1635
    %1720 = vmatprep.subr.bf16.mxu0 0
    %1721 = vmatpush1.bf16.msra.mxu0 %v1638
    %1722 = vmatprep.subr.bf16.mxu0 0
    %1723 = vmatpush1.bf16.msra.mxu0 0
    %1724 = vmatprep.subr.bf16.mxu0 0
    %1725 = vmatpush1.bf16.msra.mxu0 0
    %1726 = vmatprep.subr.bf16.mxu0 0
    %1727 = vmatpush1.bf16.msra.mxu0 0
    %1728 = vmatprep.subr.bf16.mxu0 0
    %1729 = vmatpush1.bf16.msra.mxu0 0
    %1730 = vmatprep.subr.bf16.mxu0 0
    %1731 = vmatpush1.bf16.msra.mxu0 0
    %1732 = vmatprep.subr.bf16.mxu0 0
    %1733 = vmatpush1.bf16.msra.mxu0 0
    %1734 = vmatprep.subr.bf16.mxu0 0
    %1735 = vmatpush1.bf16.msra.mxu0 0
    %1736 = vmatprep.subr.bf16.mxu0 0
    %1737 = vmatpush1.bf16.msra.mxu0 0
    %1738 = vmatprep.mubr.bf16.mxu0 0
    %1739 = vmatmul.mubr.bf16.gmra.mrb[0].mxu0 %v1483
    %v1740 = vpop.f32.mrb[0].mxu0
    %v1741 = vadd.f32 %v1531, %v1740
    %v1742 = vpop.f32.mrb[0].mxu0
    %v1743 = vpop.f32.mrb[0].mxu0
    %v1744 = vadd.f32 %v1531, %v1743
    %v1745 = vpop.f32.mrb[0].mxu0
    %1746 = vdwg.mxu0
    %v1747 = vpack.c.bf16 %v1702, %v1698
    %v1748 = vpack.c.bf16 %v1704, %v1700
    %v1749 = vpack.c.bf16 %v1744, %v1741
    %v1751 = vsel %vm398, %v1747, 0
    %v1754 = vsel %vm398, %v1748, 0
    %1756 = vmatprep.subr.bf16.mxu0 0
    %1757 = vmatpush1.bf16.xpose.msra.mxu0 %v1754
    %1758 = vmatprep.subr.bf16.mxu0 0
    %1759 = vmatpush1.bf16.xpose.msra.mxu0 0
    %1760 = vmatprep.subr.bf16.mxu0 0
    %1761 = vmatpush1.bf16.xpose.msra.mxu0 0
    %1762 = vmatprep.subr.bf16.mxu0 0
    %1763 = vmatpush1.bf16.xpose.msra.mxu0 0
    %1764 = vmatprep.subr.bf16.mxu0 0
    %1765 = vmatpush1.bf16.xpose.msra.mxu0 0
    %1766 = vmatprep.subr.bf16.mxu0 0
    %1767 = vmatpush1.bf16.xpose.msra.mxu0 0
    %1768 = vmatprep.subr.bf16.mxu0 0
    %1769 = vmatpush1.bf16.xpose.msra.mxu0 0
    %1770 = vmatprep.subr.bf16.mxu0 0
    %1771 = vmatpush1.bf16.xpose.msra.mxu0 0
    %1772 = vmatprep.subr.bf16.mxu0 0
    %1773 = vmatpush1.bf16.xpose.msra.mxu0 0
    %1774 = vmatprep.subr.bf16.mxu0 0
    %1775 = vmatpush1.bf16.xpose.msra.mxu0 0
    %1776 = vmatprep.subr.bf16.mxu0 0
    %1777 = vmatpush1.bf16.xpose.msra.mxu0 0
    %1778 = vmatprep.subr.bf16.mxu0 0
    %1779 = vmatpush1.bf16.xpose.msra.mxu0 0
    %1780 = vmatprep.subr.bf16.mxu0 0
    %1781 = vmatpush1.bf16.xpose.msra.mxu0 0
    %1782 = vmatprep.subr.bf16.mxu0 0
    %1783 = vmatpush1.bf16.xpose.msra.mxu0 0
    %1784 = vmatprep.subr.bf16.mxu0 0
    %1785 = vmatpush1.bf16.xpose.msra.mxu0 0
    %1786 = vmatprep.subr.bf16.mxu0 0
    %1787 = vmatpush1.bf16.xpose.msra.mxu0 0
    %1788 = vmatprep.mubr.bf16.mxu0 0
    %1789 = vmatmul.mubr.bf16.gmra.mrb[0].mxu0 %v1751
    %v1790 = vpop.f32.mrb[0].mxu0
    %v1791 = vadd.f32 0.0, %v1790
    %v1792 = vpop.f32.mrb[0].mxu0
    %v1793 = vpop.f32.mrb[0].mxu0
    %v1794 = vadd.f32 0.0, %v1793
    %v1795 = vpop.f32.mrb[0].mxu0
    %1796 = vdwg.mxu0
    %1798 = vrot.lane.b32.xlu0 %v1747, 96
    %v1799 = vpop.permute.xlu0 %1798
    %1801 = vrot.lane.b32.xlu0 %v1748, 96
    %v1802 = vpop.permute.xlu0 %1801
    %v1804 = vsel %vm398, %v1799, 0
    %v1807 = vsel %vm398, %v1802, 0
    %1809 = vmatprep.subr.bf16.mxu0 0
    %1810 = vmatpush1.bf16.xpose.msra.mxu0 %v1807
    %1811 = vmatprep.subr.bf16.mxu0 0
    %1812 = vmatpush1.bf16.xpose.msra.mxu0 0
    %1813 = vmatprep.subr.bf16.mxu0 0
    %1814 = vmatpush1.bf16.xpose.msra.mxu0 0
    %1815 = vmatprep.subr.bf16.mxu0 0
    %1816 = vmatpush1.bf16.xpose.msra.mxu0 0
    %1817 = vmatprep.subr.bf16.mxu0 0
    %1818 = vmatpush1.bf16.xpose.msra.mxu0 0
    %1819 = vmatprep.subr.bf16.mxu0 0
    %1820 = vmatpush1.bf16.xpose.msra.mxu0 0
    %1821 = vmatprep.subr.bf16.mxu0 0
    %1822 = vmatpush1.bf16.xpose.msra.mxu0 0
    %1823 = vmatprep.subr.bf16.mxu0 0
    %1824 = vmatpush1.bf16.xpose.msra.mxu0 0
    %1825 = vmatprep.subr.bf16.mxu0 0
    %1826 = vmatpush1.bf16.xpose.msra.mxu0 0
    %1827 = vmatprep.subr.bf16.mxu0 0
    %1828 = vmatpush1.bf16.xpose.msra.mxu0 0
    %1829 = vmatprep.subr.bf16.mxu0 0
    %1830 = vmatpush1.bf16.xpose.msra.mxu0 0
    %1831 = vmatprep.subr.bf16.mxu0 0
    %1832 = vmatpush1.bf16.xpose.msra.mxu0 0
    %1833 = vmatprep.subr.bf16.mxu0 0
    %1834 = vmatpush1.bf16.xpose.msra.mxu0 0
    %1835 = vmatprep.subr.bf16.mxu0 0
    %1836 = vmatpush1.bf16.xpose.msra.mxu0 0
    %1837 = vmatprep.subr.bf16.mxu0 0
    %1838 = vmatpush1.bf16.xpose.msra.mxu0 0
    %1839 = vmatprep.subr.bf16.mxu0 0
    %1840 = vmatpush1.bf16.xpose.msra.mxu0 0
    %1841 = vmatprep.mubr.bf16.mxu0 0
    %1842 = vmatmul.mubr.bf16.gmra.mrb[0].mxu0 %v1804
    %v1843 = vpop.f32.mrb[0].mxu0
    %v1844 = vadd.f32 0.0, %v1843
    %v1845 = vpop.f32.mrb[0].mxu0
    %v1846 = vpop.f32.mrb[0].mxu0
    %v1847 = vadd.f32 0.0, %v1846
    %v1848 = vpop.f32.mrb[0].mxu0
    %1849 = vdwg.mxu0
    %1850 = vrot.lane.b32.xlu0 %v1747, 64
    %v1851 = vpop.permute.xlu0 %1850
    %1852 = vrot.lane.b32.xlu0 %v1748, 64
    %v1853 = vpop.permute.xlu0 %1852
    %v1855 = vsel %vm398, %v1851, 0
    %v1858 = vsel %vm398, %v1853, 0
    %1860 = vmatprep.subr.bf16.mxu0 0
    %1861 = vmatpush1.bf16.xpose.msra.mxu0 %v1858
    %1862 = vmatprep.subr.bf16.mxu0 0
    %1863 = vmatpush1.bf16.xpose.msra.mxu0 0
    %1864 = vmatprep.subr.bf16.mxu0 0
    %1865 = vmatpush1.bf16.xpose.msra.mxu0 0
    %1866 = vmatprep.subr.bf16.mxu0 0
    %1867 = vmatpush1.bf16.xpose.msra.mxu0 0
    %1868 = vmatprep.subr.bf16.mxu0 0
    %1869 = vmatpush1.bf16.xpose.msra.mxu0 0
    %1870 = vmatprep.subr.bf16.mxu0 0
    %1871 = vmatpush1.bf16.xpose.msra.mxu0 0
    %1872 = vmatprep.subr.bf16.mxu0 0
    %1873 = vmatpush1.bf16.xpose.msra.mxu0 0
    %1874 = vmatprep.subr.bf16.mxu0 0
    %1875 = vmatpush1.bf16.xpose.msra.mxu0 0
    %1876 = vmatprep.subr.bf16.mxu0 0
    %1877 = vmatpush1.bf16.xpose.msra.mxu0 0
    %1878 = vmatprep.subr.bf16.mxu0 0
    %1879 = vmatpush1.bf16.xpose.msra.mxu0 0
    %1880 = vmatprep.subr.bf16.mxu0 0
    %1881 = vmatpush1.bf16.xpose.msra.mxu0 0
    %1882 = vmatprep.subr.bf16.mxu0 0
    %1883 = vmatpush1.bf16.xpose.msra.mxu0 0
    %1884 = vmatprep.subr.bf16.mxu0 0
    %1885 = vmatpush1.bf16.xpose.msra.mxu0 0
    %1886 = vmatprep.subr.bf16.mxu0 0
    %1887 = vmatpush1.bf16.xpose.msra.mxu0 0
    %1888 = vmatprep.subr.bf16.mxu0 0
    %1889 = vmatpush1.bf16.xpose.msra.mxu0 0
    %1890 = vmatprep.subr.bf16.mxu0 0
    %1891 = vmatpush1.bf16.xpose.msra.mxu0 0
    %1892 = vmatprep.mubr.bf16.mxu0 0
    %1893 = vmatmul.mubr.bf16.gmra.mrb[0].mxu0 %v1855
    %v1894 = vpop.f32.mrb[0].mxu0
    %v1895 = vadd.f32 0.0, %v1894
    %v1896 = vpop.f32.mrb[0].mxu0
    %v1897 = vpop.f32.mrb[0].mxu0
    %v1898 = vadd.f32 0.0, %v1897
    %v1899 = vpop.f32.mrb[0].mxu0
    %1900 = vdwg.mxu0
    %1901 = vrot.lane.b32.xlu0 %v1747, 32
    %v1902 = vpop.permute.xlu0 %1901
    %1903 = vrot.lane.b32.xlu0 %v1748, 32
    %v1904 = vpop.permute.xlu0 %1903
    %v1906 = vsel %vm398, %v1902, 0
    %v1909 = vsel %vm398, %v1904, 0
    %1911 = vmatprep.subr.bf16.mxu0 0
    %1912 = vmatpush1.bf16.xpose.msra.mxu0 %v1909
    %1913 = vmatprep.subr.bf16.mxu0 0
    %1914 = vmatpush1.bf16.xpose.msra.mxu0 0
    %1915 = vmatprep.subr.bf16.mxu0 0
    %1916 = vmatpush1.bf16.xpose.msra.mxu0 0
    %1917 = vmatprep.subr.bf16.mxu0 0
    %1918 = vmatpush1.bf16.xpose.msra.mxu0 0
    %1919 = vmatprep.subr.bf16.mxu0 0
    %1920 = vmatpush1.bf16.xpose.msra.mxu0 0
    %1921 = vmatprep.subr.bf16.mxu0 0
    %1922 = vmatpush1.bf16.xpose.msra.mxu0 0
    %1923 = vmatprep.subr.bf16.mxu0 0
    %1924 = vmatpush1.bf16.xpose.msra.mxu0 0
    %1925 = vmatprep.subr.bf16.mxu0 0
    %1926 = vmatpush1.bf16.xpose.msra.mxu0 0
    %1927 = vmatprep.subr.bf16.mxu0 0
    %1928 = vmatpush1.bf16.xpose.msra.mxu0 0
    %1929 = vmatprep.subr.bf16.mxu0 0
    %1930 = vmatpush1.bf16.xpose.msra.mxu0 0
    %1931 = vmatprep.subr.bf16.mxu0 0
    %1932 = vmatpush1.bf16.xpose.msra.mxu0 0
    %1933 = vmatprep.subr.bf16.mxu0 0
    %1934 = vmatpush1.bf16.xpose.msra.mxu0 0
    %1935 = vmatprep.subr.bf16.mxu0 0
    %1936 = vmatpush1.bf16.xpose.msra.mxu0 0
    %1937 = vmatprep.subr.bf16.mxu0 0
    %1938 = vmatpush1.bf16.xpose.msra.mxu0 0
    %1939 = vmatprep.subr.bf16.mxu0 0
    %1940 = vmatpush1.bf16.xpose.msra.mxu0 0
    %1941 = vmatprep.subr.bf16.mxu0 0
    %1942 = vmatpush1.bf16.xpose.msra.mxu0 0
    %1943 = vmatprep.mubr.bf16.mxu0 0
    %1944 = vmatmul.mubr.bf16.gmra.mrb[0].mxu0 %v1906
    %v1945 = vpop.f32.mrb[0].mxu0
    %v1946 = vadd.f32 0.0, %v1945
    %v1947 = vpop.f32.mrb[0].mxu0
    %v1948 = vpop.f32.mrb[0].mxu0
    %v1949 = vadd.f32 0.0, %v1948
    %v1950 = vpop.f32.mrb[0].mxu0
    %1951 = vdwg.mxu0
    %v1952 = vadd.f32 %v1791, %v131
    %v1953 = vadd.f32 %v1794, %v132
    %v1954 = vadd.f32 %v1844, %v131
    %v1955 = vadd.f32 %v1847, %v132
    %v1956 = vadd.f32 %v1895, %v131
    %v1957 = vadd.f32 %v1898, %v132
    %v1958 = vadd.f32 %v1946, %v131
    %v1959 = vadd.f32 %v1949, %v132
    %v1960 = vsel %vm609, %v1952, -inf
    %1961 = vmax.xlane.f32.xlu0 %v1960
    %v1962 = vpop.xlane.xlu0 %1961
    %v1963 = vsel %vm609, %v1953, -inf
    %1964 = vmax.xlane.f32.xlu0 %v1963
    %v1965 = vpop.xlane.xlu0 %1964
    %v1966 = vsel %vm609, %v1954, -inf
    %1967 = vmax.xlane.f32.xlu0 %v1966
    %v1968 = vpop.xlane.xlu0 %1967
    %v1969 = vsel %vm609, %v1955, -inf
    %1970 = vmax.xlane.f32.xlu0 %v1969
    %v1971 = vpop.xlane.xlu0 %1970
    %v1972 = vsel %vm609, %v1956, -inf
    %1973 = vmax.xlane.f32.xlu0 %v1972
    %v1974 = vpop.xlane.xlu0 %1973
    %v1975 = vsel %vm609, %v1957, -inf
    %1976 = vmax.xlane.f32.xlu0 %v1975
    %v1977 = vpop.xlane.xlu0 %1976
    %v1978 = vsel %vm609, %v1958, -inf
    %1979 = vmax.xlane.f32.xlu0 %v1978
    %v1980 = vpop.xlane.xlu0 %1979
    %v1981 = vsel %vm609, %v1959, -inf
    %1982 = vmax.xlane.f32.xlu0 %v1981
    %v1983 = vpop.xlane.xlu0 %1982
    %v1984 = vsub.f32 %v1952, %v1962
    %v1985 = vsub.f32 %v1953, %v1965
    %v1986 = vsub.f32 %v1954, %v1968
    %v1987 = vsub.f32 %v1955, %v1971
    %v1988 = vsub.f32 %v1956, %v1974
    %v1989 = vsub.f32 %v1957, %v1977
    %v1990 = vsub.f32 %v1958, %v1980
    %v1991 = vsub.f32 %v1959, %v1983
    %v1992 = vmul.f32 %v1984, 1.442695
    %v1993 = vpow.pop %v1992
    %v1994 = vmul.f32 %v1985, 1.442695
    %v1995 = vpow.pop %v1994
    %v1996 = vmul.f32 %v1986, 1.442695
    %v1997 = vpow.pop %v1996
    %v1998 = vmul.f32 %v1987, 1.442695
    %v1999 = vpow.pop %v1998
    %v2000 = vmul.f32 %v1988, 1.442695
    %v2001 = vpow.pop %v2000
    %v2002 = vmul.f32 %v1989, 1.442695
    %v2003 = vpow.pop %v2002
    %v2004 = vmul.f32 %v1990, 1.442695
    %v2005 = vpow.pop %v2004
    %v2006 = vmul.f32 %v1991, 1.442695
    %v2007 = vpow.pop %v2006
    %v2008 = vsel %vm609, %v1993, 0.0
    %2009 = vadd.xlane.f32.xlu0 %v2008
    %v2010 = vpop.xlane.xlu0 %2009
    %v2011 = vsel %vm609, %v1995, 0.0
    %2012 = vadd.xlane.f32.xlu0 %v2011
    %v2013 = vpop.xlane.xlu0 %2012
    %v2014 = vsel %vm609, %v1997, 0.0
    %2015 = vadd.xlane.f32.xlu0 %v2014
    %v2016 = vpop.xlane.xlu0 %2015
    %v2017 = vsel %vm609, %v1999, 0.0
    %2018 = vadd.xlane.f32.xlu0 %v2017
    %v2019 = vpop.xlane.xlu0 %2018
    %v2020 = vsel %vm609, %v2001, 0.0
    %2021 = vadd.xlane.f32.xlu0 %v2020
    %v2022 = vpop.xlane.xlu0 %2021
    %v2023 = vsel %vm609, %v2003, 0.0
    %2024 = vadd.xlane.f32.xlu0 %v2023
    %v2025 = vpop.xlane.xlu0 %2024
    %v2026 = vsel %vm609, %v2005, 0.0
    %2027 = vadd.xlane.f32.xlu0 %v2026
    %v2028 = vpop.xlane.xlu0 %2027
    %v2029 = vsel %vm609, %v2007, 0.0
    %2030 = vadd.xlane.f32.xlu0 %v2029
    %v2031 = vpop.xlane.xlu0 %2030
    %v2032 = vrcp.pop %v2010
    %v2033 = vrcp.pop %v2013
    %v2034 = vrcp.pop %v2016
    %v2035 = vrcp.pop %v2019
    %v2036 = vrcp.pop %v2022
    %v2037 = vrcp.pop %v2025
    %v2038 = vrcp.pop %v2028
    %v2039 = vrcp.pop %v2031
    %v2040 = vmul.f32 %v1993, %v2032
    %v2041 = vmul.f32 %v1995, %v2033
    %v2042 = vmul.f32 %v1997, %v2034
    %v2043 = vmul.f32 %v1999, %v2035
    %v2044 = vmul.f32 %v2001, %v2036
    %v2045 = vmul.f32 %v2003, %v2037
    %v2046 = vmul.f32 %v2005, %v2038
    %v2047 = vmul.f32 %v2007, %v2039
    %v2048 = vpack.c.bf16 %v2041, %v2040
    %v2049 = vpack.c.bf16 %v2043, %v2042
    %v2050 = vpack.c.bf16 %v2045, %v2044
    %v2051 = vpack.c.bf16 %v2047, %v2046
    %v2053 = vsel %vm609, %v2048, 0
    %2055 = vmatprep.subr.bf16.mxu0 0
    %2056 = vmatpush1.bf16.msra.mxu0 %v1749
    %2057 = vmatprep.subr.bf16.mxu0 0
    %2058 = vmatpush1.bf16.msra.mxu0 0
    %2059 = vmatprep.subr.bf16.mxu0 0
    %2060 = vmatpush1.bf16.msra.mxu0 0
    %2061 = vmatprep.subr.bf16.mxu0 0
    %2062 = vmatpush1.bf16.msra.mxu0 0
    %2063 = vmatprep.subr.bf16.mxu0 0
    %2064 = vmatpush1.bf16.msra.mxu0 0
    %2065 = vmatprep.subr.bf16.mxu0 0
    %2066 = vmatpush1.bf16.msra.mxu0 0
    %2067 = vmatprep.subr.bf16.mxu0 0
    %2068 = vmatpush1.bf16.msra.mxu0 0
    %2069 = vmatprep.subr.bf16.mxu0 0
    %2070 = vmatpush1.bf16.msra.mxu0 0
    %2071 = vmatprep.subr.bf16.mxu0 0
    %2072 = vmatpush1.bf16.msra.mxu0 0
    %2073 = vmatprep.subr.bf16.mxu0 0
    %2074 = vmatpush1.bf16.msra.mxu0 0
    %2075 = vmatprep.subr.bf16.mxu0 0
    %2076 = vmatpush1.bf16.msra.mxu0 0
    %2077 = vmatprep.subr.bf16.mxu0 0
    %2078 = vmatpush1.bf16.msra.mxu0 0
    %2079 = vmatprep.subr.bf16.mxu0 0
    %2080 = vmatpush1.bf16.msra.mxu0 0
    %2081 = vmatprep.subr.bf16.mxu0 0
    %2082 = vmatpush1.bf16.msra.mxu0 0
    %2083 = vmatprep.subr.bf16.mxu0 0
    %2084 = vmatpush1.bf16.msra.mxu0 0
    %2085 = vmatprep.subr.bf16.mxu0 0
    %2086 = vmatpush1.bf16.msra.mxu0 0
    %2087 = vmatprep.mubr.bf16.mxu0 0
    %2088 = vmatmul.mubr.bf16.gmra.mrb[0].mxu0 %v2053
    %v2089 = vpop.f32.mrb[0].mxu0
    %v2090 = vadd.f32 0.0, %v2089
    %v2091 = vpop.f32.mrb[0].mxu0
    %v2092 = vpop.f32.mrb[0].mxu0
    %v2093 = vadd.f32 0.0, %v2092
    %v2094 = vpop.f32.mrb[0].mxu0
    %2095 = vdwg.mxu0
    %2097 = vrot.lane.b32.xlu0 %v1749, 96
    %v2098 = vpop.permute.xlu0 %2097
    %v2101 = vsel %vm609, %v2049, 0
    %2103 = vmatprep.subr.bf16.mxu0 0
    %2104 = vmatpush1.bf16.msra.mxu0 %v2098
    %2105 = vmatprep.subr.bf16.mxu0 0
    %2106 = vmatpush1.bf16.msra.mxu0 0
    %2107 = vmatprep.subr.bf16.mxu0 0
    %2108 = vmatpush1.bf16.msra.mxu0 0
    %2109 = vmatprep.subr.bf16.mxu0 0
    %2110 = vmatpush1.bf16.msra.mxu0 0
    %2111 = vmatprep.subr.bf16.mxu0 0
    %2112 = vmatpush1.bf16.msra.mxu0 0
    %2113 = vmatprep.subr.bf16.mxu0 0
    %2114 = vmatpush1.bf16.msra.mxu0 0
    %2115 = vmatprep.subr.bf16.mxu0 0
    %2116 = vmatpush1.bf16.msra.mxu0 0
    %2117 = vmatprep.subr.bf16.mxu0 0
    %2118 = vmatpush1.bf16.msra.mxu0 0
    %2119 = vmatprep.subr.bf16.mxu0 0
    %2120 = vmatpush1.bf16.msra.mxu0 0
    %2121 = vmatprep.subr.bf16.mxu0 0
    %2122 = vmatpush1.bf16.msra.mxu0 0
    %2123 = vmatprep.subr.bf16.mxu0 0
    %2124 = vmatpush1.bf16.msra.mxu0 0
    %2125 = vmatprep.subr.bf16.mxu0 0
    %2126 = vmatpush1.bf16.msra.mxu0 0
    %2127 = vmatprep.subr.bf16.mxu0 0
    %2128 = vmatpush1.bf16.msra.mxu0 0
    %2129 = vmatprep.subr.bf16.mxu0 0
    %2130 = vmatpush1.bf16.msra.mxu0 0
    %2131 = vmatprep.subr.bf16.mxu0 0
    %2132 = vmatpush1.bf16.msra.mxu0 0
    %2133 = vmatprep.subr.bf16.mxu0 0
    %2134 = vmatpush1.bf16.msra.mxu0 0
    %2135 = vmatprep.mubr.bf16.mxu0 0
    %2136 = vmatmul.mubr.bf16.gmra.mrb[0].mxu0 %v2101
    %v2137 = vpop.f32.mrb[0].mxu0
    %v2138 = vadd.f32 0.0, %v2137
    %v2139 = vpop.f32.mrb[0].mxu0
    %v2140 = vpop.f32.mrb[0].mxu0
    %v2141 = vadd.f32 0.0, %v2140
    %v2142 = vpop.f32.mrb[0].mxu0
    %2143 = vdwg.mxu0
    %2144 = vrot.lane.b32.xlu0 %v1749, 64
    %v2145 = vpop.permute.xlu0 %2144
    %v2148 = vsel %vm609, %v2050, 0
    %2150 = vmatprep.subr.bf16.mxu0 0
    %2151 = vmatpush1.bf16.msra.mxu0 %v2145
    %2152 = vmatprep.subr.bf16.mxu0 0
    %2153 = vmatpush1.bf16.msra.mxu0 0
    %2154 = vmatprep.subr.bf16.mxu0 0
    %2155 = vmatpush1.bf16.msra.mxu0 0
    %2156 = vmatprep.subr.bf16.mxu0 0
    %2157 = vmatpush1.bf16.msra.mxu0 0
    %2158 = vmatprep.subr.bf16.mxu0 0
    %2159 = vmatpush1.bf16.msra.mxu0 0
    %2160 = vmatprep.subr.bf16.mxu0 0
    %2161 = vmatpush1.bf16.msra.mxu0 0
    %2162 = vmatprep.subr.bf16.mxu0 0
    %2163 = vmatpush1.bf16.msra.mxu0 0
    %2164 = vmatprep.subr.bf16.mxu0 0
    %2165 = vmatpush1.bf16.msra.mxu0 0
    %2166 = vmatprep.subr.bf16.mxu0 0
    %2167 = vmatpush1.bf16.msra.mxu0 0
    %2168 = vmatprep.subr.bf16.mxu0 0
    %2169 = vmatpush1.bf16.msra.mxu0 0
    %2170 = vmatprep.subr.bf16.mxu0 0
    %2171 = vmatpush1.bf16.msra.mxu0 0
    %2172 = vmatprep.subr.bf16.mxu0 0
    %2173 = vmatpush1.bf16.msra.mxu0 0
    %2174 = vmatprep.subr.bf16.mxu0 0
    %2175 = vmatpush1.bf16.msra.mxu0 0
    %2176 = vmatprep.subr.bf16.mxu0 0
    %2177 = vmatpush1.bf16.msra.mxu0 0
    %2178 = vmatprep.subr.bf16.mxu0 0
    %2179 = vmatpush1.bf16.msra.mxu0 0
    %2180 = vmatprep.subr.bf16.mxu0 0
    %2181 = vmatpush1.bf16.msra.mxu0 0
    %2182 = vmatprep.mubr.bf16.mxu0 0
    %2183 = vmatmul.mubr.bf16.gmra.mrb[0].mxu0 %v2148
    %v2184 = vpop.f32.mrb[0].mxu0
    %v2185 = vadd.f32 0.0, %v2184
    %v2186 = vpop.f32.mrb[0].mxu0
    %v2187 = vpop.f32.mrb[0].mxu0
    %v2188 = vadd.f32 0.0, %v2187
    %v2189 = vpop.f32.mrb[0].mxu0
    %2190 = vdwg.mxu0
    %2191 = vrot.lane.b32.xlu0 %v1749, 32
    %v2192 = vpop.permute.xlu0 %2191
    %v2195 = vsel %vm609, %v2051, 0
    %2197 = vmatprep.subr.bf16.mxu0 0
    %2198 = vmatpush1.bf16.msra.mxu0 %v2192
    %2199 = vmatprep.subr.bf16.mxu0 0
    %2200 = vmatpush1.bf16.msra.mxu0 0
    %2201 = vmatprep.subr.bf16.mxu0 0
    %2202 = vmatpush1.bf16.msra.mxu0 0
    %2203 = vmatprep.subr.bf16.mxu0 0
    %2204 = vmatpush1.bf16.msra.mxu0 0
    %2205 = vmatprep.subr.bf16.mxu0 0
    %2206 = vmatpush1.bf16.msra.mxu0 0
    %2207 = vmatprep.subr.bf16.mxu0 0
    %2208 = vmatpush1.bf16.msra.mxu0 0
    %2209 = vmatprep.subr.bf16.mxu0 0
    %2210 = vmatpush1.bf16.msra.mxu0 0
    %2211 = vmatprep.subr.bf16.mxu0 0
    %2212 = vmatpush1.bf16.msra.mxu0 0
    %2213 = vmatprep.subr.bf16.mxu0 0
    %2214 = vmatpush1.bf16.msra.mxu0 0
    %2215 = vmatprep.subr.bf16.mxu0 0
    %2216 = vmatpush1.bf16.msra.mxu0 0
    %2217 = vmatprep.subr.bf16.mxu0 0
    %2218 = vmatpush1.bf16.msra.mxu0 0
    %2219 = vmatprep.subr.bf16.mxu0 0
    %2220 = vmatpush1.bf16.msra.mxu0 0
    %2221 = vmatprep.subr.bf16.mxu0 0
    %2222 = vmatpush1.bf16.msra.mxu0 0
    %2223 = vmatprep.subr.bf16.mxu0 0
    %2224 = vmatpush1.bf16.msra.mxu0 0
    %2225 = vmatprep.subr.bf16.mxu0 0
    %2226 = vmatpush1.bf16.msra.mxu0 0
    %2227 = vmatprep.subr.bf16.mxu0 0
    %2228 = vmatpush1.bf16.msra.mxu0 0
    %2229 = vmatprep.mubr.bf16.mxu0 0
    %2230 = vmatmul.mubr.bf16.gmra.mrb[0].mxu0 %v2195
    %v2231 = vpop.f32.mrb[0].mxu0
    %v2232 = vadd.f32 0.0, %v2231
    %v2233 = vpop.f32.mrb[0].mxu0
    %v2234 = vpop.f32.mrb[0].mxu0
    %v2235 = vadd.f32 0.0, %v2234
    %v2236 = vpop.f32.mrb[0].mxu0
    %2237 = vdwg.mxu0
    %2240 = vrot.lane.b32.xlu0 %v2138, 32
    %v2241 = vpop.permute.xlu0 %2240
    %2242 = vrot.lane.b32.xlu0 %v2141, 32
    %v2243 = vpop.permute.xlu0 %2242
    %2248 = vrot.lane.b32.xlu0 %v2185, 64
    %v2249 = vpop.permute.xlu0 %2248
    %2250 = vrot.lane.b32.xlu0 %v2188, 64
    %v2251 = vpop.permute.xlu0 %2250
    %2256 = vrot.lane.b32.xlu0 %v2232, 96
    %v2257 = vpop.permute.xlu0 %2256
    %2258 = vrot.lane.b32.xlu0 %v2235, 96
    %v2259 = vpop.permute.xlu0 %2258
    %v2262 = vsel %vm398, %v2090, %v2241
    %v2263 = vsel %vm398, %v2093, %v2243
    %v2264 = vsel %vm914, %v2262, %v2249
    %v2265 = vsel %vm914, %v2263, %v2251
    %v2266 = vsel %vm917, %v2264, %v2257
    %v2267 = vsel %vm917, %v2265, %v2259
    %v2268 = vpack.c.bf16 %v2267, %v2266
    %s2269 = scalar_lea.vmem %s6, 64
    %v2270 = vld [vmem:[%s2269] sm:$0xf]
    %v2271 = vld [vmem:[%s2269 + $0x4] sm:$0xf]
    %v2272 = vld [vmem:[%s2269 + $0x8] sm:$0xf]
    %v2273 = vld [vmem:[%s2269 + $0xc] sm:$0xf]
    %v2274 = vld [vmem:[%s2269 + $0x10] sm:$0xf]
    %v2275 = vld [vmem:[%s2269 + $0x14] sm:$0xf]
    %v2276 = vld [vmem:[%s2269 + $0x18] sm:$0xf]
    %v2277 = vld [vmem:[%s2269 + $0x1c] sm:$0xf]
    %v2278 = vld [vmem:[%s2269 + $0x20] sm:$0xf]
    %v2279 = vld [vmem:[%s2269 + $0x24] sm:$0xf]
    %v2280 = vld [vmem:[%s2269 + $0x28] sm:$0xf]
    %v2281 = vld [vmem:[%s2269 + $0x2c] sm:$0xf]
    %v2282 = vld [vmem:[%s2269 + $0x30] sm:$0xf]
    %v2283 = vld [vmem:[%s2269 + $0x34] sm:$0xf]
    %v2284 = vld [vmem:[%s2269 + $0x38] sm:$0xf]
    %v2285 = vld [vmem:[%s2269 + $0x3c] sm:$0xf]
    %s2286 = scalar_lea.vmem %s7, 1
    %v2287 = vld [vmem:[%s2286] sm:$0x1]
    %v2289 = vlaneseq
    %v2290 = vshrl.u32 %v2289, 7
    %v2291 = vsub.s32 0, %v2290
    %v2292 = vrot.slane %v2287, %v2291
    %v2310 = vunpack.c.l.b16 %v2270
    %v2311 = vunpack.c.l.b16 %v2271
    %v2312 = vunpack.c.l.b16 %v2272
    %v2313 = vunpack.c.l.b16 %v2273
    %v2314 = vunpack.c.l.b16 %v2274
    %v2315 = vunpack.c.l.b16 %v2275
    %v2316 = vunpack.c.l.b16 %v2276
    %v2317 = vunpack.c.l.b16 %v2277
    %v2318 = vunpack.c.l.b16 %v2278
    %v2319 = vunpack.c.l.b16 %v2279
    %v2320 = vunpack.c.l.b16 %v2280
    %v2321 = vunpack.c.l.b16 %v2281
    %v2322 = vunpack.c.l.b16 %v2282
    %v2323 = vunpack.c.l.b16 %v2283
    %v2324 = vunpack.c.l.b16 %v2284
    %v2325 = vunpack.c.l.b16 %v2285
    %v2326 = vpack.c.b16 %v2311, %v2310
    %v2327 = vpack.c.b16 %v2313, %v2312
    %v2328 = vpack.c.b16 %v2315, %v2314
    %v2329 = vpack.c.b16 %v2317, %v2316
    %v2330 = vpack.c.b16 %v2319, %v2318
    %v2331 = vpack.c.b16 %v2321, %v2320
    %v2332 = vpack.c.b16 %v2323, %v2322
    %v2333 = vpack.c.b16 %v2325, %v2324
    %2342 = vmatprep.subr.bf16.mxu0 0
    %2343 = vmatpush1.bf16.msra.mxu0 %v2326
    %2344 = vmatprep.subr.bf16.mxu0 0
    %2345 = vmatpush1.bf16.msra.mxu0 %v2327
    %2346 = vmatprep.subr.bf16.mxu0 0
    %2347 = vmatpush1.bf16.msra.mxu0 %v2328
    %2348 = vmatprep.subr.bf16.mxu0 0
    %2349 = vmatpush1.bf16.msra.mxu0 %v2329
    %2350 = vmatprep.subr.bf16.mxu0 0
    %2351 = vmatpush1.bf16.msra.mxu0 %v2330
    %2352 = vmatprep.subr.bf16.mxu0 0
    %2353 = vmatpush1.bf16.msra.mxu0 %v2331
    %2354 = vmatprep.subr.bf16.mxu0 0
    %2355 = vmatpush1.bf16.msra.mxu0 %v2332
    %2356 = vmatprep.subr.bf16.mxu0 0
    %2357 = vmatpush1.bf16.msra.mxu0 %v2333
    %2358 = vmatprep.subr.bf16.mxu0 0
    %2359 = vmatpush1.bf16.msra.mxu0 0
    %2360 = vmatprep.subr.bf16.mxu0 0
    %2361 = vmatpush1.bf16.msra.mxu0 0
    %2362 = vmatprep.subr.bf16.mxu0 0
    %2363 = vmatpush1.bf16.msra.mxu0 0
    %2364 = vmatprep.subr.bf16.mxu0 0
    %2365 = vmatpush1.bf16.msra.mxu0 0
    %2366 = vmatprep.subr.bf16.mxu0 0
    %2367 = vmatpush1.bf16.msra.mxu0 0
    %2368 = vmatprep.subr.bf16.mxu0 0
    %2369 = vmatpush1.bf16.msra.mxu0 0
    %2370 = vmatprep.subr.bf16.mxu0 0
    %2371 = vmatpush1.bf16.msra.mxu0 0
    %2372 = vmatprep.subr.bf16.mxu0 0
    %2373 = vmatpush1.bf16.msra.mxu0 0
    %2374 = vmatprep.mubr.bf16.mxu0 0
    %2375 = vmatmul.mubr.bf16.gmra.mrb[0].mxu0 %v2268
    %v2376 = vpop.f32.mrb[0].mxu0
    %v2377 = vadd.f32 %v2292, %v2376
    %v2378 = vpop.f32.mrb[0].mxu0
    %v2379 = vpop.f32.mrb[0].mxu0
    %v2380 = vadd.f32 %v2292, %v2379
    %v2381 = vpop.f32.mrb[0].mxu0
    %2382 = vdwg.mxu0
    %v2383 = vadd.f32 %v1481, %v2377
    %v2384 = vadd.f32 %v1482, %v2380
    %s2385 = scalar_lea.vmem %s8, 1
    %v2386 = vld [vmem:[%s2385] sm:$0x1]
    %s2387 = scalar_lea.vmem %s9, 1
    %v2388 = vld [vmem:[%s2387] sm:$0x1]
    %2389 = vadd.xlane.f32.xlu0 %v2383
    %v2390 = vpop.xlane.xlu0 %2389
    %2391 = vadd.xlane.f32.xlu0 %v2384
    %v2392 = vpop.xlane.xlu0 %2391
    %v2393 = vmul.f32 %v2390, %v96
    %v2394 = vmul.f32 %v2392, %v96
    %v2395 = vsub.f32 %v2383, %v2393
    %v2396 = vsub.f32 %v2384, %v2394
    %v2397 = vmul.f32 %v2395, %v2395
    %v2398 = vmul.f32 %v2396, %v2396
    %2399 = vadd.xlane.f32.xlu0 %v2397
    %v2400 = vpop.xlane.xlu0 %2399
    %2401 = vadd.xlane.f32.xlu0 %v2398
    %v2402 = vpop.xlane.xlu0 %2401
    %v2403 = vmul.f32 %v2400, %v96
    %v2404 = vmul.f32 %v2402, %v96
    %v2405 = vadd.f32 %v2403, 1e-12
    %v2406 = vadd.f32 %v2404, 1e-12
    %v2407 = vrsqrt.pop %v2405
    %v2408 = vrsqrt.pop %v2406
    %v2409 = vmul.f32 %v2395, %v2407
    %v2410 = vmul.f32 %v2396, %v2408
    %v2412 = vlaneseq
    %v2413 = vshrl.u32 %v2412, 7
    %v2414 = vsub.s32 0, %v2413
    %v2415 = vrot.slane %v2386, %v2414
    %v2417 = vmul.f32 %v2409, %v2415
    %v2418 = vmul.f32 %v2410, %v2415
    %v2420 = vlaneseq
    %v2421 = vshrl.u32 %v2420, 7
    %v2422 = vsub.s32 0, %v2421
    %v2423 = vrot.slane %v2388, %v2422
    %v2425 = vadd.f32 %v2417, %v2423
    %v2426 = vadd.f32 %v2418, %v2423
    %v2427 = vpack.c.bf16 %v2426, %v2425
    %s2428 = scalar_lea.vmem %s10, 128
    %v2429 = vld [vmem:[%s2428] sm:$0xff]
    %v2430 = vld [vmem:[%s2428 + $0x8] sm:$0xff]
    %v2431 = vld [vmem:[%s2428 + $0x10] sm:$0xff]
    %v2432 = vld [vmem:[%s2428 + $0x18] sm:$0xff]
    %v2433 = vld [vmem:[%s2428 + $0x20] sm:$0xff]
    %v2434 = vld [vmem:[%s2428 + $0x28] sm:$0xff]
    %v2435 = vld [vmem:[%s2428 + $0x30] sm:$0xff]
    %v2436 = vld [vmem:[%s2428 + $0x38] sm:$0xff]
    %v2437 = vld [vmem:[%s2428 + $0x40] sm:$0xff]
    %v2438 = vld [vmem:[%s2428 + $0x48] sm:$0xff]
    %v2439 = vld [vmem:[%s2428 + $0x50] sm:$0xff]
    %v2440 = vld [vmem:[%s2428 + $0x58] sm:$0xff]
    %v2441 = vld [vmem:[%s2428 + $0x60] sm:$0xff]
    %v2442 = vld [vmem:[%s2428 + $0x68] sm:$0xff]
    %v2443 = vld [vmem:[%s2428 + $0x70] sm:$0xff]
    %v2444 = vld [vmem:[%s2428 + $0x78] sm:$0xff]
    %s2445 = scalar_lea.vmem %s11, 2
    %v2446 = vld [vmem:[%s2445] sm:$0x3]
    %v2448 = vlaneseq
    %v2449 = vshrl.u32 %v2448, 7
    %v2450 = vsub.s32 0, %v2449
    %v2451 = vrot.slane %v2446, %v2450
    %v2452 = vlaneseq
    %v2453 = vshrl.u32 %v2452, 7
    %v2454 = vsub.s32 1, %v2453
    %v2455 = vrot.slane %v2446, %v2454
    %v2474 = vunpack.c.l.b16 %v2429
    %v2475 = vunpack.c.h.b16 %v2429
    %v2476 = vunpack.c.l.b16 %v2430
    %v2477 = vunpack.c.h.b16 %v2430
    %v2478 = vunpack.c.l.b16 %v2431
    %v2479 = vunpack.c.h.b16 %v2431
    %v2480 = vunpack.c.l.b16 %v2432
    %v2481 = vunpack.c.h.b16 %v2432
    %v2482 = vunpack.c.l.b16 %v2433
    %v2483 = vunpack.c.h.b16 %v2433
    %v2484 = vunpack.c.l.b16 %v2434
    %v2485 = vunpack.c.h.b16 %v2434
    %v2486 = vunpack.c.l.b16 %v2435
    %v2487 = vunpack.c.h.b16 %v2435
    %v2488 = vunpack.c.l.b16 %v2436
    %v2489 = vunpack.c.h.b16 %v2436
    %v2490 = vunpack.c.l.b16 %v2437
    %v2491 = vunpack.c.h.b16 %v2437
    %v2492 = vunpack.c.l.b16 %v2438
    %v2493 = vunpack.c.h.b16 %v2438
    %v2494 = vunpack.c.l.b16 %v2439
    %v2495 = vunpack.c.h.b16 %v2439
    %v2496 = vunpack.c.l.b16 %v2440
    %v2497 = vunpack.c.h.b16 %v2440
    %v2498 = vunpack.c.l.b16 %v2441
    %v2499 = vunpack.c.h.b16 %v2441
    %v2500 = vunpack.c.l.b16 %v2442
    %v2501 = vunpack.c.h.b16 %v2442
    %v2502 = vunpack.c.l.b16 %v2443
    %v2503 = vunpack.c.h.b16 %v2443
    %v2504 = vunpack.c.l.b16 %v2444
    %v2505 = vunpack.c.h.b16 %v2444
    %v2506 = vpack.c.b16 %v2476, %v2474
    %v2507 = vpack.c.b16 %v2477, %v2475
    %v2508 = vpack.c.b16 %v2480, %v2478
    %v2509 = vpack.c.b16 %v2481, %v2479
    %v2510 = vpack.c.b16 %v2484, %v2482
    %v2511 = vpack.c.b16 %v2485, %v2483
    %v2512 = vpack.c.b16 %v2488, %v2486
    %v2513 = vpack.c.b16 %v2489, %v2487
    %v2514 = vpack.c.b16 %v2492, %v2490
    %v2515 = vpack.c.b16 %v2493, %v2491
    %v2516 = vpack.c.b16 %v2496, %v2494
    %v2517 = vpack.c.b16 %v2497, %v2495
    %v2518 = vpack.c.b16 %v2500, %v2498
    %v2519 = vpack.c.b16 %v2501, %v2499
    %v2520 = vpack.c.b16 %v2504, %v2502
    %v2521 = vpack.c.b16 %v2505, %v2503
    %2538 = vmatprep.subr.bf16.mxu0 %v2507
    %2539 = vmatpush1.bf16.msra.mxu0 %v2506
    %2540 = vmatprep.subr.bf16.mxu0 %v2509
    %2541 = vmatpush1.bf16.msra.mxu0 %v2508
    %2542 = vmatprep.subr.bf16.mxu0 %v2511
    %2543 = vmatpush1.bf16.msra.mxu0 %v2510
    %2544 = vmatprep.subr.bf16.mxu0 %v2513
    %2545 = vmatpush1.bf16.msra.mxu0 %v2512
    %2546 = vmatprep.subr.bf16.mxu0 %v2515
    %2547 = vmatpush1.bf16.msra.mxu0 %v2514
    %2548 = vmatprep.subr.bf16.mxu0 %v2517
    %2549 = vmatpush1.bf16.msra.mxu0 %v2516
    %2550 = vmatprep.subr.bf16.mxu0 %v2519
    %2551 = vmatpush1.bf16.msra.mxu0 %v2518
    %2552 = vmatprep.subr.bf16.mxu0 %v2521
    %2553 = vmatpush1.bf16.msra.mxu0 %v2520
    %2554 = vmatprep.subr.bf16.mxu0 0
    %2555 = vmatpush1.bf16.msra.mxu0 0
    %2556 = vmatprep.subr.bf16.mxu0 0
    %2557 = vmatpush1.bf16.msra.mxu0 0
    %2558 = vmatprep.subr.bf16.mxu0 0
    %2559 = vmatpush1.bf16.msra.mxu0 0
    %2560 = vmatprep.subr.bf16.mxu0 0
    %2561 = vmatpush1.bf16.msra.mxu0 0
    %2562 = vmatprep.subr.bf16.mxu0 0
    %2563 = vmatpush1.bf16.msra.mxu0 0
    %2564 = vmatprep.subr.bf16.mxu0 0
    %2565 = vmatpush1.bf16.msra.mxu0 0
    %2566 = vmatprep.subr.bf16.mxu0 0
    %2567 = vmatpush1.bf16.msra.mxu0 0
    %2568 = vmatprep.subr.bf16.mxu0 0
    %2569 = vmatpush1.bf16.msra.mxu0 0
    %2570 = vmatprep.mubr.bf16.mxu0 0
    %2571 = vmatmul.mubr.bf16.gmra.mrb[0].mxu0 %v2427
    %v2572 = vpop.f32.mrb[0].mxu0
    %v2573 = vadd.f32 %v2451, %v2572
    %v2574 = vpop.f32.mrb[0].mxu0
    %v2575 = vadd.f32 %v2455, %v2574
    %v2576 = vpop.f32.mrb[0].mxu0
    %v2577 = vadd.f32 %v2451, %v2576
    %v2578 = vpop.f32.mrb[0].mxu0
    %v2579 = vadd.f32 %v2455, %v2578
    %2580 = vdwg.mxu0
    %v2581 = vmul.f32 %v2573, 0.5
    %v2582 = vmul.f32 %v2575, 0.5
    %v2583 = vmul.f32 %v2577, 0.5
    %v2584 = vmul.f32 %v2579, 0.5
    %v2585 = vmul.f32 %v2573, 0.044715
    %v2586 = vmul.f32 %v2575, 0.044715
    %v2587 = vmul.f32 %v2577, 0.044715
    %v2588 = vmul.f32 %v2579, 0.044715
    %v2589 = vmul.f32 %v2585, %v2573
    %v2590 = vmul.f32 %v2586, %v2575
    %v2591 = vmul.f32 %v2587, %v2577
    %v2592 = vmul.f32 %v2588, %v2579
    %v2593 = vmul.f32 %v2589, %v2573
    %v2594 = vmul.f32 %v2590, %v2575
    %v2595 = vmul.f32 %v2591, %v2577
    %v2596 = vmul.f32 %v2592, %v2579
    %v2597 = vadd.f32 %v2573, %v2593
    %v2598 = vadd.f32 %v2575, %v2594
    %v2599 = vadd.f32 %v2577, %v2595
    %v2600 = vadd.f32 %v2579, %v2596
    %v2601 = vmul.f32 %v2597, 0.7978846
    %v2602 = vmul.f32 %v2598, 0.7978846
    %v2603 = vmul.f32 %v2599, 0.7978846
    %v2604 = vmul.f32 %v2600, 0.7978846
    %v2605 = vtanh.pop %v2601
    %v2606 = vtanh.pop %v2602
    %v2607 = vtanh.pop %v2603
    %v2608 = vtanh.pop %v2604
    %v2609 = vadd.f32 %v2605, 1.0
    %v2610 = vadd.f32 %v2606, 1.0
    %v2611 = vadd.f32 %v2607, 1.0
    %v2612 = vadd.f32 %v2608, 1.0
    %v2613 = vmul.f32 %v2581, %v2609
    %v2614 = vmul.f32 %v2582, %v2610
    %v2615 = vmul.f32 %v2583, %v2611
    %v2616 = vmul.f32 %v2584, %v2612
    %v2617 = vpack.c.bf16 %v2615, %v2613
    %v2618 = vpack.c.bf16 %v2616, %v2614
    %s2619 = scalar_lea.vmem [#allocation4], 128
    %v2620 = vld [vmem:[%s2619] sm:$0xf]
    %v2621 = vld [vmem:[%s2619 + $0x4] sm:$0xf]
    %v2622 = vld [vmem:[%s2619 + $0x8] sm:$0xf]
    %v2623 = vld [vmem:[%s2619 + $0xc] sm:$0xf]
    %v2624 = vld [vmem:[%s2619 + $0x10] sm:$0xf]
    %v2625 = vld [vmem:[%s2619 + $0x14] sm:$0xf]
    %v2626 = vld [vmem:[%s2619 + $0x18] sm:$0xf]
    %v2627 = vld [vmem:[%s2619 + $0x1c] sm:$0xf]
    %v2628 = vld [vmem:[%s2619 + $0x20] sm:$0xf]
    %v2629 = vld [vmem:[%s2619 + $0x24] sm:$0xf]
    %v2630 = vld [vmem:[%s2619 + $0x28] sm:$0xf]
    %v2631 = vld [vmem:[%s2619 + $0x2c] sm:$0xf]
    %v2632 = vld [vmem:[%s2619 + $0x30] sm:$0xf]
    %v2633 = vld [vmem:[%s2619 + $0x34] sm:$0xf]
    %v2634 = vld [vmem:[%s2619 + $0x38] sm:$0xf]
    %v2635 = vld [vmem:[%s2619 + $0x3c] sm:$0xf]
    %v2636 = vld [vmem:[%s2619 + $0x40] sm:$0xf]
    %v2637 = vld [vmem:[%s2619 + $0x44] sm:$0xf]
    %v2638 = vld [vmem:[%s2619 + $0x48] sm:$0xf]
    %v2639 = vld [vmem:[%s2619 + $0x4c] sm:$0xf]
    %v2640 = vld [vmem:[%s2619 + $0x50] sm:$0xf]
    %v2641 = vld [vmem:[%s2619 + $0x54] sm:$0xf]
    %v2642 = vld [vmem:[%s2619 + $0x58] sm:$0xf]
    %v2643 = vld [vmem:[%s2619 + $0x5c] sm:$0xf]
    %v2644 = vld [vmem:[%s2619 + $0x60] sm:$0xf]
    %v2645 = vld [vmem:[%s2619 + $0x64] sm:$0xf]
    %v2646 = vld [vmem:[%s2619 + $0x68] sm:$0xf]
    %v2647 = vld [vmem:[%s2619 + $0x6c] sm:$0xf]
    %v2648 = vld [vmem:[%s2619 + $0x70] sm:$0xf]
    %v2649 = vld [vmem:[%s2619 + $0x74] sm:$0xf]
    %v2650 = vld [vmem:[%s2619 + $0x78] sm:$0xf]
    %v2651 = vld [vmem:[%s2619 + $0x7c] sm:$0xf]
    %s2652 = scalar_lea.vmem %s13, 1
    %v2653 = vld [vmem:[%s2652] sm:$0x1]
    %v2655 = vlaneseq
    %v2656 = vshrl.u32 %v2655, 7
    %v2657 = vsub.s32 0, %v2656
    %v2658 = vrot.slane %v2653, %v2657
    %v2692 = vunpack.c.l.b16 %v2620
    %v2693 = vunpack.c.l.b16 %v2621
    %v2694 = vunpack.c.l.b16 %v2622
    %v2695 = vunpack.c.l.b16 %v2623
    %v2696 = vunpack.c.l.b16 %v2624
    %v2697 = vunpack.c.l.b16 %v2625
    %v2698 = vunpack.c.l.b16 %v2626
    %v2699 = vunpack.c.l.b16 %v2627
    %v2700 = vunpack.c.l.b16 %v2628
    %v2701 = vunpack.c.l.b16 %v2629
    %v2702 = vunpack.c.l.b16 %v2630
    %v2703 = vunpack.c.l.b16 %v2631
    %v2704 = vunpack.c.l.b16 %v2632
    %v2705 = vunpack.c.l.b16 %v2633
    %v2706 = vunpack.c.l.b16 %v2634
    %v2707 = vunpack.c.l.b16 %v2635
    %v2708 = vunpack.c.l.b16 %v2636
    %v2709 = vunpack.c.l.b16 %v2637
    %v2710 = vunpack.c.l.b16 %v2638
    %v2711 = vunpack.c.l.b16 %v2639
    %v2712 = vunpack.c.l.b16 %v2640
    %v2713 = vunpack.c.l.b16 %v2641
    %v2714 = vunpack.c.l.b16 %v2642
    %v2715 = vunpack.c.l.b16 %v2643
    %v2716 = vunpack.c.l.b16 %v2644
    %v2717 = vunpack.c.l.b16 %v2645
    %v2718 = vunpack.c.l.b16 %v2646
    %v2719 = vunpack.c.l.b16 %v2647
    %v2720 = vunpack.c.l.b16 %v2648
    %v2721 = vunpack.c.l.b16 %v2649
    %v2722 = vunpack.c.l.b16 %v2650
    %v2723 = vunpack.c.l.b16 %v2651
    %v2724 = vpack.c.b16 %v2693, %v2692
    %v2725 = vpack.c.b16 %v2695, %v2694
    %v2726 = vpack.c.b16 %v2697, %v2696
    %v2727 = vpack.c.b16 %v2699, %v2698
    %v2728 = vpack.c.b16 %v2701, %v2700
    %v2729 = vpack.c.b16 %v2703, %v2702
    %v2730 = vpack.c.b16 %v2705, %v2704
    %v2731 = vpack.c.b16 %v2707, %v2706
    %v2732 = vpack.c.b16 %v2709, %v2708
    %v2733 = vpack.c.b16 %v2711, %v2710
    %v2734 = vpack.c.b16 %v2713, %v2712
    %v2735 = vpack.c.b16 %v2715, %v2714
    %v2736 = vpack.c.b16 %v2717, %v2716
    %v2737 = vpack.c.b16 %v2719, %v2718
    %v2738 = vpack.c.b16 %v2721, %v2720
    %v2739 = vpack.c.b16 %v2723, %v2722
    %2756 = vmatprep.subr.bf16.mxu0 0
    %2757 = vmatpush1.bf16.msra.mxu0 %v2724
    %2758 = vmatprep.subr.bf16.mxu0 0
    %2759 = vmatpush1.bf16.msra.mxu0 %v2725
    %2760 = vmatprep.subr.bf16.mxu0 0
    %2761 = vmatpush1.bf16.msra.mxu0 %v2726
    %2762 = vmatprep.subr.bf16.mxu0 0
    %2763 = vmatpush1.bf16.msra.mxu0 %v2727
    %2764 = vmatprep.subr.bf16.mxu0 0
    %2765 = vmatpush1.bf16.msra.mxu0 %v2728
    %2766 = vmatprep.subr.bf16.mxu0 0
    %2767 = vmatpush1.bf16.msra.mxu0 %v2729
    %2768 = vmatprep.subr.bf16.mxu0 0
    %2769 = vmatpush1.bf16.msra.mxu0 %v2730
    %2770 = vmatprep.subr.bf16.mxu0 0
    %2771 = vmatpush1.bf16.msra.mxu0 %v2731
    %2772 = vmatprep.subr.bf16.mxu0 0
    %2773 = vmatpush1.bf16.msra.mxu0 %v2732
    %2774 = vmatprep.subr.bf16.mxu0 0
    %2775 = vmatpush1.bf16.msra.mxu0 %v2733
    %2776 = vmatprep.subr.bf16.mxu0 0
    %2777 = vmatpush1.bf16.msra.mxu0 %v2734
    %2778 = vmatprep.subr.bf16.mxu0 0
    %2779 = vmatpush1.bf16.msra.mxu0 %v2735
    %2780 = vmatprep.subr.bf16.mxu0 0
    %2781 = vmatpush1.bf16.msra.mxu0 %v2736
    %2782 = vmatprep.subr.bf16.mxu0 0
    %2783 = vmatpush1.bf16.msra.mxu0 %v2737
    %2784 = vmatprep.subr.bf16.mxu0 0
    %2785 = vmatpush1.bf16.msra.mxu0 %v2738
    %2786 = vmatprep.subr.bf16.mxu0 0
    %2787 = vmatpush1.bf16.msra.mxu0 %v2739
    %2788 = vmatprep.mubr.bf16.mxu0 %v2618
    %2789 = vmatmul.mubr.bf16.gmra.mrb[0].mxu0 %v2617
    %v2790 = vpop.f32.mrb[0].mxu0
    %v2791 = vadd.f32 %v2658, %v2790
    %v2792 = vpop.f32.mrb[0].mxu0
    %v2793 = vpop.f32.mrb[0].mxu0
    %v2794 = vadd.f32 %v2658, %v2793
    %v2795 = vpop.f32.mrb[0].mxu0
    %2796 = vdwg.mxu0
    %v2797 = vadd.f32 %v2425, %v2791
    %v2798 = vadd.f32 %v2426, %v2794
    %s2799 = scalar_lea.vmem %s14, 1
    %v2800 = vld [vmem:[%s2799] sm:$0x1]
    %s2801 = scalar_lea.vmem %s15, 1
    %v2802 = vld [vmem:[%s2801] sm:$0x1]
    %2803 = vadd.xlane.f32.xlu0 %v2797
    %v2804 = vpop.xlane.xlu0 %2803
    %2805 = vadd.xlane.f32.xlu0 %v2798
    %v2806 = vpop.xlane.xlu0 %2805
    %v2807 = vmul.f32 %v2804, %v96
    %v2808 = vmul.f32 %v2806, %v96
    %v2809 = vsub.f32 %v2797, %v2807
    %v2810 = vsub.f32 %v2798, %v2808
    %v2811 = vmul.f32 %v2809, %v2809
    %v2812 = vmul.f32 %v2810, %v2810
    %2813 = vadd.xlane.f32.xlu0 %v2811
    %v2814 = vpop.xlane.xlu0 %2813
    %2815 = vadd.xlane.f32.xlu0 %v2812
    %v2816 = vpop.xlane.xlu0 %2815
    %v2817 = vmul.f32 %v2814, %v96
    %v2818 = vmul.f32 %v2816, %v96
    %v2819 = vadd.f32 %v2817, 1e-12
    %v2820 = vadd.f32 %v2818, 1e-12
    %v2821 = vrsqrt.pop %v2819
    %v2822 = vrsqrt.pop %v2820
    %v2823 = vmul.f32 %v2809, %v2821
    %v2824 = vmul.f32 %v2810, %v2822
    %v2826 = vlaneseq
    %v2827 = vshrl.u32 %v2826, 7
    %v2828 = vsub.s32 0, %v2827
    %v2829 = vrot.slane %v2800, %v2828
    %v2831 = vmul.f32 %v2823, %v2829
    %v2832 = vmul.f32 %v2824, %v2829
    %v2834 = vlaneseq
    %v2835 = vshrl.u32 %v2834, 7
    %v2836 = vsub.s32 0, %v2835
    %v2837 = vrot.slane %v2802, %v2836
    %v2839 = vadd.f32 %v2831, %v2837
    %v2840 = vadd.f32 %v2832, %v2837
    %v2842 = vrot.slane %v2840, 7
    %vm2844 = vcmask 1040384
    %v2845 = vsel %vm2844, %v2839, %v2842
    %v2846 = vpack.c.bf16 %v2845, %v2845
    %v2847 = vld [vmem:[%s16] sm:$0xf]
    %v2848 = vld [vmem:[%s16 + $0x4] sm:$0xf]
    %v2849 = vld [vmem:[%s16 + $0x8] sm:$0xf]
    %v2850 = vld [vmem:[%s16 + $0xc] sm:$0xf]
    %v2851 = vld [vmem:[%s16 + $0x10] sm:$0xf]
    %v2852 = vld [vmem:[%s16 + $0x14] sm:$0xf]
    %v2853 = vld [vmem:[%s16 + $0x18] sm:$0xf]
    %v2854 = vld [vmem:[%s16 + $0x1c] sm:$0xf]
    %v2855 = vld [vmem:[%s16 + $0x20] sm:$0xf]
    %v2856 = vld [vmem:[%s16 + $0x24] sm:$0xf]
    %v2857 = vld [vmem:[%s16 + $0x28] sm:$0xf]
    %v2858 = vld [vmem:[%s16 + $0x2c] sm:$0xf]
    %v2859 = vld [vmem:[%s16 + $0x30] sm:$0xf]
    %v2860 = vld [vmem:[%s16 + $0x34] sm:$0xf]
    %v2861 = vld [vmem:[%s16 + $0x38] sm:$0xf]
    %v2862 = vld [vmem:[%s16 + $0x3c] sm:$0xf]
    %v2863 = vld [vmem:[%s17] sm:$0x1]
    %v2865 = vlaneseq
    %v2866 = vshrl.u32 %v2865, 7
    %v2867 = vsub.s32 0, %v2866
    %v2868 = vrot.slane %v2863, %v2867
    %v2886 = vunpack.c.l.b16 %v2847
    %v2887 = vunpack.c.l.b16 %v2848
    %v2888 = vunpack.c.l.b16 %v2849
    %v2889 = vunpack.c.l.b16 %v2850
    %v2890 = vunpack.c.l.b16 %v2851
    %v2891 = vunpack.c.l.b16 %v2852
    %v2892 = vunpack.c.l.b16 %v2853
    %v2893 = vunpack.c.l.b16 %v2854
    %v2894 = vunpack.c.l.b16 %v2855
    %v2895 = vunpack.c.l.b16 %v2856
    %v2896 = vunpack.c.l.b16 %v2857
    %v2897 = vunpack.c.l.b16 %v2858
    %v2898 = vunpack.c.l.b16 %v2859
    %v2899 = vunpack.c.l.b16 %v2860
    %v2900 = vunpack.c.l.b16 %v2861
    %v2901 = vunpack.c.l.b16 %v2862
    %v2902 = vpack.c.b16 %v2887, %v2886
    %v2903 = vpack.c.b16 %v2889, %v2888
    %v2904 = vpack.c.b16 %v2891, %v2890
    %v2905 = vpack.c.b16 %v2893, %v2892
    %v2906 = vpack.c.b16 %v2895, %v2894
    %v2907 = vpack.c.b16 %v2897, %v2896
    %v2908 = vpack.c.b16 %v2899, %v2898
    %v2909 = vpack.c.b16 %v2901, %v2900
    %2918 = vmatprep.subr.bf16.mxu0 0
    %2919 = vmatpush1.bf16.msra.mxu0 %v2902
    %2920 = vmatprep.subr.bf16.mxu0 0
    %2921 = vmatpush1.bf16.msra.mxu0 %v2903
    %2922 = vmatprep.subr.bf16.mxu0 0
    %2923 = vmatpush1.bf16.msra.mxu0 %v2904
    %2924 = vmatprep.subr.bf16.mxu0 0
    %2925 = vmatpush1.bf16.msra.mxu0 %v2905
    %2926 = vmatprep.subr.bf16.mxu0 0
    %2927 = vmatpush1.bf16.msra.mxu0 %v2906
    %2928 = vmatprep.subr.bf16.mxu0 0
    %2929 = vmatpush1.bf16.msra.mxu0 %v2907
    %2930 = vmatprep.subr.bf16.mxu0 0
    %2931 = vmatpush1.bf16.msra.mxu0 %v2908
    %2932 = vmatprep.subr.bf16.mxu0 0
    %2933 = vmatpush1.bf16.msra.mxu0 %v2909
    %2934 = vmatprep.subr.bf16.mxu0 0
    %2935 = vmatpush1.bf16.msra.mxu0 0
    %2936 = vmatprep.subr.bf16.mxu0 0
    %2937 = vmatpush1.bf16.msra.mxu0 0
    %2938 = vmatprep.subr.bf16.mxu0 0
    %2939 = vmatpush1.bf16.msra.mxu0 0
    %2940 = vmatprep.subr.bf16.mxu0 0
    %2941 = vmatpush1.bf16.msra.mxu0 0
    %2942 = vmatprep.subr.bf16.mxu0 0
    %2943 = vmatpush1.bf16.msra.mxu0 0
    %2944 = vmatprep.subr.bf16.mxu0 0
    %2945 = vmatpush1.bf16.msra.mxu0 0
    %2946 = vmatprep.subr.bf16.mxu0 0
    %2947 = vmatpush1.bf16.msra.mxu0 0
    %2948 = vmatprep.subr.bf16.mxu0 0
    %2949 = vmatpush1.bf16.msra.mxu0 0
    %2950 = vmatprep.mubr.bf16.mxu0 0
    %2951 = vmatmul.mubr.bf16.gmra.mrb[0].mxu0 %v2846
    %v2952 = vpop.f32.mrb[0].mxu0
    %v2953 = vadd.f32 %v2868, %v2952
    %v2954 = vpop.f32.mrb[0].mxu0
    %v2955 = vpop.f32.mrb[0].mxu0
    %v2956 = vpop.f32.mrb[0].mxu0
    %2957 = vdwg.mxu0
    %2958 = vxpose.xlu0.b32.start [1/16] %v2953, 128
    %2959 = vxpose.xlu0.b32.cont [2/16] 0.0, 128
    %2960 = vxpose.xlu0.b32.cont [3/16] 0.0, 128
    %2961 = vxpose.xlu0.b32.cont [4/16] 0.0, 128
    %2962 = vxpose.xlu0.b32.cont [5/16] 0.0, 128
    %2963 = vxpose.xlu0.b32.cont [6/16] 0.0, 128
    %2964 = vxpose.xlu0.b32.cont [7/16] 0.0, 128
    %2965 = vxpose.xlu0.b32.cont [8/16] 0.0, 128
    %2966 = vxpose.xlu0.b32.cont [9/16] 0.0, 128
    %2967 = vxpose.xlu0.b32.cont [10/16] 0.0, 128
    %2968 = vxpose.xlu0.b32.cont [11/16] 0.0, 128
    %2969 = vxpose.xlu0.b32.cont [12/16] 0.0, 128
    %2970 = vxpose.xlu0.b32.cont [13/16] 0.0, 128
    %2971 = vxpose.xlu0.b32.cont [14/16] 0.0, 128
    %2972 = vxpose.xlu0.b32.cont [15/16] 0.0, 128
    %2973 = vxpose.xlu0.b32.end [16/16] 0.0, 128
    %v2974 = vpop.trf.xlu0
    %v2975 = vpop.trf.xlu0
    %v2976 = vpop.trf.xlu0
    %v2977 = vpop.trf.xlu0
    %v2978 = vpop.trf.xlu0
    %v2979 = vpop.trf.xlu0
    %v2980 = vpop.trf.xlu0
    %v2981 = vpop.trf.xlu0
    %v2982 = vpop.trf.xlu0
    %v2983 = vpop.trf.xlu0
    %v2984 = vpop.trf.xlu0
    %v2985 = vpop.trf.xlu0
    %v2986 = vpop.trf.xlu0
    %v2987 = vpop.trf.xlu0
    %v2988 = vpop.trf.xlu0
    %v2989 = vpop.trf.xlu0
    %v2990 = vlaneseq
    %v2991 = vshrl.u32 %v2990, 7
    %v2992 = vsub.s32 0, %v2991
    %v2993 = vrot.slane %v2953, %v2992
    %2995 = vset.pattern.permute.xlu0 0
    %2996 = vperm.xlu0 %2995, %v2974
    %v2997 = vpop.permute.xlu0 %2996
    %3000 = vset.pattern.permute.xlu0 0
    %3001 = vperm.xlu0 %3000, %v2975
    %v3002 = vpop.permute.xlu0 %3001
    %3005 = vset.pattern.permute.xlu0 0
    %3006 = vperm.xlu0 %3005, %v2976
    %v3007 = vpop.permute.xlu0 %3006
    %3010 = vset.pattern.permute.xlu0 0
    %3011 = vperm.xlu0 %3010, %v2977
    %v3012 = vpop.permute.xlu0 %3011
    %3015 = vset.pattern.permute.xlu0 0
    %3016 = vperm.xlu0 %3015, %v2978
    %v3017 = vpop.permute.xlu0 %3016
    %3020 = vset.pattern.permute.xlu0 0
    %3021 = vperm.xlu0 %3020, %v2979
    %v3022 = vpop.permute.xlu0 %3021
    %3025 = vset.pattern.permute.xlu0 0
    %3026 = vperm.xlu0 %3025, %v2980
    %v3027 = vpop.permute.xlu0 %3026
    %3030 = vset.pattern.permute.xlu0 0
    %3031 = vperm.xlu0 %3030, %v2981
    %v3032 = vpop.permute.xlu0 %3031
    %3035 = vset.pattern.permute.xlu0 0
    %3036 = vperm.xlu0 %3035, %v2982
    %v3037 = vpop.permute.xlu0 %3036
    %3040 = vset.pattern.permute.xlu0 0
    %3041 = vperm.xlu0 %3040, %v2983
    %v3042 = vpop.permute.xlu0 %3041
    %3045 = vset.pattern.permute.xlu0 0
    %3046 = vperm.xlu0 %3045, %v2984
    %v3047 = vpop.permute.xlu0 %3046
    %3050 = vset.pattern.permute.xlu0 0
    %3051 = vperm.xlu0 %3050, %v2985
    %v3052 = vpop.permute.xlu0 %3051
    %3055 = vset.pattern.permute.xlu0 0
    %3056 = vperm.xlu0 %3055, %v2986
    %v3057 = vpop.permute.xlu0 %3056
    %3060 = vset.pattern.permute.xlu0 0
    %3061 = vperm.xlu0 %3060, %v2987
    %v3062 = vpop.permute.xlu0 %3061
    %3065 = vset.pattern.permute.xlu0 0
    %3066 = vperm.xlu0 %3065, %v2988
    %v3067 = vpop.permute.xlu0 %3066
    %3070 = vset.pattern.permute.xlu0 0
    %3071 = vperm.xlu0 %3070, %v2989
    %v3072 = vpop.permute.xlu0 %3071
    %vm3074 = vcmp.ge.f32.partialorder %v2993, %v2997
    %vm3075 = vcmp.ge.f32.partialorder %v2993, %v3002
    %vm3076 = vcmp.ge.f32.partialorder %v2993, %v3007
    %vm3077 = vcmp.ge.f32.partialorder %v2993, %v3012
    %vm3078 = vcmp.ge.f32.partialorder %v2993, %v3017
    %vm3079 = vcmp.ge.f32.partialorder %v2993, %v3022
    %vm3080 = vcmp.ge.f32.partialorder %v2993, %v3027
    %vm3081 = vcmp.ge.f32.partialorder %v2993, %v3032
    %vm3082 = vcmp.ge.f32.partialorder %v2993, %v3037
    %vm3083 = vcmp.ge.f32.partialorder %v2993, %v3042
    %vm3084 = vcmp.ge.f32.partialorder %v2993, %v3047
    %vm3085 = vcmp.ge.f32.partialorder %v2993, %v3052
    %vm3086 = vcmp.ge.f32.partialorder %v2993, %v3057
    %vm3087 = vcmp.ge.f32.partialorder %v2993, %v3062
    %vm3088 = vcmp.ge.f32.partialorder %v2993, %v3067
    %vm3089 = vcmp.ge.f32.partialorder %v2993, %v3072
    %v3090 = vsel %vm3074, 1, 0
    %v3091 = vsel %vm3075, 1, 0
    %v3092 = vsel %vm3076, 1, 0
    %v3093 = vsel %vm3077, 1, 0
    %v3094 = vsel %vm3078, 1, 0
    %v3095 = vsel %vm3079, 1, 0
    %v3096 = vsel %vm3080, 1, 0
    %v3097 = vsel %vm3081, 1, 0
    %v3098 = vsel %vm3082, 1, 0
    %v3099 = vsel %vm3083, 1, 0
    %v3100 = vsel %vm3084, 1, 0
    %v3101 = vsel %vm3085, 1, 0
    %v3102 = vsel %vm3086, 1, 0
    %v3103 = vsel %vm3087, 1, 0
    %v3104 = vsel %vm3088, 1, 0
    %v3105 = vsel %vm3089, 1, 0
    %v3106 = vcvt.s32.f32 %v3090
    %v3107 = vcvt.s32.f32 %v3091
    %v3108 = vcvt.s32.f32 %v3092
    %v3109 = vcvt.s32.f32 %v3093
    %v3110 = vcvt.s32.f32 %v3094
    %v3111 = vcvt.s32.f32 %v3095
    %v3112 = vcvt.s32.f32 %v3096
    %v3113 = vcvt.s32.f32 %v3097
    %v3114 = vcvt.s32.f32 %v3098
    %v3115 = vcvt.s32.f32 %v3099
    %v3116 = vcvt.s32.f32 %v3100
    %v3117 = vcvt.s32.f32 %v3101
    %v3118 = vcvt.s32.f32 %v3102
    %v3119 = vcvt.s32.f32 %v3103
    %v3120 = vcvt.s32.f32 %v3104
    %v3121 = vcvt.s32.f32 %v3105
    %3122 = vadd.xlane.f32.xlu0 %v3106
    %v3123 = vpop.xlane.xlu0 %3122
    %3124 = vadd.xlane.f32.xlu0 %v3107
    %v3125 = vpop.xlane.xlu0 %3124
    %3126 = vadd.xlane.f32.xlu0 %v3108
    %v3127 = vpop.xlane.xlu0 %3126
    %3128 = vadd.xlane.f32.xlu0 %v3109
    %v3129 = vpop.xlane.xlu0 %3128
    %3130 = vadd.xlane.f32.xlu0 %v3110
    %v3131 = vpop.xlane.xlu0 %3130
    %3132 = vadd.xlane.f32.xlu0 %v3111
    %v3133 = vpop.xlane.xlu0 %3132
    %3134 = vadd.xlane.f32.xlu0 %v3112
    %v3135 = vpop.xlane.xlu0 %3134
    %3136 = vadd.xlane.f32.xlu0 %v3113
    %v3137 = vpop.xlane.xlu0 %3136
    %3138 = vadd.xlane.f32.xlu0 %v3114
    %v3139 = vpop.xlane.xlu0 %3138
    %3140 = vadd.xlane.f32.xlu0 %v3115
    %v3141 = vpop.xlane.xlu0 %3140
    %3142 = vadd.xlane.f32.xlu0 %v3116
    %v3143 = vpop.xlane.xlu0 %3142
    %3144 = vadd.xlane.f32.xlu0 %v3117
    %v3145 = vpop.xlane.xlu0 %3144
    %3146 = vadd.xlane.f32.xlu0 %v3118
    %v3147 = vpop.xlane.xlu0 %3146
    %3148 = vadd.xlane.f32.xlu0 %v3119
    %v3149 = vpop.xlane.xlu0 %3148
    %3150 = vadd.xlane.f32.xlu0 %v3120
    %v3151 = vpop.xlane.xlu0 %3150
    %3152 = vadd.xlane.f32.xlu0 %v3121
    %v3153 = vpop.xlane.xlu0 %3152
    %v3154 = vmul.f32 %v3106, %v2993
    %v3155 = vmul.f32 %v3107, %v2993
    %v3156 = vmul.f32 %v3108, %v2993
    %v3157 = vmul.f32 %v3109, %v2993
    %v3158 = vmul.f32 %v3110, %v2993
    %v3159 = vmul.f32 %v3111, %v2993
    %v3160 = vmul.f32 %v3112, %v2993
    %v3161 = vmul.f32 %v3113, %v2993
    %v3162 = vmul.f32 %v3114, %v2993
    %v3163 = vmul.f32 %v3115, %v2993
    %v3164 = vmul.f32 %v3116, %v2993
    %v3165 = vmul.f32 %v3117, %v2993
    %v3166 = vmul.f32 %v3118, %v2993
    %v3167 = vmul.f32 %v3119, %v2993
    %v3168 = vmul.f32 %v3120, %v2993
    %v3169 = vmul.f32 %v3121, %v2993
    %3170 = vadd.xlane.f32.xlu0 %v3154
    %v3171 = vpop.xlane.xlu0 %3170
    %3172 = vadd.xlane.f32.xlu0 %v3155
    %v3173 = vpop.xlane.xlu0 %3172
    %3174 = vadd.xlane.f32.xlu0 %v3156
    %v3175 = vpop.xlane.xlu0 %3174
    %3176 = vadd.xlane.f32.xlu0 %v3157
    %v3177 = vpop.xlane.xlu0 %3176
    %3178 = vadd.xlane.f32.xlu0 %v3158
    %v3179 = vpop.xlane.xlu0 %3178
    %3180 = vadd.xlane.f32.xlu0 %v3159
    %v3181 = vpop.xlane.xlu0 %3180
    %3182 = vadd.xlane.f32.xlu0 %v3160
    %v3183 = vpop.xlane.xlu0 %3182
    %3184 = vadd.xlane.f32.xlu0 %v3161
    %v3185 = vpop.xlane.xlu0 %3184
    %3186 = vadd.xlane.f32.xlu0 %v3162
    %v3187 = vpop.xlane.xlu0 %3186
    %3188 = vadd.xlane.f32.xlu0 %v3163
    %v3189 = vpop.xlane.xlu0 %3188
    %3190 = vadd.xlane.f32.xlu0 %v3164
    %v3191 = vpop.xlane.xlu0 %3190
    %3192 = vadd.xlane.f32.xlu0 %v3165
    %v3193 = vpop.xlane.xlu0 %3192
    %3194 = vadd.xlane.f32.xlu0 %v3166
    %v3195 = vpop.xlane.xlu0 %3194
    %3196 = vadd.xlane.f32.xlu0 %v3167
    %v3197 = vpop.xlane.xlu0 %3196
    %3198 = vadd.xlane.f32.xlu0 %v3168
    %v3199 = vpop.xlane.xlu0 %3198
    %3200 = vadd.xlane.f32.xlu0 %v3169
    %v3201 = vpop.xlane.xlu0 %3200
    %v3202 = vmul.f32 %v3123, %v2974
    %v3203 = vmul.f32 %v3125, %v2975
    %v3204 = vmul.f32 %v3127, %v2976
    %v3205 = vmul.f32 %v3129, %v2977
    %v3206 = vmul.f32 %v3131, %v2978
    %v3207 = vmul.f32 %v3133, %v2979
    %v3208 = vmul.f32 %v3135, %v2980
    %v3209 = vmul.f32 %v3137, %v2981
    %v3210 = vmul.f32 %v3139, %v2982
    %v3211 = vmul.f32 %v3141, %v2983
    %v3212 = vmul.f32 %v3143, %v2984
    %v3213 = vmul.f32 %v3145, %v2985
    %v3214 = vmul.f32 %v3147, %v2986
    %v3215 = vmul.f32 %v3149, %v2987
    %v3216 = vmul.f32 %v3151, %v2988
    %v3217 = vmul.f32 %v3153, %v2989
    %v3218 = vadd.f32 %v3202, 1.0
    %v3219 = vadd.f32 %v3203, 1.0
    %v3220 = vadd.f32 %v3204, 1.0
    %v3221 = vadd.f32 %v3205, 1.0
    %v3222 = vadd.f32 %v3206, 1.0
    %v3223 = vadd.f32 %v3207, 1.0
    %v3224 = vadd.f32 %v3208, 1.0
    %v3225 = vadd.f32 %v3209, 1.0
    %v3226 = vadd.f32 %v3210, 1.0
    %v3227 = vadd.f32 %v3211, 1.0
    %v3228 = vadd.f32 %v3212, 1.0
    %v3229 = vadd.f32 %v3213, 1.0
    %v3230 = vadd.f32 %v3214, 1.0
    %v3231 = vadd.f32 %v3215, 1.0
    %v3232 = vadd.f32 %v3216, 1.0
    %v3233 = vadd.f32 %v3217, 1.0
    %vm3234 = vcmp.gt.f32.partialorder %v3218, %v3171
    %vm3235 = vcmp.gt.f32.partialorder %v3219, %v3173
    %vm3236 = vcmp.gt.f32.partialorder %v3220, %v3175
    %vm3237 = vcmp.gt.f32.partialorder %v3221, %v3177
    %vm3238 = vcmp.gt.f32.partialorder %v3222, %v3179
    %vm3239 = vcmp.gt.f32.partialorder %v3223, %v3181
    %vm3240 = vcmp.gt.f32.partialorder %v3224, %v3183
    %vm3241 = vcmp.gt.f32.partialorder %v3225, %v3185
    %vm3242 = vcmp.gt.f32.partialorder %v3226, %v3187
    %vm3243 = vcmp.gt.f32.partialorder %v3227, %v3189
    %vm3244 = vcmp.gt.f32.partialorder %v3228, %v3191
    %vm3245 = vcmp.gt.f32.partialorder %v3229, %v3193
    %vm3246 = vcmp.gt.f32.partialorder %v3230, %v3195
    %vm3247 = vcmp.gt.f32.partialorder %v3231, %v3197
    %vm3248 = vcmp.gt.f32.partialorder %v3232, %v3199
    %vm3249 = vcmp.gt.f32.partialorder %v3233, %v3201
    %v3250 = vsel %vm3234, %v3123, 0.0
    %v3251 = vsel %vm3235, %v3125, 0.0
    %v3252 = vsel %vm3236, %v3127, 0.0
    %v3253 = vsel %vm3237, %v3129, 0.0
    %v3254 = vsel %vm3238, %v3131, 0.0
    %v3255 = vsel %vm3239, %v3133, 0.0
    %v3256 = vsel %vm3240, %v3135, 0.0
    %v3257 = vsel %vm3241, %v3137, 0.0
    %v3258 = vsel %vm3242, %v3139, 0.0
    %v3259 = vsel %vm3243, %v3141, 0.0
    %v3260 = vsel %vm3244, %v3143, 0.0
    %v3261 = vsel %vm3245, %v3145, 0.0
    %v3262 = vsel %vm3246, %v3147, 0.0
    %v3263 = vsel %vm3247, %v3149, 0.0
    %v3264 = vsel %vm3248, %v3151, 0.0
    %v3265 = vsel %vm3249, %v3153, 0.0
    %vm3266 = vcmask 7168
    %v3267 = vsel %vm3266, %v3250, -inf
    %v3268 = vsel %vm3266, %v3251, -inf
    %v3269 = vsel %vm3266, %v3252, -inf
    %v3270 = vsel %vm3266, %v3253, -inf
    %v3271 = vsel %vm3266, %v3254, -inf
    %v3272 = vmax.f32 %v3267, %v3271
    %v3273 = vsel %vm3266, %v3255, -inf
    %v3274 = vmax.f32 %v3268, %v3273
    %v3275 = vsel %vm3266, %v3256, -inf
    %v3276 = vmax.f32 %v3269, %v3275
    %v3277 = vsel %vm3266, %v3257, -inf
    %v3278 = vmax.f32 %v3270, %v3277
    %v3279 = vsel %vm3266, %v3258, -inf
    %v3280 = vmax.f32 %v3272, %v3279
    %v3281 = vsel %vm3266, %v3259, -inf
    %v3282 = vmax.f32 %v3274, %v3281
    %v3283 = vsel %vm3266, %v3260, -inf
    %v3284 = vmax.f32 %v3276, %v3283
    %v3285 = vsel %vm3266, %v3261, -inf
    %v3286 = vmax.f32 %v3278, %v3285
    %v3287 = vsel %vm3266, %v3262, -inf
    %v3288 = vmax.f32 %v3280, %v3287
    %v3289 = vsel %vm3266, %v3263, -inf
    %v3290 = vmax.f32 %v3282, %v3289
    %v3291 = vsel %vm3266, %v3264, -inf
    %v3292 = vmax.f32 %v3284, %v3291
    %v3293 = vsel %vm3266, %v3265, -inf
    %v3294 = vmax.f32 %v3286, %v3293
    %v3295 = vmax.f32 %v3288, %v3290
    %v3296 = vmax.f32 %v3292, %v3294
    %v3297 = vmax.f32 %v3295, %v3296
    %v3298 = vrot.slane %v3297, 4
    %v3299 = vmax.f32 %v3297, %v3298
    %v3300 = vrot.slane %v3299, 2
    %v3301 = vmax.f32 %v3299, %v3300
    %v3302 = vrot.slane %v3301, 1
    %v3303 = vmax.f32 %v3301, %v3302
    %vm3304 = vcmp.eq.f32.partialorder %v3123, %v3303
    %vm3305 = vcmp.eq.f32.partialorder %v3125, %v3303
    %vm3306 = vcmp.eq.f32.partialorder %v3127, %v3303
    %vm3307 = vcmp.eq.f32.partialorder %v3129, %v3303
    %vm3308 = vcmp.eq.f32.partialorder %v3131, %v3303
    %vm3309 = vcmp.eq.f32.partialorder %v3133, %v3303
    %vm3310 = vcmp.eq.f32.partialorder %v3135, %v3303
    %vm3311 = vcmp.eq.f32.partialorder %v3137, %v3303
    %vm3312 = vcmp.eq.f32.partialorder %v3139, %v3303
    %vm3313 = vcmp.eq.f32.partialorder %v3141, %v3303
    %vm3314 = vcmp.eq.f32.partialorder %v3143, %v3303
    %vm3315 = vcmp.eq.f32.partialorder %v3145, %v3303
    %vm3316 = vcmp.eq.f32.partialorder %v3147, %v3303
    %vm3317 = vcmp.eq.f32.partialorder %v3149, %v3303
    %vm3318 = vcmp.eq.f32.partialorder %v3151, %v3303
    %vm3319 = vcmp.eq.f32.partialorder %v3153, %v3303
    %vm3320 = vmand %vm3234, %vm3304
    %vm3321 = vmand %vm3235, %vm3305
    %vm3322 = vmand %vm3236, %vm3306
    %vm3323 = vmand %vm3237, %vm3307
    %vm3324 = vmand %vm3238, %vm3308
    %vm3325 = vmand %vm3239, %vm3309
    %vm3326 = vmand %vm3240, %vm3310
    %vm3327 = vmand %vm3241, %vm3311
    %vm3328 = vmand %vm3242, %vm3312
    %vm3329 = vmand %vm3243, %vm3313
    %vm3330 = vmand %vm3244, %vm3314
    %vm3331 = vmand %vm3245, %vm3315
    %vm3332 = vmand %vm3246, %vm3316
    %vm3333 = vmand %vm3247, %vm3317
    %vm3334 = vmand %vm3248, %vm3318
    %vm3335 = vmand %vm3249, %vm3319
    %v3336 = vsel %vm3320, %v3171, -1e+30
    %v3337 = vsel %vm3321, %v3173, -1e+30
    %v3338 = vsel %vm3322, %v3175, -1e+30
    %v3339 = vsel %vm3323, %v3177, -1e+30
    %v3340 = vsel %vm3324, %v3179, -1e+30
    %v3341 = vsel %vm3325, %v3181, -1e+30
    %v3342 = vsel %vm3326, %v3183, -1e+30
    %v3343 = vsel %vm3327, %v3185, -1e+30
    %v3344 = vsel %vm3328, %v3187, -1e+30
    %v3345 = vsel %vm3329, %v3189, -1e+30
    %v3346 = vsel %vm3330, %v3191, -1e+30
    %v3347 = vsel %vm3331, %v3193, -1e+30
    %v3348 = vsel %vm3332, %v3195, -1e+30
    %v3349 = vsel %vm3333, %v3197, -1e+30
    %v3350 = vsel %vm3334, %v3199, -1e+30
    %v3351 = vsel %vm3335, %v3201, -1e+30
    %v3352 = vsel %vm3266, %v3336, -inf
    %v3353 = vsel %vm3266, %v3337, -inf
    %v3354 = vsel %vm3266, %v3338, -inf
    %v3355 = vsel %vm3266, %v3339, -inf
    %v3356 = vsel %vm3266, %v3340, -inf
    %v3357 = vmax.f32 %v3352, %v3356
    %v3358 = vsel %vm3266, %v3341, -inf
    %v3359 = vmax.f32 %v3353, %v3358
    %v3360 = vsel %vm3266, %v3342, -inf
    %v3361 = vmax.f32 %v3354, %v3360
    %v3362 = vsel %vm3266, %v3343, -inf
    %v3363 = vmax.f32 %v3355, %v3362
    %v3364 = vsel %vm3266, %v3344, -inf
    %v3365 = vmax.f32 %v3357, %v3364
    %v3366 = vsel %vm3266, %v3345, -inf
    %v3367 = vmax.f32 %v3359, %v3366
    %v3368 = vsel %vm3266, %v3346, -inf
    %v3369 = vmax.f32 %v3361, %v3368
    %v3370 = vsel %vm3266, %v3347, -inf
    %v3371 = vmax.f32 %v3363, %v3370
    %v3372 = vsel %vm3266, %v3348, -inf
    %v3373 = vmax.f32 %v3365, %v3372
    %v3374 = vsel %vm3266, %v3349, -inf
    %v3375 = vmax.f32 %v3367, %v3374
    %v3376 = vsel %vm3266, %v3350, -inf
    %v3377 = vmax.f32 %v3369, %v3376
    %v3378 = vsel %vm3266, %v3351, -inf
    %v3379 = vmax.f32 %v3371, %v3378
    %v3380 = vmax.f32 %v3373, %v3375
    %v3381 = vmax.f32 %v3377, %v3379
    %v3382 = vmax.f32 %v3380, %v3381
    %v3383 = vrot.slane %v3382, 4
    %v3384 = vmax.f32 %v3382, %v3383
    %v3385 = vrot.slane %v3384, 2
    %v3386 = vmax.f32 %v3384, %v3385
    %v3387 = vrot.slane %v3386, 1
    %v3388 = vmax.f32 %v3386, %v3387
    %v3389 = vsub.f32 %v3388, 1.0
    %v3390 = vrcp.pop %v3303
    %v3391 = vmul.f32 %v3389, %v3390
    %3393 = vset.pattern.permute.xlu0 0
    %3394 = vperm.xlu0 %3393, %v3391
    %v3395 = vpop.permute.xlu0 %3394
    %v3397 = vsub.f32 %v2953, %v3395
    %v3398 = vmax.f32 %v3397, 0.0
    %v3399 = vlaneseq
    %v3400 = vshrl.u32 %v3399, 7
    %v3401 = vsub.s32 1, %v3400
    %v3402 = vrot.slane %v2953, %v3401
    %3403 = vset.pattern.permute.xlu0 1
    %3404 = vperm.xlu0 %3403, %v2974
    %v3405 = vpop.permute.xlu0 %3404
    %3407 = vset.pattern.permute.xlu0 1
    %3408 = vperm.xlu0 %3407, %v2975
    %v3409 = vpop.permute.xlu0 %3408
    %3411 = vset.pattern.permute.xlu0 1
    %3412 = vperm.xlu0 %3411, %v2976
    %v3413 = vpop.permute.xlu0 %3412
    %3415 = vset.pattern.permute.xlu0 1
    %3416 = vperm.xlu0 %3415, %v2977
    %v3417 = vpop.permute.xlu0 %3416
    %3419 = vset.pattern.permute.xlu0 1
    %3420 = vperm.xlu0 %3419, %v2978
    %v3421 = vpop.permute.xlu0 %3420
    %3423 = vset.pattern.permute.xlu0 1
    %3424 = vperm.xlu0 %3423, %v2979
    %v3425 = vpop.permute.xlu0 %3424
    %3427 = vset.pattern.permute.xlu0 1
    %3428 = vperm.xlu0 %3427, %v2980
    %v3429 = vpop.permute.xlu0 %3428
    %3431 = vset.pattern.permute.xlu0 1
    %3432 = vperm.xlu0 %3431, %v2981
    %v3433 = vpop.permute.xlu0 %3432
    %3435 = vset.pattern.permute.xlu0 1
    %3436 = vperm.xlu0 %3435, %v2982
    %v3437 = vpop.permute.xlu0 %3436
    %3439 = vset.pattern.permute.xlu0 1
    %3440 = vperm.xlu0 %3439, %v2983
    %v3441 = vpop.permute.xlu0 %3440
    %3443 = vset.pattern.permute.xlu0 1
    %3444 = vperm.xlu0 %3443, %v2984
    %v3445 = vpop.permute.xlu0 %3444
    %3447 = vset.pattern.permute.xlu0 1
    %3448 = vperm.xlu0 %3447, %v2985
    %v3449 = vpop.permute.xlu0 %3448
    %3451 = vset.pattern.permute.xlu0 1
    %3452 = vperm.xlu0 %3451, %v2986
    %v3453 = vpop.permute.xlu0 %3452
    %3455 = vset.pattern.permute.xlu0 1
    %3456 = vperm.xlu0 %3455, %v2987
    %v3457 = vpop.permute.xlu0 %3456
    %3459 = vset.pattern.permute.xlu0 1
    %3460 = vperm.xlu0 %3459, %v2988
    %v3461 = vpop.permute.xlu0 %3460
    %3463 = vset.pattern.permute.xlu0 1
    %3464 = vperm.xlu0 %3463, %v2989
    %v3465 = vpop.permute.xlu0 %3464
    %vm3467 = vcmp.ge.f32.partialorder %v3402, %v3405
    %vm3468 = vcmp.ge.f32.partialorder %v3402, %v3409
    %vm3469 = vcmp.ge.f32.partialorder %v3402, %v3413
    %vm3470 = vcmp.ge.f32.partialorder %v3402, %v3417
    %vm3471 = vcmp.ge.f32.partialorder %v3402, %v3421
    %vm3472 = vcmp.ge.f32.partialorder %v3402, %v3425
    %vm3473 = vcmp.ge.f32.partialorder %v3402, %v3429
    %vm3474 = vcmp.ge.f32.partialorder %v3402, %v3433
    %vm3475 = vcmp.ge.f32.partialorder %v3402, %v3437
    %vm3476 = vcmp.ge.f32.partialorder %v3402, %v3441
    %vm3477 = vcmp.ge.f32.partialorder %v3402, %v3445
    %vm3478 = vcmp.ge.f32.partialorder %v3402, %v3449
    %vm3479 = vcmp.ge.f32.partialorder %v3402, %v3453
    %vm3480 = vcmp.ge.f32.partialorder %v3402, %v3457
    %vm3481 = vcmp.ge.f32.partialorder %v3402, %v3461
    %vm3482 = vcmp.ge.f32.partialorder %v3402, %v3465
    %v3483 = vsel %vm3467, 1, 0
    %v3484 = vsel %vm3468, 1, 0
    %v3485 = vsel %vm3469, 1, 0
    %v3486 = vsel %vm3470, 1, 0
    %v3487 = vsel %vm3471, 1, 0
    %v3488 = vsel %vm3472, 1, 0
    %v3489 = vsel %vm3473, 1, 0
    %v3490 = vsel %vm3474, 1, 0
    %v3491 = vsel %vm3475, 1, 0
    %v3492 = vsel %vm3476, 1, 0
    %v3493 = vsel %vm3477, 1, 0
    %v3494 = vsel %vm3478, 1, 0
    %v3495 = vsel %vm3479, 1, 0
    %v3496 = vsel %vm3480, 1, 0
    %v3497 = vsel %vm3481, 1, 0
    %v3498 = vsel %vm3482, 1, 0
    %v3499 = vcvt.s32.f32 %v3483
    %v3500 = vcvt.s32.f32 %v3484
    %v3501 = vcvt.s32.f32 %v3485
    %v3502 = vcvt.s32.f32 %v3486
    %v3503 = vcvt.s32.f32 %v3487
    %v3504 = vcvt.s32.f32 %v3488
    %v3505 = vcvt.s32.f32 %v3489
    %v3506 = vcvt.s32.f32 %v3490
    %v3507 = vcvt.s32.f32 %v3491
    %v3508 = vcvt.s32.f32 %v3492
    %v3509 = vcvt.s32.f32 %v3493
    %v3510 = vcvt.s32.f32 %v3494
    %v3511 = vcvt.s32.f32 %v3495
    %v3512 = vcvt.s32.f32 %v3496
    %v3513 = vcvt.s32.f32 %v3497
    %v3514 = vcvt.s32.f32 %v3498
    %3515 = vadd.xlane.f32.xlu0 %v3499
    %v3516 = vpop.xlane.xlu0 %3515
    %3517 = vadd.xlane.f32.xlu0 %v3500
    %v3518 = vpop.xlane.xlu0 %3517
    %3519 = vadd.xlane.f32.xlu0 %v3501
    %v3520 = vpop.xlane.xlu0 %3519
    %3521 = vadd.xlane.f32.xlu0 %v3502
    %v3522 = vpop.xlane.xlu0 %3521
    %3523 = vadd.xlane.f32.xlu0 %v3503
    %v3524 = vpop.xlane.xlu0 %3523
    %3525 = vadd.xlane.f32.xlu0 %v3504
    %v3526 = vpop.xlane.xlu0 %3525
    %3527 = vadd.xlane.f32.xlu0 %v3505
    %v3528 = vpop.xlane.xlu0 %3527
    %3529 = vadd.xlane.f32.xlu0 %v3506
    %v3530 = vpop.xlane.xlu0 %3529
    %3531 = vadd.xlane.f32.xlu0 %v3507
    %v3532 = vpop.xlane.xlu0 %3531
    %3533 = vadd.xlane.f32.xlu0 %v3508
    %v3534 = vpop.xlane.xlu0 %3533
    %3535 = vadd.xlane.f32.xlu0 %v3509
    %v3536 = vpop.xlane.xlu0 %3535
    %3537 = vadd.xlane.f32.xlu0 %v3510
    %v3538 = vpop.xlane.xlu0 %3537
    %3539 = vadd.xlane.f32.xlu0 %v3511
    %v3540 = vpop.xlane.xlu0 %3539
    %3541 = vadd.xlane.f32.xlu0 %v3512
    %v3542 = vpop.xlane.xlu0 %3541
    %3543 = vadd.xlane.f32.xlu0 %v3513
    %v3544 = vpop.xlane.xlu0 %3543
    %3545 = vadd.xlane.f32.xlu0 %v3514
    %v3546 = vpop.xlane.xlu0 %3545
    %v3547 = vmul.f32 %v3499, %v3402
    %v3548 = vmul.f32 %v3500, %v3402
    %v3549 = vmul.f32 %v3501, %v3402
    %v3550 = vmul.f32 %v3502, %v3402
    %v3551 = vmul.f32 %v3503, %v3402
    %v3552 = vmul.f32 %v3504, %v3402
    %v3553 = vmul.f32 %v3505, %v3402
    %v3554 = vmul.f32 %v3506, %v3402
    %v3555 = vmul.f32 %v3507, %v3402
    %v3556 = vmul.f32 %v3508, %v3402
    %v3557 = vmul.f32 %v3509, %v3402
    %v3558 = vmul.f32 %v3510, %v3402
    %v3559 = vmul.f32 %v3511, %v3402
    %v3560 = vmul.f32 %v3512, %v3402
    %v3561 = vmul.f32 %v3513, %v3402
    %v3562 = vmul.f32 %v3514, %v3402
    %3563 = vadd.xlane.f32.xlu0 %v3547
    %v3564 = vpop.xlane.xlu0 %3563
    %3565 = vadd.xlane.f32.xlu0 %v3548
    %v3566 = vpop.xlane.xlu0 %3565
    %3567 = vadd.xlane.f32.xlu0 %v3549
    %v3568 = vpop.xlane.xlu0 %3567
    %3569 = vadd.xlane.f32.xlu0 %v3550
    %v3570 = vpop.xlane.xlu0 %3569
    %3571 = vadd.xlane.f32.xlu0 %v3551
    %v3572 = vpop.xlane.xlu0 %3571
    %3573 = vadd.xlane.f32.xlu0 %v3552
    %v3574 = vpop.xlane.xlu0 %3573
    %3575 = vadd.xlane.f32.xlu0 %v3553
    %v3576 = vpop.xlane.xlu0 %3575
    %3577 = vadd.xlane.f32.xlu0 %v3554
    %v3578 = vpop.xlane.xlu0 %3577
    %3579 = vadd.xlane.f32.xlu0 %v3555
    %v3580 = vpop.xlane.xlu0 %3579
    %3581 = vadd.xlane.f32.xlu0 %v3556
    %v3582 = vpop.xlane.xlu0 %3581
    %3583 = vadd.xlane.f32.xlu0 %v3557
    %v3584 = vpop.xlane.xlu0 %3583
    %3585 = vadd.xlane.f32.xlu0 %v3558
    %v3586 = vpop.xlane.xlu0 %3585
    %3587 = vadd.xlane.f32.xlu0 %v3559
    %v3588 = vpop.xlane.xlu0 %3587
    %3589 = vadd.xlane.f32.xlu0 %v3560
    %v3590 = vpop.xlane.xlu0 %3589
    %3591 = vadd.xlane.f32.xlu0 %v3561
    %v3592 = vpop.xlane.xlu0 %3591
    %3593 = vadd.xlane.f32.xlu0 %v3562
    %v3594 = vpop.xlane.xlu0 %3593
    %v3595 = vmul.f32 %v3516, %v2974
    %v3596 = vmul.f32 %v3518, %v2975
    %v3597 = vmul.f32 %v3520, %v2976
    %v3598 = vmul.f32 %v3522, %v2977
    %v3599 = vmul.f32 %v3524, %v2978
    %v3600 = vmul.f32 %v3526, %v2979
    %v3601 = vmul.f32 %v3528, %v2980
    %v3602 = vmul.f32 %v3530, %v2981
    %v3603 = vmul.f32 %v3532, %v2982
    %v3604 = vmul.f32 %v3534, %v2983
    %v3605 = vmul.f32 %v3536, %v2984
    %v3606 = vmul.f32 %v3538, %v2985
    %v3607 = vmul.f32 %v3540, %v2986
    %v3608 = vmul.f32 %v3542, %v2987
    %v3609 = vmul.f32 %v3544, %v2988
    %v3610 = vmul.f32 %v3546, %v2989
    %v3611 = vadd.f32 %v3595, 1.0
    %v3612 = vadd.f32 %v3596, 1.0
    %v3613 = vadd.f32 %v3597, 1.0
    %v3614 = vadd.f32 %v3598, 1.0
    %v3615 = vadd.f32 %v3599, 1.0
    %v3616 = vadd.f32 %v3600, 1.0
    %v3617 = vadd.f32 %v3601, 1.0
    %v3618 = vadd.f32 %v3602, 1.0
    %v3619 = vadd.f32 %v3603, 1.0
    %v3620 = vadd.f32 %v3604, 1.0
    %v3621 = vadd.f32 %v3605, 1.0
    %v3622 = vadd.f32 %v3606, 1.0
    %v3623 = vadd.f32 %v3607, 1.0
    %v3624 = vadd.f32 %v3608, 1.0
    %v3625 = vadd.f32 %v3609, 1.0
    %v3626 = vadd.f32 %v3610, 1.0
    %vm3627 = vcmp.gt.f32.partialorder %v3611, %v3564
    %vm3628 = vcmp.gt.f32.partialorder %v3612, %v3566
    %vm3629 = vcmp.gt.f32.partialorder %v3613, %v3568
    %vm3630 = vcmp.gt.f32.partialorder %v3614, %v3570
    %vm3631 = vcmp.gt.f32.partialorder %v3615, %v3572
    %vm3632 = vcmp.gt.f32.partialorder %v3616, %v3574
    %vm3633 = vcmp.gt.f32.partialorder %v3617, %v3576
    %vm3634 = vcmp.gt.f32.partialorder %v3618, %v3578
    %vm3635 = vcmp.gt.f32.partialorder %v3619, %v3580
    %vm3636 = vcmp.gt.f32.partialorder %v3620, %v3582
    %vm3637 = vcmp.gt.f32.partialorder %v3621, %v3584
    %vm3638 = vcmp.gt.f32.partialorder %v3622, %v3586
    %vm3639 = vcmp.gt.f32.partialorder %v3623, %v3588
    %vm3640 = vcmp.gt.f32.partialorder %v3624, %v3590
    %vm3641 = vcmp.gt.f32.partialorder %v3625, %v3592
    %vm3642 = vcmp.gt.f32.partialorder %v3626, %v3594
    %v3643 = vsel %vm3627, %v3516, 0.0
    %v3644 = vsel %vm3628, %v3518, 0.0
    %v3645 = vsel %vm3629, %v3520, 0.0
    %v3646 = vsel %vm3630, %v3522, 0.0
    %v3647 = vsel %vm3631, %v3524, 0.0
    %v3648 = vsel %vm3632, %v3526, 0.0
    %v3649 = vsel %vm3633, %v3528, 0.0
    %v3650 = vsel %vm3634, %v3530, 0.0
    %v3651 = vsel %vm3635, %v3532, 0.0
    %v3652 = vsel %vm3636, %v3534, 0.0
    %v3653 = vsel %vm3637, %v3536, 0.0
    %v3654 = vsel %vm3638, %v3538, 0.0
    %v3655 = vsel %vm3639, %v3540, 0.0
    %v3656 = vsel %vm3640, %v3542, 0.0
    %v3657 = vsel %vm3641, %v3544, 0.0
    %v3658 = vsel %vm3642, %v3546, 0.0
    %vm3659 = vcmask 15368
    %v3660 = vsel %vm3659, %v3643, -inf
    %v3661 = vsel %vm3659, %v3644, -inf
    %v3662 = vsel %vm3659, %v3645, -inf
    %v3663 = vsel %vm3659, %v3646, -inf
    %v3664 = vsel %vm3659, %v3647, -inf
    %v3665 = vmax.f32 %v3660, %v3664
    %v3666 = vsel %vm3659, %v3648, -inf
    %v3667 = vmax.f32 %v3661, %v3666
    %v3668 = vsel %vm3659, %v3649, -inf
    %v3669 = vmax.f32 %v3662, %v3668
    %v3670 = vsel %vm3659, %v3650, -inf
    %v3671 = vmax.f32 %v3663, %v3670
    %v3672 = vsel %vm3659, %v3651, -inf
    %v3673 = vmax.f32 %v3665, %v3672
    %v3674 = vsel %vm3659, %v3652, -inf
    %v3675 = vmax.f32 %v3667, %v3674
    %v3676 = vsel %vm3659, %v3653, -inf
    %v3677 = vmax.f32 %v3669, %v3676
    %v3678 = vsel %vm3659, %v3654, -inf
    %v3679 = vmax.f32 %v3671, %v3678
    %v3680 = vsel %vm3659, %v3655, -inf
    %v3681 = vmax.f32 %v3673, %v3680
    %v3682 = vsel %vm3659, %v3656, -inf
    %v3683 = vmax.f32 %v3675, %v3682
    %v3684 = vsel %vm3659, %v3657, -inf
    %v3685 = vmax.f32 %v3677, %v3684
    %v3686 = vsel %vm3659, %v3658, -inf
    %v3687 = vmax.f32 %v3679, %v3686
    %v3688 = vmax.f32 %v3681, %v3683
    %v3689 = vmax.f32 %v3685, %v3687
    %v3690 = vmax.f32 %v3688, %v3689
    %v3691 = vrot.slane %v3690, 4
    %v3692 = vmax.f32 %v3690, %v3691
    %v3693 = vrot.slane %v3692, 2
    %v3694 = vmax.f32 %v3692, %v3693
    %v3695 = vrot.slane %v3694, 1
    %v3696 = vmax.f32 %v3694, %v3695
    %vm3697 = vcmp.eq.f32.partialorder %v3516, %v3696
    %vm3698 = vcmp.eq.f32.partialorder %v3518, %v3696
    %vm3699 = vcmp.eq.f32.partialorder %v3520, %v3696
    %vm3700 = vcmp.eq.f32.partialorder %v3522, %v3696
    %vm3701 = vcmp.eq.f32.partialorder %v3524, %v3696
    %vm3702 = vcmp.eq.f32.partialorder %v3526, %v3696
    %vm3703 = vcmp.eq.f32.partialorder %v3528, %v3696
    %vm3704 = vcmp.eq.f32.partialorder %v3530, %v3696
    %vm3705 = vcmp.eq.f32.partialorder %v3532, %v3696
    %vm3706 = vcmp.eq.f32.partialorder %v3534, %v3696
    %vm3707 = vcmp.eq.f32.partialorder %v3536, %v3696
    %vm3708 = vcmp.eq.f32.partialorder %v3538, %v3696
    %vm3709 = vcmp.eq.f32.partialorder %v3540, %v3696
    %vm3710 = vcmp.eq.f32.partialorder %v3542, %v3696
    %vm3711 = vcmp.eq.f32.partialorder %v3544, %v3696
    %vm3712 = vcmp.eq.f32.partialorder %v3546, %v3696
    %vm3713 = vmand %vm3627, %vm3697
    %vm3714 = vmand %vm3628, %vm3698
    %vm3715 = vmand %vm3629, %vm3699
    %vm3716 = vmand %vm3630, %vm3700
    %vm3717 = vmand %vm3631, %vm3701
    %vm3718 = vmand %vm3632, %vm3702
    %vm3719 = vmand %vm3633, %vm3703
    %vm3720 = vmand %vm3634, %vm3704
    %vm3721 = vmand %vm3635, %vm3705
    %vm3722 = vmand %vm3636, %vm3706
    %vm3723 = vmand %vm3637, %vm3707
    %vm3724 = vmand %vm3638, %vm3708
    %vm3725 = vmand %vm3639, %vm3709
    %vm3726 = vmand %vm3640, %vm3710
    %vm3727 = vmand %vm3641, %vm3711
    %vm3728 = vmand %vm3642, %vm3712
    %v3729 = vsel %vm3713, %v3564, -1e+30
    %v3730 = vsel %vm3714, %v3566, -1e+30
    %v3731 = vsel %vm3715, %v3568, -1e+30
    %v3732 = vsel %vm3716, %v3570, -1e+30
    %v3733 = vsel %vm3717, %v3572, -1e+30
    %v3734 = vsel %vm3718, %v3574, -1e+30
    %v3735 = vsel %vm3719, %v3576, -1e+30
    %v3736 = vsel %vm3720, %v3578, -1e+30
    %v3737 = vsel %vm3721, %v3580, -1e+30
    %v3738 = vsel %vm3722, %v3582, -1e+30
    %v3739 = vsel %vm3723, %v3584, -1e+30
    %v3740 = vsel %vm3724, %v3586, -1e+30
    %v3741 = vsel %vm3725, %v3588, -1e+30
    %v3742 = vsel %vm3726, %v3590, -1e+30
    %v3743 = vsel %vm3727, %v3592, -1e+30
    %v3744 = vsel %vm3728, %v3594, -1e+30
    %v3745 = vsel %vm3659, %v3729, -inf
    %v3746 = vsel %vm3659, %v3730, -inf
    %v3747 = vsel %vm3659, %v3731, -inf
    %v3748 = vsel %vm3659, %v3732, -inf
    %v3749 = vsel %vm3659, %v3733, -inf
    %v3750 = vmax.f32 %v3745, %v3749
    %v3751 = vsel %vm3659, %v3734, -inf
    %v3752 = vmax.f32 %v3746, %v3751
    %v3753 = vsel %vm3659, %v3735, -inf
    %v3754 = vmax.f32 %v3747, %v3753
    %v3755 = vsel %vm3659, %v3736, -inf
    %v3756 = vmax.f32 %v3748, %v3755
    %v3757 = vsel %vm3659, %v3737, -inf
    %v3758 = vmax.f32 %v3750, %v3757
    %v3759 = vsel %vm3659, %v3738, -inf
    %v3760 = vmax.f32 %v3752, %v3759
    %v3761 = vsel %vm3659, %v3739, -inf
    %v3762 = vmax.f32 %v3754, %v3761
    %v3763 = vsel %vm3659, %v3740, -inf
    %v3764 = vmax.f32 %v3756, %v3763
    %v3765 = vsel %vm3659, %v3741, -inf
    %v3766 = vmax.f32 %v3758, %v3765
    %v3767 = vsel %vm3659, %v3742, -inf
    %v3768 = vmax.f32 %v3760, %v3767
    %v3769 = vsel %vm3659, %v3743, -inf
    %v3770 = vmax.f32 %v3762, %v3769
    %v3771 = vsel %vm3659, %v3744, -inf
    %v3772 = vmax.f32 %v3764, %v3771
    %v3773 = vmax.f32 %v3766, %v3768
    %v3774 = vmax.f32 %v3770, %v3772
    %v3775 = vmax.f32 %v3773, %v3774
    %v3776 = vrot.slane %v3775, 4
    %v3777 = vmax.f32 %v3775, %v3776
    %v3778 = vrot.slane %v3777, 2
    %v3779 = vmax.f32 %v3777, %v3778
    %v3780 = vrot.slane %v3779, 1
    %v3781 = vmax.f32 %v3779, %v3780
    %v3782 = vsub.f32 %v3781, 1.0
    %v3783 = vrcp.pop %v3696
    %v3784 = vmul.f32 %v3782, %v3783
    %3786 = vset.pattern.permute.xlu0 1
    %3787 = vperm.xlu0 %3786, %v3784
    %v3788 = vpop.permute.xlu0 %3787
    %v3790 = vsub.f32 %v2953, %v3788
    %v3791 = vmax.f32 %v3790, 0.0
    %v3792 = vsel %vm2844, %v3398, %v3791
    %3793 = vst [vmem:[%s18] sm:$0x3] %v3792
    // Predicated region
    $region82: #{bert_for_disease_prediction.1} parent=1 // pred_check
      _
    $region83: #{bert_for_disease_prediction.1} parent=1 // pred_check_branch
      %3795 = sbr.rel (0) target = $region85
    $region84: #{bert_for_disease_prediction.1} parent=1 // pred_region
      _
    $region85: #{bert_for_disease_prediction.1} parent=1 // pred_fallthru
      _
    // Predicated region
    $region86: #{bert_for_disease_prediction.1} parent=1 // pred_check
      _
    $region87: #{bert_for_disease_prediction.1} parent=1 // pred_check_branch
      %3797 = sbr.rel (0) target = $region89
    $region88: #{bert_for_disease_prediction.1} parent=1 // pred_region
      _
    $region89: #{bert_for_disease_prediction.1} parent=1 // pred_fallthru
      _
    %3798 = vsyncpa [#allocation3], 1
    %3799 = vsyncpa [#allocation5], 1

</llo_original>
